<compile_context>
chip_gen: v6e
topology: v6e:2x2x1
jax: 0.10.0
libtpu: 0.0.40
codegen_flags: <defaults>
</compile_context>

<pallas_src>
import functools

import numpy as np
import jax
import jax.numpy as jnp
from jax import lax
from jax.experimental import pallas as pl
from jax.experimental.pallas import tpu as pltpu

_N_CUBES = 5
_SPH_PER_CUBE = 4     # inner_sphere1, inner_sphere2, ring_sphere1, ring_sphere2
_BOX_PER_CUBE = 17    # inner, indent1-6, ext1, ext2, ext_indent1-6, ring1, ring2
_OFFSET_VAL = 4.5
_OFFSETS = ((_OFFSET_VAL, 0.0, 0.0), (-_OFFSET_VAL, 0.0, 0.0),
            (0.0, _OFFSET_VAL, 0.0), (0.0, -_OFFSET_VAL, 0.0),
            (0.0, 0.0, 0.0))


def _cdiv(a, b):
    return -(-a // b)


def _round_up(a, m):
    return _cdiv(a, m) * m


def build_trippy_params(cfg):
    """Flatten every MarvelCube primitive into dense parameter tables.

    Returns:
      sphere_params: (20, 4) float32  [cx, cy, cz, r]
      box_params:    (85, 6) float32  [cx, cy, cz, hx, hy, hz]  (h = side/2)
    """
    def vec3(v):
        return np.broadcast_to(np.asarray(v, np.float32), (3,)).astype(np.float32)

    sph, box = [], []
    for off in _OFFSETS:
        off = np.asarray(off, np.float32)
        sc = vec3(cfg["inner_center"]) + off
        for r in (cfg["inner_radius1"], cfg["inner_radius2"],
                  cfg["ring_sphere_radius1"], cfg["ring_sphere_radius2"]):
            sph.append(np.concatenate([sc, np.asarray([r], np.float32)]))

        def add_box(center, side, _off=off):
            box.append(np.concatenate([vec3(center) + _off, vec3(side) * 0.5]))

        add_box(cfg["inner_center"], cfg["inner_side"])            # 0  inner_cube
        for k in range(1, 7):                                      # 1..6 indent
            add_box(cfg[f"indent_center{k}"], cfg[f"indent_side{k}"])
        add_box(cfg["inner_center"], cfg["ext_side1"])             # 7  ext_cube1
        add_box(cfg["inner_center"], cfg["ext_side2"])             # 8  ext_cube2
        for k in range(1, 7):                                      # 9..14 ext_indent
            add_box(cfg[f"ext_indent_center{k}"], cfg["ext_indent_side"])
        add_box(cfg["ring_cube_center1"], cfg["ring_cube_side"])   # 15 ring_cube1
        add_box(cfg["ring_cube_center2"], cfg["ring_cube_side"])   # 16 ring_cube2

    return (np.stack(sph).astype(np.float32),
            np.stack(box).astype(np.float32))


def _make_trippy_kernel(sphere_params, box_params, n_sub, sub_rows):
    """Build a kernel closure with all SDF parameters baked in as constants."""
    sph_tbl = [tuple(float(v) for v in row)
               for row in np.asarray(sphere_params, np.float32)]
    box_tbl = [tuple(float(v) for v in row)
               for row in np.asarray(box_params, np.float32)]

    def kernel(x_ref, y_ref, z_ref, out_ref):
        # x/y/z_ref: (block_rows, 128) VMEM planes, lane axis = point index.
        # Inner loop over sub_rows-row chunks keeps every temp at one vreg.
        def body(r, carry):
            r0 = pl.multiple_of(r * sub_rows, sub_rows)
            x = x_ref[pl.ds(r0, sub_rows), :]
            y = y_ref[pl.ds(r0, sub_rows), :]
            z = z_ref[pl.ds(r0, sub_rows), :]
            p = (x, y, z)

            # Trace-time CSE caches keyed by constant parameter values.
            diff_cache = {}    # (axis, c)        -> p - c
            abs_cache = {}     # (axis, c)        -> |p - c|
            norm_cache = {}    # (cx, cy, cz)     -> ||p - c||
            pos_ax_cache = {}  # (axis, c, h)     -> (q,  max(q,0)^2)
            neg_ax_cache = {}  # (axis, c, h)     -> (-q, min(-q,0)^2)

            def diff(ax, c):
                key = (ax, c)
                v = diff_cache.get(key)
                if v is None:
                    v = p[ax] - c
                    diff_cache[key] = v
                return v

            def adiff(ax, c):
                key = (ax, c)
                v = abs_cache.get(key)
                if v is None:
                    v = jnp.abs(diff(ax, c))
                    abs_cache[key] = v
                return v

            def norm_at(cx, cy, cz):
                key = (cx, cy, cz)
                v = norm_cache.get(key)
                if v is None:
                    dx = diff(0, cx)
                    dy = diff(1, cy)
                    dz = diff(2, cz)
                    v = jnp.sqrt(dx * dx + dy * dy + dz * dz)
                    norm_cache[key] = v
                return v

            def sphere_pos(i):
                cx, cy, cz, rr = sph_tbl[i]
                return norm_at(cx, cy, cz) - rr

            def sphere_neg(i):                      # == -sphere_pos(i)
                cx, cy, cz, rr = sph_tbl[i]
                return rr - norm_at(cx, cy, cz)

            def pos_axis(ax, c, h):
                key = (ax, c, h)
                v = pos_ax_cache.get(key)
                if v is None:
                    q = adiff(ax, c) - h
                    t = jnp.maximum(q, 0.0)
                    v = (q, t * t)
                    pos_ax_cache[key] = v
                return v

            def neg_axis(ax, c, h):
                key = (ax, c, h)
                v = neg_ax_cache.get(key)
                if v is None:
                    qn = h - adiff(ax, c)           # == -(|p-c| - h), exact
                    t = jnp.minimum(qn, 0.0)        # == -max(q,0), t^2 identical
                    v = (qn, t * t)
                    neg_ax_cache[key] = v
                return v

            def box_pos(i):
                cx, cy, cz, hx, hy, hz = box_tbl[i]
                qx, sx = pos_axis(0, cx, hx)
                qy, sy = pos_axis(1, cy, hy)
                qz, sz = pos_axis(2, cz, hz)
                outside = jnp.sqrt(sx + sy + sz)
                inside = jnp.minimum(jnp.maximum(jnp.maximum(qx, qy), qz), 0.0)
                return outside + inside

            def box_neg(i):                         # == -box_pos(i), no negates
                cx, cy, cz, hx, hy, hz = box_tbl[i]
                qx, sx = neg_axis(0, cx, hx)
                qy, sy = neg_axis(1, cy, hy)
                qz, sz = neg_axis(2, cz, hz)
                outside = jnp.sqrt(sx + sy + sz)
                neg_inside = jnp.maximum(jnp.minimum(jnp.minimum(qx, qy), qz), 0.0)
                return neg_inside - outside

            def marvel_cube_dist(m):
                sb = m * _SPH_PER_CUBE
                bb = m * _BOX_PER_CUBE
                # ring_dists = max(rs1, -rs2 - ring_cube1, -ring_cube2)
                ring = jnp.maximum(
                    sphere_pos(sb + 2),
                    jnp.maximum(sphere_neg(sb + 3) + box_neg(bb + 15),
                                box_neg(bb + 16)))
                # dists = max(ext1, -ext2, -ext_indent1..6)
                d = jnp.maximum(box_pos(bb + 7), box_neg(bb + 8))
                for k in range(9, 15):
                    d = jnp.maximum(d, box_neg(bb + k))
                d = jnp.minimum(ring, d)
                d = jnp.minimum(d, sphere_pos(sb + 0))     # inner_sphere1
                d = jnp.maximum(d, sphere_neg(sb + 1))     # -inner_sphere2
                for k in range(1, 7):                       # -indent_cube1..6
                    d = jnp.maximum(d, box_neg(bb + k))
                d = jnp.minimum(d, box_pos(bb + 0))         # inner_cube
                return d

            dist = marvel_cube_dist(0)
            for m in range(1, _N_CUBES):
                dist = jnp.minimum(dist, marvel_cube_dist(m))
            out_ref[pl.ds(r0, sub_rows), :] = dist
            return carry

        lax.fori_loop(0, n_sub, body, None)

    return kernel


def trippy_sdf(points, sphere_params, box_params, *, block_rows=256, sub_rows=8):
    """points: any shape with 3*N total elements. Returns (N, 1) float32.

    sphere_params / box_params must be concrete (numpy) arrays — they are
    baked into the compiled kernel as constants.
    """
    assert block_rows % sub_rows == 0
    pts = jnp.reshape(points, (-1, 3)).astype(jnp.float32)
    n = pts.shape[0]
    n_rows = max(_cdiv(n, 128), 1)

    # Cap the block so the grid has >= 2 "parallel" steps (keeps both v7x
    # TensorCores busy for small N); large N uses the full block_rows.
    br = max(sub_rows, min(block_rows, _round_up(_cdiv(n_rows, 2), sub_rows)))
    n_rows_pad = _round_up(n_rows, br)
    grid_len = n_rows_pad // br
    n_pad = n_rows_pad * 128

    pts = jnp.pad(pts, ((0, n_pad - n), (0, 0)))
    # SoA planar layout: (3, rows, 128), lane axis = point index.
    soa = jnp.transpose(pts, (1, 0)).reshape(3, n_rows_pad, 128)

    kernel = _make_trippy_kernel(sphere_params, box_params, br // sub_rows, sub_rows)

    cost = pl.CostEstimate(
        flops=int(1800 * n_pad),          # ~105 primitives, CSE'd
        transcendentals=int(90 * n_pad),  # 85 box sqrts + 5 shared sphere norms
        bytes_accessed=int(16 * n_pad),
    )

    out = pl.pallas_call(
        kernel,
        out_shape=jax.ShapeDtypeStruct((n_rows_pad, 128), jnp.float32),
        grid_spec=pltpu.PrefetchScalarGridSpec(
            num_scalar_prefetch=0,
            grid=(grid_len,),
            in_specs=[
                pl.BlockSpec((br, 128), lambda i: (i, 0)),
                pl.BlockSpec((br, 128), lambda i: (i, 0)),
                pl.BlockSpec((br, 128), lambda i: (i, 0)),
            ],
            out_specs=pl.BlockSpec((br, 128), lambda i: (i, 0)),
        ),
        compiler_params=pltpu.CompilerParams(
            dimension_semantics=("parallel",)),
        cost_estimate=cost,
    )(soa[0], soa[1], soa[2])

    return out.reshape(n_pad)[:n].reshape(n, 1)


def trippy_sdf_ref(points, sphere_params, box_params):
    """Pure-JAX reference matching the PyTorch TrippySDF.forward semantics."""
    pts = jnp.reshape(points, (-1, 3)).astype(jnp.float32)
    sp = jnp.asarray(sphere_params, jnp.float32)
    bp = jnp.asarray(box_params, jnp.float32)

    def sphere(i):
        return jnp.linalg.norm(pts - sp[i, :3], axis=-1) - sp[i, 3]

    def box(i):
        q = jnp.abs(pts - bp[i, :3]) - bp[i, 3:]
        outside = jnp.linalg.norm(jnp.maximum(q, 0.0), axis=-1)
        inside = jnp.minimum(jnp.max(q, axis=-1), 0.0)
        return outside + inside

    cube_dists = []
    for m in range(_N_CUBES):
        sb, bb = m * _SPH_PER_CUBE, m * _BOX_PER_CUBE
        ring = jnp.maximum(sphere(sb + 2),
                           jnp.maximum(-sphere(sb + 3) - box(bb + 15),
                                       -box(bb + 16)))
        d = jnp.maximum(box(bb + 7), -box(bb + 8))
        for k in range(9, 15):
            d = jnp.maximum(d, -box(bb + k))
        d = jnp.minimum(ring, d)
        d = jnp.minimum(d, sphere(sb + 0))
        d = jnp.maximum(d, -sphere(sb + 1))
        for k in range(1, 7):
            d = jnp.maximum(d, -box(bb + k))
        d = jnp.minimum(d, box(bb + 0))
        cube_dists.append(d)
    out = functools.reduce(jnp.minimum, cube_dists)
    return out[:, None]


if __name__ == "__main__":
    # Deterministic stand-in for the hydra cfg the torch module reads.
    cfg = {
        "inner_center": [0.0, 0.0, 0.0],
        "inner_radius1": 1.0,
        "inner_radius2": 0.9,
        "inner_side": 1.6,
        "indent_center1": [1.0, 0.0, 0.0],  "indent_side1": 0.8,
        "indent_center2": [-1.0, 0.0, 0.0], "indent_side2": 0.8,
        "indent_center3": [0.0, 1.0, 0.0],  "indent_side3": 0.8,
        "indent_center4": [0.0, -1.0, 0.0], "indent_side4": 0.8,
        "indent_center5": [0.0, 0.0, 1.0],  "indent_side5": 0.8,
        "indent_center6": [0.0, 0.0, -1.0], "indent_side6": 0.8,
        "ext_side1": 2.4,
        "ext_side2": 2.2,
        "ext_indent_center1": [1.5, 0.0, 0.0],
        "ext_indent_center2": [-1.5, 0.0, 0.0],
        "ext_indent_center3": [0.0, 1.5, 0.0],
        "ext_indent_center4": [0.0, -1.5, 0.0],
        "ext_indent_center5": [0.0, 0.0, 1.5],
        "ext_indent_center6": [0.0, 0.0, -1.5],
        "ext_indent_side": 1.2,
        "ring_sphere_radius1": 1.6,
        "ring_sphere_radius2": 1.45,
        "ring_cube_center1": [0.0, 0.0, 0.6],
        "ring_cube_center2": [0.0, 0.0, -0.6],
        "ring_cube_side": [3.4, 3.4, 1.0],
    }
    sphere_params, box_params = build_trippy_params(cfg)

    # Small example: 5 "rays" x 1000 samples = 5000 points in [-6, 6]^3
    # (covers all 5 marvel-cube offsets; exercises the pad + 2-step-grid path).
    key = jax.random.PRNGKey(0)
    points = jax.random.uniform(key, (5, 1000, 3), dtype=jnp.float32,
                                minval=-6.0, maxval=6.0)

    out = trippy_sdf(points, sphere_params, box_params)
    out = jax.block_until_ready(out)

    ref = trippy_sdf_ref(points, sphere_params, box_params)
    assert out.shape == (5000, 1), out.shape
    assert jnp.allclose(out, ref, atol=1e-4, rtol=1e-5), (
        "max abs err = %g" % float(jnp.max(jnp.abs(out - ref))))
    # TODO(synk): get_textures (boolean-mask coloring) is not part of forward()
    # and is not implemented here.
    print("KERNEL_OK")
</pallas_src>

<mosaic_0001>
module attributes {stable_mosaic.version = 11 : i64} {
  func.func @kernel(%arg0: i32, %arg1: memref<24x128xf32, #tpu.memory_space<vmem>>, %arg2: memref<24x128xf32, #tpu.memory_space<vmem>>, %arg3: memref<24x128xf32, #tpu.memory_space<vmem>>, %arg4: memref<24x128xf32, #tpu.memory_space<vmem>>) attributes {dimension_semantics = [#tpu.dimension_semantics<parallel>], iteration_bounds = array<i64: 2>, scalar_prefetch = 0 : i64, scratch_operands = 0 : i64, tpu.core_type = #tpu.core_type<tc>, window_params = [{transform_indices = @transform_0, window_bounds = array<i64: 24, 128>}, {transform_indices = @transform_1, window_bounds = array<i64: 24, 128>}, {transform_indices = @transform_2, window_bounds = array<i64: 24, 128>}, {transform_indices = @transform_3, window_bounds = array<i64: 24, 128>}]} {
    %c0_i32 = arith.constant 0 : i32
    %c3_i32 = arith.constant 3 : i32
    %0 = arith.addi %c0_i32, %c3_i32 : i32
    %c1_i32 = arith.constant 1 : i32
    scf.for %arg5 = %c0_i32 to %0 step %c1_i32  : i32 {
      %c8_i32 = arith.constant 8 : i32
      %1 = arith.muli %arg5, %c8_i32 : i32
      %2 = tpu.assume_multiple %1, 8 : i32
      %3 = arith.index_cast %2 : i32 to index
      %c0 = arith.constant 0 : index
      %4 = vector.load %arg1[%3, %c0] : memref<24x128xf32, #tpu.memory_space<vmem>>, vector<8x128xf32>
      %5 = arith.index_cast %2 : i32 to index
      %c0_1 = arith.constant 0 : index
      %6 = vector.load %arg2[%5, %c0_1] : memref<24x128xf32, #tpu.memory_space<vmem>>, vector<8x128xf32>
      %7 = arith.index_cast %2 : i32 to index
      %c0_2 = arith.constant 0 : index
      %8 = vector.load %arg3[%7, %c0_2] : memref<24x128xf32, #tpu.memory_space<vmem>>, vector<8x128xf32>
      %cst = arith.constant 4.500000e+00 : f32
      %9 = vector.broadcast %cst : f32 to vector<8x128xf32>
      %10 = arith.subf %4, %9 : vector<8x128xf32>
      %cst_3 = arith.constant 0.000000e+00 : f32
      %11 = vector.broadcast %cst_3 : f32 to vector<8x128xf32>
      %12 = arith.subf %6, %11 : vector<8x128xf32>
      %cst_4 = arith.constant 0.000000e+00 : f32
      %13 = vector.broadcast %cst_4 : f32 to vector<8x128xf32>
      %14 = arith.subf %8, %13 : vector<8x128xf32>
      %15 = arith.mulf %10, %10 : vector<8x128xf32>
      %16 = arith.mulf %12, %12 : vector<8x128xf32>
      %17 = arith.addf %15, %16 : vector<8x128xf32>
      %18 = arith.mulf %14, %14 : vector<8x128xf32>
      %19 = arith.addf %17, %18 : vector<8x128xf32>
      %20 = math.sqrt %19 : vector<8x128xf32>
      %cst_5 = arith.constant 1.600000e+00 : f32
      %21 = vector.broadcast %cst_5 : f32 to vector<8x128xf32>
      %22 = arith.subf %20, %21 : vector<8x128xf32>
      %cst_6 = arith.constant 1.450000e+00 : f32
      %23 = vector.broadcast %cst_6 : f32 to vector<8x128xf32>
      %24 = arith.subf %23, %20 : vector<8x128xf32>
      %25 = math.absf %10 : vector<8x128xf32>
      %cst_7 = arith.constant 1.700000e+00 : f32
      %26 = vector.broadcast %cst_7 : f32 to vector<8x128xf32>
      %27 = arith.subf %26, %25 : vector<8x128xf32>
      %cst_8 = arith.constant 0.000000e+00 : f32
      %28 = vector.broadcast %cst_8 : f32 to vector<8x128xf32>
      %29 = arith.minimumf %27, %28 : vector<8x128xf32>
      %30 = arith.mulf %29, %29 : vector<8x128xf32>
      %31 = math.absf %12 : vector<8x128xf32>
      %cst_9 = arith.constant 1.700000e+00 : f32
      %32 = vector.broadcast %cst_9 : f32 to vector<8x128xf32>
      %33 = arith.subf %32, %31 : vector<8x128xf32>
      %cst_10 = arith.constant 0.000000e+00 : f32
      %34 = vector.broadcast %cst_10 : f32 to vector<8x128xf32>
      %35 = arith.minimumf %33, %34 : vector<8x128xf32>
      %36 = arith.mulf %35, %35 : vector<8x128xf32>
      %cst_11 = arith.constant 6.000000e-01 : f32
      %37 = vector.broadcast %cst_11 : f32 to vector<8x128xf32>
      %38 = arith.subf %8, %37 : vector<8x128xf32>
      %39 = math.absf %38 : vector<8x128xf32>
      %cst_12 = arith.constant 5.000000e-01 : f32
      %40 = vector.broadcast %cst_12 : f32 to vector<8x128xf32>
      %41 = arith.subf %40, %39 : vector<8x128xf32>
      %cst_13 = arith.constant 0.000000e+00 : f32
      %42 = vector.broadcast %cst_13 : f32 to vector<8x128xf32>
      %43 = arith.minimumf %41, %42 : vector<8x128xf32>
      %44 = arith.mulf %43, %43 : vector<8x128xf32>
      %45 = arith.addf %30, %36 : vector<8x128xf32>
      %46 = arith.addf %45, %44 : vector<8x128xf32>
      %47 = math.sqrt %46 : vector<8x128xf32>
      %48 = arith.minimumf %27, %33 : vector<8x128xf32>
      %49 = arith.minimumf %48, %41 : vector<8x128xf32>
      %cst_14 = arith.constant 0.000000e+00 : f32
      %50 = vector.broadcast %cst_14 : f32 to vector<8x128xf32>
      %51 = arith.maximumf %49, %50 : vector<8x128xf32>
      %52 = arith.subf %51, %47 : vector<8x128xf32>
      %53 = arith.addf %24, %52 : vector<8x128xf32>
      %cst_15 = arith.constant -6.000000e-01 : f32
      %54 = vector.broadcast %cst_15 : f32 to vector<8x128xf32>
      %55 = arith.subf %8, %54 : vector<8x128xf32>
      %56 = math.absf %55 : vector<8x128xf32>
      %cst_16 = arith.constant 5.000000e-01 : f32
      %57 = vector.broadcast %cst_16 : f32 to vector<8x128xf32>
      %58 = arith.subf %57, %56 : vector<8x128xf32>
      %cst_17 = arith.constant 0.000000e+00 : f32
      %59 = vector.broadcast %cst_17 : f32 to vector<8x128xf32>
      %60 = arith.minimumf %58, %59 : vector<8x128xf32>
      %61 = arith.mulf %60, %60 : vector<8x128xf32>
      %62 = arith.addf %30, %36 : vector<8x128xf32>
      %63 = arith.addf %62, %61 : vector<8x128xf32>
      %64 = math.sqrt %63 : vector<8x128xf32>
      %65 = arith.minimumf %27, %33 : vector<8x128xf32>
      %66 = arith.minimumf %65, %58 : vector<8x128xf32>
      %cst_18 = arith.constant 0.000000e+00 : f32
      %67 = vector.broadcast %cst_18 : f32 to vector<8x128xf32>
      %68 = arith.maximumf %66, %67 : vector<8x128xf32>
      %69 = arith.subf %68, %64 : vector<8x128xf32>
      %70 = arith.maximumf %53, %69 : vector<8x128xf32>
      %71 = arith.maximumf %22, %70 : vector<8x128xf32>
      %cst_19 = arith.constant 1.200000e+00 : f32
      %72 = vector.broadcast %cst_19 : f32 to vector<8x128xf32>
      %73 = arith.subf %25, %72 : vector<8x128xf32>
      %cst_20 = arith.constant 0.000000e+00 : f32
      %74 = vector.broadcast %cst_20 : f32 to vector<8x128xf32>
      %75 = arith.maximumf %73, %74 : vector<8x128xf32>
      %76 = arith.mulf %75, %75 : vector<8x128xf32>
      %cst_21 = arith.constant 1.200000e+00 : f32
      %77 = vector.broadcast %cst_21 : f32 to vector<8x128xf32>
      %78 = arith.subf %31, %77 : vector<8x128xf32>
      %cst_22 = arith.constant 0.000000e+00 : f32
      %79 = vector.broadcast %cst_22 : f32 to vector<8x128xf32>
      %80 = arith.maximumf %78, %79 : vector<8x128xf32>
      %81 = arith.mulf %80, %80 : vector<8x128xf32>
      %82 = math.absf %14 : vector<8x128xf32>
      %cst_23 = arith.constant 1.200000e+00 : f32
      %83 = vector.broadcast %cst_23 : f32 to vector<8x128xf32>
      %84 = arith.subf %82, %83 : vector<8x128xf32>
      %cst_24 = arith.constant 0.000000e+00 : f32
      %85 = vector.broadcast %cst_24 : f32 to vector<8x128xf32>
      %86 = arith.maximumf %84, %85 : vector<8x128xf32>
      %87 = arith.mulf %86, %86 : vector<8x128xf32>
      %88 = arith.addf %76, %81 : vector<8x128xf32>
      %89 = arith.addf %88, %87 : vector<8x128xf32>
      %90 = math.sqrt %89 : vector<8x128xf32>
      %91 = arith.maximumf %73, %78 : vector<8x128xf32>
      %92 = arith.maximumf %91, %84 : vector<8x128xf32>
      %cst_25 = arith.constant 0.000000e+00 : f32
      %93 = vector.broadcast %cst_25 : f32 to vector<8x128xf32>
      %94 = arith.minimumf %92, %93 : vector<8x128xf32>
      %95 = arith.addf %90, %94 : vector<8x128xf32>
      %cst_26 = arith.constant 1.100000e+00 : f32
      %96 = vector.broadcast %cst_26 : f32 to vector<8x128xf32>
      %97 = arith.subf %96, %25 : vector<8x128xf32>
      %cst_27 = arith.constant 0.000000e+00 : f32
      %98 = vector.broadcast %cst_27 : f32 to vector<8x128xf32>
      %99 = arith.minimumf %97, %98 : vector<8x128xf32>
      %100 = arith.mulf %99, %99 : vector<8x128xf32>
      %cst_28 = arith.constant 1.100000e+00 : f32
      %101 = vector.broadcast %cst_28 : f32 to vector<8x128xf32>
      %102 = arith.subf %101, %31 : vector<8x128xf32>
      %cst_29 = arith.constant 0.000000e+00 : f32
      %103 = vector.broadcast %cst_29 : f32 to vector<8x128xf32>
      %104 = arith.minimumf %102, %103 : vector<8x128xf32>
      %105 = arith.mulf %104, %104 : vector<8x128xf32>
      %cst_30 = arith.constant 1.100000e+00 : f32
      %106 = vector.broadcast %cst_30 : f32 to vector<8x128xf32>
      %107 = arith.subf %106, %82 : vector<8x128xf32>
      %cst_31 = arith.constant 0.000000e+00 : f32
      %108 = vector.broadcast %cst_31 : f32 to vector<8x128xf32>
      %109 = arith.minimumf %107, %108 : vector<8x128xf32>
      %110 = arith.mulf %109, %109 : vector<8x128xf32>
      %111 = arith.addf %100, %105 : vector<8x128xf32>
      %112 = arith.addf %111, %110 : vector<8x128xf32>
      %113 = math.sqrt %112 : vector<8x128xf32>
      %114 = arith.minimumf %97, %102 : vector<8x128xf32>
      %115 = arith.minimumf %114, %107 : vector<8x128xf32>
      %cst_32 = arith.constant 0.000000e+00 : f32
      %116 = vector.broadcast %cst_32 : f32 to vector<8x128xf32>
      %117 = arith.maximumf %115, %116 : vector<8x128xf32>
      %118 = arith.subf %117, %113 : vector<8x128xf32>
      %119 = arith.maximumf %95, %118 : vector<8x128xf32>
      %cst_33 = arith.constant 6.000000e+00 : f32
      %120 = vector.broadcast %cst_33 : f32 to vector<8x128xf32>
      %121 = arith.subf %4, %120 : vector<8x128xf32>
      %122 = math.absf %121 : vector<8x128xf32>
      %cst_34 = arith.constant 6.000000e-01 : f32
      %123 = vector.broadcast %cst_34 : f32 to vector<8x128xf32>
      %124 = arith.subf %123, %122 : vector<8x128xf32>
      %cst_35 = arith.constant 0.000000e+00 : f32
      %125 = vector.broadcast %cst_35 : f32 to vector<8x128xf32>
      %126 = arith.minimumf %124, %125 : vector<8x128xf32>
      %127 = arith.mulf %126, %126 : vector<8x128xf32>
      %cst_36 = arith.constant 6.000000e-01 : f32
      %128 = vector.broadcast %cst_36 : f32 to vector<8x128xf32>
      %129 = arith.subf %128, %31 : vector<8x128xf32>
      %cst_37 = arith.constant 0.000000e+00 : f32
      %130 = vector.broadcast %cst_37 : f32 to vector<8x128xf32>
      %131 = arith.minimumf %129, %130 : vector<8x128xf32>
      %132 = arith.mulf %131, %131 : vector<8x128xf32>
      %cst_38 = arith.constant 6.000000e-01 : f32
      %133 = vector.broadcast %cst_38 : f32 to vector<8x128xf32>
      %134 = arith.subf %133, %82 : vector<8x128xf32>
      %cst_39 = arith.constant 0.000000e+00 : f32
      %135 = vector.broadcast %cst_39 : f32 to vector<8x128xf32>
      %136 = arith.minimumf %134, %135 : vector<8x128xf32>
      %137 = arith.mulf %136, %136 : vector<8x128xf32>
      %138 = arith.addf %127, %132 : vector<8x128xf32>
      %139 = arith.addf %138, %137 : vector<8x128xf32>
      %140 = math.sqrt %139 : vector<8x128xf32>
      %141 = arith.minimumf %124, %129 : vector<8x128xf32>
      %142 = arith.minimumf %141, %134 : vector<8x128xf32>
      %cst_40 = arith.constant 0.000000e+00 : f32
      %143 = vector.broadcast %cst_40 : f32 to vector<8x128xf32>
      %144 = arith.maximumf %142, %143 : vector<8x128xf32>
      %145 = arith.subf %144, %140 : vector<8x128xf32>
      %146 = arith.maximumf %119, %145 : vector<8x128xf32>
      %cst_41 = arith.constant 3.000000e+00 : f32
      %147 = vector.broadcast %cst_41 : f32 to vector<8x128xf32>
      %148 = arith.subf %4, %147 : vector<8x128xf32>
      %149 = math.absf %148 : vector<8x128xf32>
      %cst_42 = arith.constant 6.000000e-01 : f32
      %150 = vector.broadcast %cst_42 : f32 to vector<8x128xf32>
      %151 = arith.subf %150, %149 : vector<8x128xf32>
      %cst_43 = arith.constant 0.000000e+00 : f32
      %152 = vector.broadcast %cst_43 : f32 to vector<8x128xf32>
      %153 = arith.minimumf %151, %152 : vector<8x128xf32>
      %154 = arith.mulf %153, %153 : vector<8x128xf32>
      %155 = arith.addf %154, %132 : vector<8x128xf32>
      %156 = arith.addf %155, %137 : vector<8x128xf32>
      %157 = math.sqrt %156 : vector<8x128xf32>
      %158 = arith.minimumf %151, %129 : vector<8x128xf32>
      %159 = arith.minimumf %158, %134 : vector<8x128xf32>
      %cst_44 = arith.constant 0.000000e+00 : f32
      %160 = vector.broadcast %cst_44 : f32 to vector<8x128xf32>
      %161 = arith.maximumf %159, %160 : vector<8x128xf32>
      %162 = arith.subf %161, %157 : vector<8x128xf32>
      %163 = arith.maximumf %146, %162 : vector<8x128xf32>
      %cst_45 = arith.constant 6.000000e-01 : f32
      %164 = vector.broadcast %cst_45 : f32 to vector<8x128xf32>
      %165 = arith.subf %164, %25 : vector<8x128xf32>
      %cst_46 = arith.constant 0.000000e+00 : f32
      %166 = vector.broadcast %cst_46 : f32 to vector<8x128xf32>
      %167 = arith.minimumf %165, %166 : vector<8x128xf32>
      %168 = arith.mulf %167, %167 : vector<8x128xf32>
      %cst_47 = arith.constant 1.500000e+00 : f32
      %169 = vector.broadcast %cst_47 : f32 to vector<8x128xf32>
      %170 = arith.subf %6, %169 : vector<8x128xf32>
      %171 = math.absf %170 : vector<8x128xf32>
      %cst_48 = arith.constant 6.000000e-01 : f32
      %172 = vector.broadcast %cst_48 : f32 to vector<8x128xf32>
      %173 = arith.subf %172, %171 : vector<8x128xf32>
      %cst_49 = arith.constant 0.000000e+00 : f32
      %174 = vector.broadcast %cst_49 : f32 to vector<8x128xf32>
      %175 = arith.minimumf %173, %174 : vector<8x128xf32>
      %176 = arith.mulf %175, %175 : vector<8x128xf32>
      %177 = arith.addf %168, %176 : vector<8x128xf32>
      %178 = arith.addf %177, %137 : vector<8x128xf32>
      %179 = math.sqrt %178 : vector<8x128xf32>
      %180 = arith.minimumf %165, %173 : vector<8x128xf32>
      %181 = arith.minimumf %180, %134 : vector<8x128xf32>
      %cst_50 = arith.constant 0.000000e+00 : f32
      %182 = vector.broadcast %cst_50 : f32 to vector<8x128xf32>
      %183 = arith.maximumf %181, %182 : vector<8x128xf32>
      %184 = arith.subf %183, %179 : vector<8x128xf32>
      %185 = arith.maximumf %163, %184 : vector<8x128xf32>
      %cst_51 = arith.constant -1.500000e+00 : f32
      %186 = vector.broadcast %cst_51 : f32 to vector<8x128xf32>
      %187 = arith.subf %6, %186 : vector<8x128xf32>
      %188 = math.absf %187 : vector<8x128xf32>
      %cst_52 = arith.constant 6.000000e-01 : f32
      %189 = vector.broadcast %cst_52 : f32 to vector<8x128xf32>
      %190 = arith.subf %189, %188 : vector<8x128xf32>
      %cst_53 = arith.constant 0.000000e+00 : f32
      %191 = vector.broadcast %cst_53 : f32 to vector<8x128xf32>
      %192 = arith.minimumf %190, %191 : vector<8x128xf32>
      %193 = arith.mulf %192, %192 : vector<8x128xf32>
      %194 = arith.addf %168, %193 : vector<8x128xf32>
      %195 = arith.addf %194, %137 : vector<8x128xf32>
      %196 = math.sqrt %195 : vector<8x128xf32>
      %197 = arith.minimumf %165, %190 : vector<8x128xf32>
      %198 = arith.minimumf %197, %134 : vector<8x128xf32>
      %cst_54 = arith.constant 0.000000e+00 : f32
      %199 = vector.broadcast %cst_54 : f32 to vector<8x128xf32>
      %200 = arith.maximumf %198, %199 : vector<8x128xf32>
      %201 = arith.subf %200, %196 : vector<8x128xf32>
      %202 = arith.maximumf %185, %201 : vector<8x128xf32>
      %cst_55 = arith.constant 1.500000e+00 : f32
      %203 = vector.broadcast %cst_55 : f32 to vector<8x128xf32>
      %204 = arith.subf %8, %203 : vector<8x128xf32>
      %205 = math.absf %204 : vector<8x128xf32>
      %cst_56 = arith.constant 6.000000e-01 : f32
      %206 = vector.broadcast %cst_56 : f32 to vector<8x128xf32>
      %207 = arith.subf %206, %205 : vector<8x128xf32>
      %cst_57 = arith.constant 0.000000e+00 : f32
      %208 = vector.broadcast %cst_57 : f32 to vector<8x128xf32>
      %209 = arith.minimumf %207, %208 : vector<8x128xf32>
      %210 = arith.mulf %209, %209 : vector<8x128xf32>
      %211 = arith.addf %168, %132 : vector<8x128xf32>
      %212 = arith.addf %211, %210 : vector<8x128xf32>
      %213 = math.sqrt %212 : vector<8x128xf32>
      %214 = arith.minimumf %165, %129 : vector<8x128xf32>
      %215 = arith.minimumf %214, %207 : vector<8x128xf32>
      %cst_58 = arith.constant 0.000000e+00 : f32
      %216 = vector.broadcast %cst_58 : f32 to vector<8x128xf32>
      %217 = arith.maximumf %215, %216 : vector<8x128xf32>
      %218 = arith.subf %217, %213 : vector<8x128xf32>
      %219 = arith.maximumf %202, %218 : vector<8x128xf32>
      %cst_59 = arith.constant -1.500000e+00 : f32
      %220 = vector.broadcast %cst_59 : f32 to vector<8x128xf32>
      %221 = arith.subf %8, %220 : vector<8x128xf32>
      %222 = math.absf %221 : vector<8x128xf32>
      %cst_60 = arith.constant 6.000000e-01 : f32
      %223 = vector.broadcast %cst_60 : f32 to vector<8x128xf32>
      %224 = arith.subf %223, %222 : vector<8x128xf32>
      %cst_61 = arith.constant 0.000000e+00 : f32
      %225 = vector.broadcast %cst_61 : f32 to vector<8x128xf32>
      %226 = arith.minimumf %224, %225 : vector<8x128xf32>
      %227 = arith.mulf %226, %226 : vector<8x128xf32>
      %228 = arith.addf %168, %132 : vector<8x128xf32>
      %229 = arith.addf %228, %227 : vector<8x128xf32>
      %230 = math.sqrt %229 : vector<8x128xf32>
      %231 = arith.minimumf %165, %129 : vector<8x128xf32>
      %232 = arith.minimumf %231, %224 : vector<8x128xf32>
      %cst_62 = arith.constant 0.000000e+00 : f32
      %233 = vector.broadcast %cst_62 : f32 to vector<8x128xf32>
      %234 = arith.maximumf %232, %233 : vector<8x128xf32>
      %235 = arith.subf %234, %230 : vector<8x128xf32>
      %236 = arith.maximumf %219, %235 : vector<8x128xf32>
      %237 = arith.minimumf %71, %236 : vector<8x128xf32>
      %cst_63 = arith.constant 1.000000e+00 : f32
      %238 = vector.broadcast %cst_63 : f32 to vector<8x128xf32>
      %239 = arith.subf %20, %238 : vector<8x128xf32>
      %240 = arith.minimumf %237, %239 : vector<8x128xf32>
      %cst_64 = arith.constant 0.899999976 : f32
      %241 = vector.broadcast %cst_64 : f32 to vector<8x128xf32>
      %242 = arith.subf %241, %20 : vector<8x128xf32>
      %243 = arith.maximumf %240, %242 : vector<8x128xf32>
      %cst_65 = arith.constant 5.500000e+00 : f32
      %244 = vector.broadcast %cst_65 : f32 to vector<8x128xf32>
      %245 = arith.subf %4, %244 : vector<8x128xf32>
      %246 = math.absf %245 : vector<8x128xf32>
      %cst_66 = arith.constant 4.000000e-01 : f32
      %247 = vector.broadcast %cst_66 : f32 to vector<8x128xf32>
      %248 = arith.subf %247, %246 : vector<8x128xf32>
      %cst_67 = arith.constant 0.000000e+00 : f32
      %249 = vector.broadcast %cst_67 : f32 to vector<8x128xf32>
      %250 = arith.minimumf %248, %249 : vector<8x128xf32>
      %251 = arith.mulf %250, %250 : vector<8x128xf32>
      %cst_68 = arith.constant 4.000000e-01 : f32
      %252 = vector.broadcast %cst_68 : f32 to vector<8x128xf32>
      %253 = arith.subf %252, %31 : vector<8x128xf32>
      %cst_69 = arith.constant 0.000000e+00 : f32
      %254 = vector.broadcast %cst_69 : f32 to vector<8x128xf32>
      %255 = arith.minimumf %253, %254 : vector<8x128xf32>
      %256 = arith.mulf %255, %255 : vector<8x128xf32>
      %cst_70 = arith.constant 4.000000e-01 : f32
      %257 = vector.broadcast %cst_70 : f32 to vector<8x128xf32>
      %258 = arith.subf %257, %82 : vector<8x128xf32>
      %cst_71 = arith.constant 0.000000e+00 : f32
      %259 = vector.broadcast %cst_71 : f32 to vector<8x128xf32>
      %260 = arith.minimumf %258, %259 : vector<8x128xf32>
      %261 = arith.mulf %260, %260 : vector<8x128xf32>
      %262 = arith.addf %251, %256 : vector<8x128xf32>
      %263 = arith.addf %262, %261 : vector<8x128xf32>
      %264 = math.sqrt %263 : vector<8x128xf32>
      %265 = arith.minimumf %248, %253 : vector<8x128xf32>
      %266 = arith.minimumf %265, %258 : vector<8x128xf32>
      %cst_72 = arith.constant 0.000000e+00 : f32
      %267 = vector.broadcast %cst_72 : f32 to vector<8x128xf32>
      %268 = arith.maximumf %266, %267 : vector<8x128xf32>
      %269 = arith.subf %268, %264 : vector<8x128xf32>
      %270 = arith.maximumf %243, %269 : vector<8x128xf32>
      %cst_73 = arith.constant 3.500000e+00 : f32
      %271 = vector.broadcast %cst_73 : f32 to vector<8x128xf32>
      %272 = arith.subf %4, %271 : vector<8x128xf32>
      %273 = math.absf %272 : vector<8x128xf32>
      %cst_74 = arith.constant 4.000000e-01 : f32
      %274 = vector.broadcast %cst_74 : f32 to vector<8x128xf32>
      %275 = arith.subf %274, %273 : vector<8x128xf32>
      %cst_75 = arith.constant 0.000000e+00 : f32
      %276 = vector.broadcast %cst_75 : f32 to vector<8x128xf32>
      %277 = arith.minimumf %275, %276 : vector<8x128xf32>
      %278 = arith.mulf %277, %277 : vector<8x128xf32>
      %279 = arith.addf %278, %256 : vector<8x128xf32>
      %280 = arith.addf %279, %261 : vector<8x128xf32>
      %281 = math.sqrt %280 : vector<8x128xf32>
      %282 = arith.minimumf %275, %253 : vector<8x128xf32>
      %283 = arith.minimumf %282, %258 : vector<8x128xf32>
      %cst_76 = arith.constant 0.000000e+00 : f32
      %284 = vector.broadcast %cst_76 : f32 to vector<8x128xf32>
      %285 = arith.maximumf %283, %284 : vector<8x128xf32>
      %286 = arith.subf %285, %281 : vector<8x128xf32>
      %287 = arith.maximumf %270, %286 : vector<8x128xf32>
      %cst_77 = arith.constant 4.000000e-01 : f32
      %288 = vector.broadcast %cst_77 : f32 to vector<8x128xf32>
      %289 = arith.subf %288, %25 : vector<8x128xf32>
      %cst_78 = arith.constant 0.000000e+00 : f32
      %290 = vector.broadcast %cst_78 : f32 to vector<8x128xf32>
      %291 = arith.minimumf %289, %290 : vector<8x128xf32>
      %292 = arith.mulf %291, %291 : vector<8x128xf32>
      %cst_79 = arith.constant 1.000000e+00 : f32
      %293 = vector.broadcast %cst_79 : f32 to vector<8x128xf32>
      %294 = arith.subf %6, %293 : vector<8x128xf32>
      %295 = math.absf %294 : vector<8x128xf32>
      %cst_80 = arith.constant 4.000000e-01 : f32
      %296 = vector.broadcast %cst_80 : f32 to vector<8x128xf32>
      %297 = arith.subf %296, %295 : vector<8x128xf32>
      %cst_81 = arith.constant 0.000000e+00 : f32
      %298 = vector.broadcast %cst_81 : f32 to vector<8x128xf32>
      %299 = arith.minimumf %297, %298 : vector<8x128xf32>
      %300 = arith.mulf %299, %299 : vector<8x128xf32>
      %301 = arith.addf %292, %300 : vector<8x128xf32>
      %302 = arith.addf %301, %261 : vector<8x128xf32>
      %303 = math.sqrt %302 : vector<8x128xf32>
      %304 = arith.minimumf %289, %297 : vector<8x128xf32>
      %305 = arith.minimumf %304, %258 : vector<8x128xf32>
      %cst_82 = arith.constant 0.000000e+00 : f32
      %306 = vector.broadcast %cst_82 : f32 to vector<8x128xf32>
      %307 = arith.maximumf %305, %306 : vector<8x128xf32>
      %308 = arith.subf %307, %303 : vector<8x128xf32>
      %309 = arith.maximumf %287, %308 : vector<8x128xf32>
      %cst_83 = arith.constant -1.000000e+00 : f32
      %310 = vector.broadcast %cst_83 : f32 to vector<8x128xf32>
      %311 = arith.subf %6, %310 : vector<8x128xf32>
      %312 = math.absf %311 : vector<8x128xf32>
      %cst_84 = arith.constant 4.000000e-01 : f32
      %313 = vector.broadcast %cst_84 : f32 to vector<8x128xf32>
      %314 = arith.subf %313, %312 : vector<8x128xf32>
      %cst_85 = arith.constant 0.000000e+00 : f32
      %315 = vector.broadcast %cst_85 : f32 to vector<8x128xf32>
      %316 = arith.minimumf %314, %315 : vector<8x128xf32>
      %317 = arith.mulf %316, %316 : vector<8x128xf32>
      %318 = arith.addf %292, %317 : vector<8x128xf32>
      %319 = arith.addf %318, %261 : vector<8x128xf32>
      %320 = math.sqrt %319 : vector<8x128xf32>
      %321 = arith.minimumf %289, %314 : vector<8x128xf32>
      %322 = arith.minimumf %321, %258 : vector<8x128xf32>
      %cst_86 = arith.constant 0.000000e+00 : f32
      %323 = vector.broadcast %cst_86 : f32 to vector<8x128xf32>
      %324 = arith.maximumf %322, %323 : vector<8x128xf32>
      %325 = arith.subf %324, %320 : vector<8x128xf32>
      %326 = arith.maximumf %309, %325 : vector<8x128xf32>
      %cst_87 = arith.constant 1.000000e+00 : f32
      %327 = vector.broadcast %cst_87 : f32 to vector<8x128xf32>
      %328 = arith.subf %8, %327 : vector<8x128xf32>
      %329 = math.absf %328 : vector<8x128xf32>
      %cst_88 = arith.constant 4.000000e-01 : f32
      %330 = vector.broadcast %cst_88 : f32 to vector<8x128xf32>
      %331 = arith.subf %330, %329 : vector<8x128xf32>
      %cst_89 = arith.constant 0.000000e+00 : f32
      %332 = vector.broadcast %cst_89 : f32 to vector<8x128xf32>
      %333 = arith.minimumf %331, %332 : vector<8x128xf32>
      %334 = arith.mulf %333, %333 : vector<8x128xf32>
      %335 = arith.addf %292, %256 : vector<8x128xf32>
      %336 = arith.addf %335, %334 : vector<8x128xf32>
      %337 = math.sqrt %336 : vector<8x128xf32>
      %338 = arith.minimumf %289, %253 : vector<8x128xf32>
      %339 = arith.minimumf %338, %331 : vector<8x128xf32>
      %cst_90 = arith.constant 0.000000e+00 : f32
      %340 = vector.broadcast %cst_90 : f32 to vector<8x128xf32>
      %341 = arith.maximumf %339, %340 : vector<8x128xf32>
      %342 = arith.subf %341, %337 : vector<8x128xf32>
      %343 = arith.maximumf %326, %342 : vector<8x128xf32>
      %cst_91 = arith.constant -1.000000e+00 : f32
      %344 = vector.broadcast %cst_91 : f32 to vector<8x128xf32>
      %345 = arith.subf %8, %344 : vector<8x128xf32>
      %346 = math.absf %345 : vector<8x128xf32>
      %cst_92 = arith.constant 4.000000e-01 : f32
      %347 = vector.broadcast %cst_92 : f32 to vector<8x128xf32>
      %348 = arith.subf %347, %346 : vector<8x128xf32>
      %cst_93 = arith.constant 0.000000e+00 : f32
      %349 = vector.broadcast %cst_93 : f32 to vector<8x128xf32>
      %350 = arith.minimumf %348, %349 : vector<8x128xf32>
      %351 = arith.mulf %350, %350 : vector<8x128xf32>
      %352 = arith.addf %292, %256 : vector<8x128xf32>
      %353 = arith.addf %352, %351 : vector<8x128xf32>
      %354 = math.sqrt %353 : vector<8x128xf32>
      %355 = arith.minimumf %289, %253 : vector<8x128xf32>
      %356 = arith.minimumf %355, %348 : vector<8x128xf32>
      %cst_94 = arith.constant 0.000000e+00 : f32
      %357 = vector.broadcast %cst_94 : f32 to vector<8x128xf32>
      %358 = arith.maximumf %356, %357 : vector<8x128xf32>
      %359 = arith.subf %358, %354 : vector<8x128xf32>
      %360 = arith.maximumf %343, %359 : vector<8x128xf32>
      %cst_95 = arith.constant 8.000000e-01 : f32
      %361 = vector.broadcast %cst_95 : f32 to vector<8x128xf32>
      %362 = arith.subf %25, %361 : vector<8x128xf32>
      %cst_96 = arith.constant 0.000000e+00 : f32
      %363 = vector.broadcast %cst_96 : f32 to vector<8x128xf32>
      %364 = arith.maximumf %362, %363 : vector<8x128xf32>
      %365 = arith.mulf %364, %364 : vector<8x128xf32>
      %cst_97 = arith.constant 8.000000e-01 : f32
      %366 = vector.broadcast %cst_97 : f32 to vector<8x128xf32>
      %367 = arith.subf %31, %366 : vector<8x128xf32>
      %cst_98 = arith.constant 0.000000e+00 : f32
      %368 = vector.broadcast %cst_98 : f32 to vector<8x128xf32>
      %369 = arith.maximumf %367, %368 : vector<8x128xf32>
      %370 = arith.mulf %369, %369 : vector<8x128xf32>
      %cst_99 = arith.constant 8.000000e-01 : f32
      %371 = vector.broadcast %cst_99 : f32 to vector<8x128xf32>
      %372 = arith.subf %82, %371 : vector<8x128xf32>
      %cst_100 = arith.constant 0.000000e+00 : f32
      %373 = vector.broadcast %cst_100 : f32 to vector<8x128xf32>
      %374 = arith.maximumf %372, %373 : vector<8x128xf32>
      %375 = arith.mulf %374, %374 : vector<8x128xf32>
      %376 = arith.addf %365, %370 : vector<8x128xf32>
      %377 = arith.addf %376, %375 : vector<8x128xf32>
      %378 = math.sqrt %377 : vector<8x128xf32>
      %379 = arith.maximumf %362, %367 : vector<8x128xf32>
      %380 = arith.maximumf %379, %372 : vector<8x128xf32>
      %cst_101 = arith.constant 0.000000e+00 : f32
      %381 = vector.broadcast %cst_101 : f32 to vector<8x128xf32>
      %382 = arith.minimumf %380, %381 : vector<8x128xf32>
      %383 = arith.addf %378, %382 : vector<8x128xf32>
      %384 = arith.minimumf %360, %383 : vector<8x128xf32>
      %cst_102 = arith.constant -4.500000e+00 : f32
      %385 = vector.broadcast %cst_102 : f32 to vector<8x128xf32>
      %386 = arith.subf %4, %385 : vector<8x128xf32>
      %387 = arith.mulf %386, %386 : vector<8x128xf32>
      %388 = arith.mulf %12, %12 : vector<8x128xf32>
      %389 = arith.addf %387, %388 : vector<8x128xf32>
      %390 = arith.mulf %14, %14 : vector<8x128xf32>
      %391 = arith.addf %389, %390 : vector<8x128xf32>
      %392 = math.sqrt %391 : vector<8x128xf32>
      %cst_103 = arith.constant 1.600000e+00 : f32
      %393 = vector.broadcast %cst_103 : f32 to vector<8x128xf32>
      %394 = arith.subf %392, %393 : vector<8x128xf32>
      %cst_104 = arith.constant 1.450000e+00 : f32
      %395 = vector.broadcast %cst_104 : f32 to vector<8x128xf32>
      %396 = arith.subf %395, %392 : vector<8x128xf32>
      %397 = math.absf %386 : vector<8x128xf32>
      %cst_105 = arith.constant 1.700000e+00 : f32
      %398 = vector.broadcast %cst_105 : f32 to vector<8x128xf32>
      %399 = arith.subf %398, %397 : vector<8x128xf32>
      %cst_106 = arith.constant 0.000000e+00 : f32
      %400 = vector.broadcast %cst_106 : f32 to vector<8x128xf32>
      %401 = arith.minimumf %399, %400 : vector<8x128xf32>
      %402 = arith.mulf %401, %401 : vector<8x128xf32>
      %403 = arith.addf %402, %36 : vector<8x128xf32>
      %404 = arith.addf %403, %44 : vector<8x128xf32>
      %405 = math.sqrt %404 : vector<8x128xf32>
      %406 = arith.minimumf %399, %33 : vector<8x128xf32>
      %407 = arith.minimumf %406, %41 : vector<8x128xf32>
      %cst_107 = arith.constant 0.000000e+00 : f32
      %408 = vector.broadcast %cst_107 : f32 to vector<8x128xf32>
      %409 = arith.maximumf %407, %408 : vector<8x128xf32>
      %410 = arith.subf %409, %405 : vector<8x128xf32>
      %411 = arith.addf %396, %410 : vector<8x128xf32>
      %412 = arith.addf %402, %36 : vector<8x128xf32>
      %413 = arith.addf %412, %61 : vector<8x128xf32>
      %414 = math.sqrt %413 : vector<8x128xf32>
      %415 = arith.minimumf %399, %33 : vector<8x128xf32>
      %416 = arith.minimumf %415, %58 : vector<8x128xf32>
      %cst_108 = arith.constant 0.000000e+00 : f32
      %417 = vector.broadcast %cst_108 : f32 to vector<8x128xf32>
      %418 = arith.maximumf %416, %417 : vector<8x128xf32>
      %419 = arith.subf %418, %414 : vector<8x128xf32>
      %420 = arith.maximumf %411, %419 : vector<8x128xf32>
      %421 = arith.maximumf %394, %420 : vector<8x128xf32>
      %cst_109 = arith.constant 1.200000e+00 : f32
      %422 = vector.broadcast %cst_109 : f32 to vector<8x128xf32>
      %423 = arith.subf %397, %422 : vector<8x128xf32>
      %cst_110 = arith.constant 0.000000e+00 : f32
      %424 = vector.broadcast %cst_110 : f32 to vector<8x128xf32>
      %425 = arith.maximumf %423, %424 : vector<8x128xf32>
      %426 = arith.mulf %425, %425 : vector<8x128xf32>
      %427 = arith.addf %426, %81 : vector<8x128xf32>
      %428 = arith.addf %427, %87 : vector<8x128xf32>
      %429 = math.sqrt %428 : vector<8x128xf32>
      %430 = arith.maximumf %423, %78 : vector<8x128xf32>
      %431 = arith.maximumf %430, %84 : vector<8x128xf32>
      %cst_111 = arith.constant 0.000000e+00 : f32
      %432 = vector.broadcast %cst_111 : f32 to vector<8x128xf32>
      %433 = arith.minimumf %431, %432 : vector<8x128xf32>
      %434 = arith.addf %429, %433 : vector<8x128xf32>
      %cst_112 = arith.constant 1.100000e+00 : f32
      %435 = vector.broadcast %cst_112 : f32 to vector<8x128xf32>
      %436 = arith.subf %435, %397 : vector<8x128xf32>
      %cst_113 = arith.constant 0.000000e+00 : f32
      %437 = vector.broadcast %cst_113 : f32 to vector<8x128xf32>
      %438 = arith.minimumf %436, %437 : vector<8x128xf32>
      %439 = arith.mulf %438, %438 : vector<8x128xf32>
      %440 = arith.addf %439, %105 : vector<8x128xf32>
      %441 = arith.addf %440, %110 : vector<8x128xf32>
      %442 = math.sqrt %441 : vector<8x128xf32>
      %443 = arith.minimumf %436, %102 : vector<8x128xf32>
      %444 = arith.minimumf %443, %107 : vector<8x128xf32>
      %cst_114 = arith.constant 0.000000e+00 : f32
      %445 = vector.broadcast %cst_114 : f32 to vector<8x128xf32>
      %446 = arith.maximumf %444, %445 : vector<8x128xf32>
      %447 = arith.subf %446, %442 : vector<8x128xf32>
      %448 = arith.maximumf %434, %447 : vector<8x128xf32>
      %cst_115 = arith.constant -3.000000e+00 : f32
      %449 = vector.broadcast %cst_115 : f32 to vector<8x128xf32>
      %450 = arith.subf %4, %449 : vector<8x128xf32>
      %451 = math.absf %450 : vector<8x128xf32>
      %cst_116 = arith.constant 6.000000e-01 : f32
      %452 = vector.broadcast %cst_116 : f32 to vector<8x128xf32>
      %453 = arith.subf %452, %451 : vector<8x128xf32>
      %cst_117 = arith.constant 0.000000e+00 : f32
      %454 = vector.broadcast %cst_117 : f32 to vector<8x128xf32>
      %455 = arith.minimumf %453, %454 : vector<8x128xf32>
      %456 = arith.mulf %455, %455 : vector<8x128xf32>
      %457 = arith.addf %456, %132 : vector<8x128xf32>
      %458 = arith.addf %457, %137 : vector<8x128xf32>
      %459 = math.sqrt %458 : vector<8x128xf32>
      %460 = arith.minimumf %453, %129 : vector<8x128xf32>
      %461 = arith.minimumf %460, %134 : vector<8x128xf32>
      %cst_118 = arith.constant 0.000000e+00 : f32
      %462 = vector.broadcast %cst_118 : f32 to vector<8x128xf32>
      %463 = arith.maximumf %461, %462 : vector<8x128xf32>
      %464 = arith.subf %463, %459 : vector<8x128xf32>
      %465 = arith.maximumf %448, %464 : vector<8x128xf32>
      %cst_119 = arith.constant -6.000000e+00 : f32
      %466 = vector.broadcast %cst_119 : f32 to vector<8x128xf32>
      %467 = arith.subf %4, %466 : vector<8x128xf32>
      %468 = math.absf %467 : vector<8x128xf32>
      %cst_120 = arith.constant 6.000000e-01 : f32
      %469 = vector.broadcast %cst_120 : f32 to vector<8x128xf32>
      %470 = arith.subf %469, %468 : vector<8x128xf32>
      %cst_121 = arith.constant 0.000000e+00 : f32
      %471 = vector.broadcast %cst_121 : f32 to vector<8x128xf32>
      %472 = arith.minimumf %470, %471 : vector<8x128xf32>
      %473 = arith.mulf %472, %472 : vector<8x128xf32>
      %474 = arith.addf %473, %132 : vector<8x128xf32>
      %475 = arith.addf %474, %137 : vector<8x128xf32>
      %476 = math.sqrt %475 : vector<8x128xf32>
      %477 = arith.minimumf %470, %129 : vector<8x128xf32>
      %478 = arith.minimumf %477, %134 : vector<8x128xf32>
      %cst_122 = arith.constant 0.000000e+00 : f32
      %479 = vector.broadcast %cst_122 : f32 to vector<8x128xf32>
      %480 = arith.maximumf %478, %479 : vector<8x128xf32>
      %481 = arith.subf %480, %476 : vector<8x128xf32>
      %482 = arith.maximumf %465, %481 : vector<8x128xf32>
      %cst_123 = arith.constant 6.000000e-01 : f32
      %483 = vector.broadcast %cst_123 : f32 to vector<8x128xf32>
      %484 = arith.subf %483, %397 : vector<8x128xf32>
      %cst_124 = arith.constant 0.000000e+00 : f32
      %485 = vector.broadcast %cst_124 : f32 to vector<8x128xf32>
      %486 = arith.minimumf %484, %485 : vector<8x128xf32>
      %487 = arith.mulf %486, %486 : vector<8x128xf32>
      %488 = arith.addf %487, %176 : vector<8x128xf32>
      %489 = arith.addf %488, %137 : vector<8x128xf32>
      %490 = math.sqrt %489 : vector<8x128xf32>
      %491 = arith.minimumf %484, %173 : vector<8x128xf32>
      %492 = arith.minimumf %491, %134 : vector<8x128xf32>
      %cst_125 = arith.constant 0.000000e+00 : f32
      %493 = vector.broadcast %cst_125 : f32 to vector<8x128xf32>
      %494 = arith.maximumf %492, %493 : vector<8x128xf32>
      %495 = arith.subf %494, %490 : vector<8x128xf32>
      %496 = arith.maximumf %482, %495 : vector<8x128xf32>
      %497 = arith.addf %487, %193 : vector<8x128xf32>
      %498 = arith.addf %497, %137 : vector<8x128xf32>
      %499 = math.sqrt %498 : vector<8x128xf32>
      %500 = arith.minimumf %484, %190 : vector<8x128xf32>
      %501 = arith.minimumf %500, %134 : vector<8x128xf32>
      %cst_126 = arith.constant 0.000000e+00 : f32
      %502 = vector.broadcast %cst_126 : f32 to vector<8x128xf32>
      %503 = arith.maximumf %501, %502 : vector<8x128xf32>
      %504 = arith.subf %503, %499 : vector<8x128xf32>
      %505 = arith.maximumf %496, %504 : vector<8x128xf32>
      %506 = arith.addf %487, %132 : vector<8x128xf32>
      %507 = arith.addf %506, %210 : vector<8x128xf32>
      %508 = math.sqrt %507 : vector<8x128xf32>
      %509 = arith.minimumf %484, %129 : vector<8x128xf32>
      %510 = arith.minimumf %509, %207 : vector<8x128xf32>
      %cst_127 = arith.constant 0.000000e+00 : f32
      %511 = vector.broadcast %cst_127 : f32 to vector<8x128xf32>
      %512 = arith.maximumf %510, %511 : vector<8x128xf32>
      %513 = arith.subf %512, %508 : vector<8x128xf32>
      %514 = arith.maximumf %505, %513 : vector<8x128xf32>
      %515 = arith.addf %487, %132 : vector<8x128xf32>
      %516 = arith.addf %515, %227 : vector<8x128xf32>
      %517 = math.sqrt %516 : vector<8x128xf32>
      %518 = arith.minimumf %484, %129 : vector<8x128xf32>
      %519 = arith.minimumf %518, %224 : vector<8x128xf32>
      %cst_128 = arith.constant 0.000000e+00 : f32
      %520 = vector.broadcast %cst_128 : f32 to vector<8x128xf32>
      %521 = arith.maximumf %519, %520 : vector<8x128xf32>
      %522 = arith.subf %521, %517 : vector<8x128xf32>
      %523 = arith.maximumf %514, %522 : vector<8x128xf32>
      %524 = arith.minimumf %421, %523 : vector<8x128xf32>
      %cst_129 = arith.constant 1.000000e+00 : f32
      %525 = vector.broadcast %cst_129 : f32 to vector<8x128xf32>
      %526 = arith.subf %392, %525 : vector<8x128xf32>
      %527 = arith.minimumf %524, %526 : vector<8x128xf32>
      %cst_130 = arith.constant 0.899999976 : f32
      %528 = vector.broadcast %cst_130 : f32 to vector<8x128xf32>
      %529 = arith.subf %528, %392 : vector<8x128xf32>
      %530 = arith.maximumf %527, %529 : vector<8x128xf32>
      %cst_131 = arith.constant -3.500000e+00 : f32
      %531 = vector.broadcast %cst_131 : f32 to vector<8x128xf32>
      %532 = arith.subf %4, %531 : vector<8x128xf32>
      %533 = math.absf %532 : vector<8x128xf32>
      %cst_132 = arith.constant 4.000000e-01 : f32
      %534 = vector.broadcast %cst_132 : f32 to vector<8x128xf32>
      %535 = arith.subf %534, %533 : vector<8x128xf32>
      %cst_133 = arith.constant 0.000000e+00 : f32
      %536 = vector.broadcast %cst_133 : f32 to vector<8x128xf32>
      %537 = arith.minimumf %535, %536 : vector<8x128xf32>
      %538 = arith.mulf %537, %537 : vector<8x128xf32>
      %539 = arith.addf %538, %256 : vector<8x128xf32>
      %540 = arith.addf %539, %261 : vector<8x128xf32>
      %541 = math.sqrt %540 : vector<8x128xf32>
      %542 = arith.minimumf %535, %253 : vector<8x128xf32>
      %543 = arith.minimumf %542, %258 : vector<8x128xf32>
      %cst_134 = arith.constant 0.000000e+00 : f32
      %544 = vector.broadcast %cst_134 : f32 to vector<8x128xf32>
      %545 = arith.maximumf %543, %544 : vector<8x128xf32>
      %546 = arith.subf %545, %541 : vector<8x128xf32>
      %547 = arith.maximumf %530, %546 : vector<8x128xf32>
      %cst_135 = arith.constant -5.500000e+00 : f32
      %548 = vector.broadcast %cst_135 : f32 to vector<8x128xf32>
      %549 = arith.subf %4, %548 : vector<8x128xf32>
      %550 = math.absf %549 : vector<8x128xf32>
      %cst_136 = arith.constant 4.000000e-01 : f32
      %551 = vector.broadcast %cst_136 : f32 to vector<8x128xf32>
      %552 = arith.subf %551, %550 : vector<8x128xf32>
      %cst_137 = arith.constant 0.000000e+00 : f32
      %553 = vector.broadcast %cst_137 : f32 to vector<8x128xf32>
      %554 = arith.minimumf %552, %553 : vector<8x128xf32>
      %555 = arith.mulf %554, %554 : vector<8x128xf32>
      %556 = arith.addf %555, %256 : vector<8x128xf32>
      %557 = arith.addf %556, %261 : vector<8x128xf32>
      %558 = math.sqrt %557 : vector<8x128xf32>
      %559 = arith.minimumf %552, %253 : vector<8x128xf32>
      %560 = arith.minimumf %559, %258 : vector<8x128xf32>
      %cst_138 = arith.constant 0.000000e+00 : f32
      %561 = vector.broadcast %cst_138 : f32 to vector<8x128xf32>
      %562 = arith.maximumf %560, %561 : vector<8x128xf32>
      %563 = arith.subf %562, %558 : vector<8x128xf32>
      %564 = arith.maximumf %547, %563 : vector<8x128xf32>
      %cst_139 = arith.constant 4.000000e-01 : f32
      %565 = vector.broadcast %cst_139 : f32 to vector<8x128xf32>
      %566 = arith.subf %565, %397 : vector<8x128xf32>
      %cst_140 = arith.constant 0.000000e+00 : f32
      %567 = vector.broadcast %cst_140 : f32 to vector<8x128xf32>
      %568 = arith.minimumf %566, %567 : vector<8x128xf32>
      %569 = arith.mulf %568, %568 : vector<8x128xf32>
      %570 = arith.addf %569, %300 : vector<8x128xf32>
      %571 = arith.addf %570, %261 : vector<8x128xf32>
      %572 = math.sqrt %571 : vector<8x128xf32>
      %573 = arith.minimumf %566, %297 : vector<8x128xf32>
      %574 = arith.minimumf %573, %258 : vector<8x128xf32>
      %cst_141 = arith.constant 0.000000e+00 : f32
      %575 = vector.broadcast %cst_141 : f32 to vector<8x128xf32>
      %576 = arith.maximumf %574, %575 : vector<8x128xf32>
      %577 = arith.subf %576, %572 : vector<8x128xf32>
      %578 = arith.maximumf %564, %577 : vector<8x128xf32>
      %579 = arith.addf %569, %317 : vector<8x128xf32>
      %580 = arith.addf %579, %261 : vector<8x128xf32>
      %581 = math.sqrt %580 : vector<8x128xf32>
      %582 = arith.minimumf %566, %314 : vector<8x128xf32>
      %583 = arith.minimumf %582, %258 : vector<8x128xf32>
      %cst_142 = arith.constant 0.000000e+00 : f32
      %584 = vector.broadcast %cst_142 : f32 to vector<8x128xf32>
      %585 = arith.maximumf %583, %584 : vector<8x128xf32>
      %586 = arith.subf %585, %581 : vector<8x128xf32>
      %587 = arith.maximumf %578, %586 : vector<8x128xf32>
      %588 = arith.addf %569, %256 : vector<8x128xf32>
      %589 = arith.addf %588, %334 : vector<8x128xf32>
      %590 = math.sqrt %589 : vector<8x128xf32>
      %591 = arith.minimumf %566, %253 : vector<8x128xf32>
      %592 = arith.minimumf %591, %331 : vector<8x128xf32>
      %cst_143 = arith.constant 0.000000e+00 : f32
      %593 = vector.broadcast %cst_143 : f32 to vector<8x128xf32>
      %594 = arith.maximumf %592, %593 : vector<8x128xf32>
      %595 = arith.subf %594, %590 : vector<8x128xf32>
      %596 = arith.maximumf %587, %595 : vector<8x128xf32>
      %597 = arith.addf %569, %256 : vector<8x128xf32>
      %598 = arith.addf %597, %351 : vector<8x128xf32>
      %599 = math.sqrt %598 : vector<8x128xf32>
      %600 = arith.minimumf %566, %253 : vector<8x128xf32>
      %601 = arith.minimumf %600, %348 : vector<8x128xf32>
      %cst_144 = arith.constant 0.000000e+00 : f32
      %602 = vector.broadcast %cst_144 : f32 to vector<8x128xf32>
      %603 = arith.maximumf %601, %602 : vector<8x128xf32>
      %604 = arith.subf %603, %599 : vector<8x128xf32>
      %605 = arith.maximumf %596, %604 : vector<8x128xf32>
      %cst_145 = arith.constant 8.000000e-01 : f32
      %606 = vector.broadcast %cst_145 : f32 to vector<8x128xf32>
      %607 = arith.subf %397, %606 : vector<8x128xf32>
      %cst_146 = arith.constant 0.000000e+00 : f32
      %608 = vector.broadcast %cst_146 : f32 to vector<8x128xf32>
      %609 = arith.maximumf %607, %608 : vector<8x128xf32>
      %610 = arith.mulf %609, %609 : vector<8x128xf32>
      %611 = arith.addf %610, %370 : vector<8x128xf32>
      %612 = arith.addf %611, %375 : vector<8x128xf32>
      %613 = math.sqrt %612 : vector<8x128xf32>
      %614 = arith.maximumf %607, %367 : vector<8x128xf32>
      %615 = arith.maximumf %614, %372 : vector<8x128xf32>
      %cst_147 = arith.constant 0.000000e+00 : f32
      %616 = vector.broadcast %cst_147 : f32 to vector<8x128xf32>
      %617 = arith.minimumf %615, %616 : vector<8x128xf32>
      %618 = arith.addf %613, %617 : vector<8x128xf32>
      %619 = arith.minimumf %605, %618 : vector<8x128xf32>
      %620 = arith.minimumf %384, %619 : vector<8x128xf32>
      %cst_148 = arith.constant 0.000000e+00 : f32
      %621 = vector.broadcast %cst_148 : f32 to vector<8x128xf32>
      %622 = arith.subf %4, %621 : vector<8x128xf32>
      %cst_149 = arith.constant 4.500000e+00 : f32
      %623 = vector.broadcast %cst_149 : f32 to vector<8x128xf32>
      %624 = arith.subf %6, %623 : vector<8x128xf32>
      %625 = arith.mulf %622, %622 : vector<8x128xf32>
      %626 = arith.mulf %624, %624 : vector<8x128xf32>
      %627 = arith.addf %625, %626 : vector<8x128xf32>
      %628 = arith.mulf %14, %14 : vector<8x128xf32>
      %629 = arith.addf %627, %628 : vector<8x128xf32>
      %630 = math.sqrt %629 : vector<8x128xf32>
      %cst_150 = arith.constant 1.600000e+00 : f32
      %631 = vector.broadcast %cst_150 : f32 to vector<8x128xf32>
      %632 = arith.subf %630, %631 : vector<8x128xf32>
      %cst_151 = arith.constant 1.450000e+00 : f32
      %633 = vector.broadcast %cst_151 : f32 to vector<8x128xf32>
      %634 = arith.subf %633, %630 : vector<8x128xf32>
      %635 = math.absf %622 : vector<8x128xf32>
      %cst_152 = arith.constant 1.700000e+00 : f32
      %636 = vector.broadcast %cst_152 : f32 to vector<8x128xf32>
      %637 = arith.subf %636, %635 : vector<8x128xf32>
      %cst_153 = arith.constant 0.000000e+00 : f32
      %638 = vector.broadcast %cst_153 : f32 to vector<8x128xf32>
      %639 = arith.minimumf %637, %638 : vector<8x128xf32>
      %640 = arith.mulf %639, %639 : vector<8x128xf32>
      %641 = math.absf %624 : vector<8x128xf32>
      %cst_154 = arith.constant 1.700000e+00 : f32
      %642 = vector.broadcast %cst_154 : f32 to vector<8x128xf32>
      %643 = arith.subf %642, %641 : vector<8x128xf32>
      %cst_155 = arith.constant 0.000000e+00 : f32
      %644 = vector.broadcast %cst_155 : f32 to vector<8x128xf32>
      %645 = arith.minimumf %643, %644 : vector<8x128xf32>
      %646 = arith.mulf %645, %645 : vector<8x128xf32>
      %647 = arith.addf %640, %646 : vector<8x128xf32>
      %648 = arith.addf %647, %44 : vector<8x128xf32>
      %649 = math.sqrt %648 : vector<8x128xf32>
      %650 = arith.minimumf %637, %643 : vector<8x128xf32>
      %651 = arith.minimumf %650, %41 : vector<8x128xf32>
      %cst_156 = arith.constant 0.000000e+00 : f32
      %652 = vector.broadcast %cst_156 : f32 to vector<8x128xf32>
      %653 = arith.maximumf %651, %652 : vector<8x128xf32>
      %654 = arith.subf %653, %649 : vector<8x128xf32>
      %655 = arith.addf %634, %654 : vector<8x128xf32>
      %656 = arith.addf %640, %646 : vector<8x128xf32>
      %657 = arith.addf %656, %61 : vector<8x128xf32>
      %658 = math.sqrt %657 : vector<8x128xf32>
      %659 = arith.minimumf %637, %643 : vector<8x128xf32>
      %660 = arith.minimumf %659, %58 : vector<8x128xf32>
      %cst_157 = arith.constant 0.000000e+00 : f32
      %661 = vector.broadcast %cst_157 : f32 to vector<8x128xf32>
      %662 = arith.maximumf %660, %661 : vector<8x128xf32>
      %663 = arith.subf %662, %658 : vector<8x128xf32>
      %664 = arith.maximumf %655, %663 : vector<8x128xf32>
      %665 = arith.maximumf %632, %664 : vector<8x128xf32>
      %cst_158 = arith.constant 1.200000e+00 : f32
      %666 = vector.broadcast %cst_158 : f32 to vector<8x128xf32>
      %667 = arith.subf %635, %666 : vector<8x128xf32>
      %cst_159 = arith.constant 0.000000e+00 : f32
      %668 = vector.broadcast %cst_159 : f32 to vector<8x128xf32>
      %669 = arith.maximumf %667, %668 : vector<8x128xf32>
      %670 = arith.mulf %669, %669 : vector<8x128xf32>
      %cst_160 = arith.constant 1.200000e+00 : f32
      %671 = vector.broadcast %cst_160 : f32 to vector<8x128xf32>
      %672 = arith.subf %641, %671 : vector<8x128xf32>
      %cst_161 = arith.constant 0.000000e+00 : f32
      %673 = vector.broadcast %cst_161 : f32 to vector<8x128xf32>
      %674 = arith.maximumf %672, %673 : vector<8x128xf32>
      %675 = arith.mulf %674, %674 : vector<8x128xf32>
      %676 = arith.addf %670, %675 : vector<8x128xf32>
      %677 = arith.addf %676, %87 : vector<8x128xf32>
      %678 = math.sqrt %677 : vector<8x128xf32>
      %679 = arith.maximumf %667, %672 : vector<8x128xf32>
      %680 = arith.maximumf %679, %84 : vector<8x128xf32>
      %cst_162 = arith.constant 0.000000e+00 : f32
      %681 = vector.broadcast %cst_162 : f32 to vector<8x128xf32>
      %682 = arith.minimumf %680, %681 : vector<8x128xf32>
      %683 = arith.addf %678, %682 : vector<8x128xf32>
      %cst_163 = arith.constant 1.100000e+00 : f32
      %684 = vector.broadcast %cst_163 : f32 to vector<8x128xf32>
      %685 = arith.subf %684, %635 : vector<8x128xf32>
      %cst_164 = arith.constant 0.000000e+00 : f32
      %686 = vector.broadcast %cst_164 : f32 to vector<8x128xf32>
      %687 = arith.minimumf %685, %686 : vector<8x128xf32>
      %688 = arith.mulf %687, %687 : vector<8x128xf32>
      %cst_165 = arith.constant 1.100000e+00 : f32
      %689 = vector.broadcast %cst_165 : f32 to vector<8x128xf32>
      %690 = arith.subf %689, %641 : vector<8x128xf32>
      %cst_166 = arith.constant 0.000000e+00 : f32
      %691 = vector.broadcast %cst_166 : f32 to vector<8x128xf32>
      %692 = arith.minimumf %690, %691 : vector<8x128xf32>
      %693 = arith.mulf %692, %692 : vector<8x128xf32>
      %694 = arith.addf %688, %693 : vector<8x128xf32>
      %695 = arith.addf %694, %110 : vector<8x128xf32>
      %696 = math.sqrt %695 : vector<8x128xf32>
      %697 = arith.minimumf %685, %690 : vector<8x128xf32>
      %698 = arith.minimumf %697, %107 : vector<8x128xf32>
      %cst_167 = arith.constant 0.000000e+00 : f32
      %699 = vector.broadcast %cst_167 : f32 to vector<8x128xf32>
      %700 = arith.maximumf %698, %699 : vector<8x128xf32>
      %701 = arith.subf %700, %696 : vector<8x128xf32>
      %702 = arith.maximumf %683, %701 : vector<8x128xf32>
      %cst_168 = arith.constant 1.500000e+00 : f32
      %703 = vector.broadcast %cst_168 : f32 to vector<8x128xf32>
      %704 = arith.subf %4, %703 : vector<8x128xf32>
      %705 = math.absf %704 : vector<8x128xf32>
      %cst_169 = arith.constant 6.000000e-01 : f32
      %706 = vector.broadcast %cst_169 : f32 to vector<8x128xf32>
      %707 = arith.subf %706, %705 : vector<8x128xf32>
      %cst_170 = arith.constant 0.000000e+00 : f32
      %708 = vector.broadcast %cst_170 : f32 to vector<8x128xf32>
      %709 = arith.minimumf %707, %708 : vector<8x128xf32>
      %710 = arith.mulf %709, %709 : vector<8x128xf32>
      %cst_171 = arith.constant 6.000000e-01 : f32
      %711 = vector.broadcast %cst_171 : f32 to vector<8x128xf32>
      %712 = arith.subf %711, %641 : vector<8x128xf32>
      %cst_172 = arith.constant 0.000000e+00 : f32
      %713 = vector.broadcast %cst_172 : f32 to vector<8x128xf32>
      %714 = arith.minimumf %712, %713 : vector<8x128xf32>
      %715 = arith.mulf %714, %714 : vector<8x128xf32>
      %716 = arith.addf %710, %715 : vector<8x128xf32>
      %717 = arith.addf %716, %137 : vector<8x128xf32>
      %718 = math.sqrt %717 : vector<8x128xf32>
      %719 = arith.minimumf %707, %712 : vector<8x128xf32>
      %720 = arith.minimumf %719, %134 : vector<8x128xf32>
      %cst_173 = arith.constant 0.000000e+00 : f32
      %721 = vector.broadcast %cst_173 : f32 to vector<8x128xf32>
      %722 = arith.maximumf %720, %721 : vector<8x128xf32>
      %723 = arith.subf %722, %718 : vector<8x128xf32>
      %724 = arith.maximumf %702, %723 : vector<8x128xf32>
      %cst_174 = arith.constant -1.500000e+00 : f32
      %725 = vector.broadcast %cst_174 : f32 to vector<8x128xf32>
      %726 = arith.subf %4, %725 : vector<8x128xf32>
      %727 = math.absf %726 : vector<8x128xf32>
      %cst_175 = arith.constant 6.000000e-01 : f32
      %728 = vector.broadcast %cst_175 : f32 to vector<8x128xf32>
      %729 = arith.subf %728, %727 : vector<8x128xf32>
      %cst_176 = arith.constant 0.000000e+00 : f32
      %730 = vector.broadcast %cst_176 : f32 to vector<8x128xf32>
      %731 = arith.minimumf %729, %730 : vector<8x128xf32>
      %732 = arith.mulf %731, %731 : vector<8x128xf32>
      %733 = arith.addf %732, %715 : vector<8x128xf32>
      %734 = arith.addf %733, %137 : vector<8x128xf32>
      %735 = math.sqrt %734 : vector<8x128xf32>
      %736 = arith.minimumf %729, %712 : vector<8x128xf32>
      %737 = arith.minimumf %736, %134 : vector<8x128xf32>
      %cst_177 = arith.constant 0.000000e+00 : f32
      %738 = vector.broadcast %cst_177 : f32 to vector<8x128xf32>
      %739 = arith.maximumf %737, %738 : vector<8x128xf32>
      %740 = arith.subf %739, %735 : vector<8x128xf32>
      %741 = arith.maximumf %724, %740 : vector<8x128xf32>
      %cst_178 = arith.constant 6.000000e-01 : f32
      %742 = vector.broadcast %cst_178 : f32 to vector<8x128xf32>
      %743 = arith.subf %742, %635 : vector<8x128xf32>
      %cst_179 = arith.constant 0.000000e+00 : f32
      %744 = vector.broadcast %cst_179 : f32 to vector<8x128xf32>
      %745 = arith.minimumf %743, %744 : vector<8x128xf32>
      %746 = arith.mulf %745, %745 : vector<8x128xf32>
      %cst_180 = arith.constant 6.000000e+00 : f32
      %747 = vector.broadcast %cst_180 : f32 to vector<8x128xf32>
      %748 = arith.subf %6, %747 : vector<8x128xf32>
      %749 = math.absf %748 : vector<8x128xf32>
      %cst_181 = arith.constant 6.000000e-01 : f32
      %750 = vector.broadcast %cst_181 : f32 to vector<8x128xf32>
      %751 = arith.subf %750, %749 : vector<8x128xf32>
      %cst_182 = arith.constant 0.000000e+00 : f32
      %752 = vector.broadcast %cst_182 : f32 to vector<8x128xf32>
      %753 = arith.minimumf %751, %752 : vector<8x128xf32>
      %754 = arith.mulf %753, %753 : vector<8x128xf32>
      %755 = arith.addf %746, %754 : vector<8x128xf32>
      %756 = arith.addf %755, %137 : vector<8x128xf32>
      %757 = math.sqrt %756 : vector<8x128xf32>
      %758 = arith.minimumf %743, %751 : vector<8x128xf32>
      %759 = arith.minimumf %758, %134 : vector<8x128xf32>
      %cst_183 = arith.constant 0.000000e+00 : f32
      %760 = vector.broadcast %cst_183 : f32 to vector<8x128xf32>
      %761 = arith.maximumf %759, %760 : vector<8x128xf32>
      %762 = arith.subf %761, %757 : vector<8x128xf32>
      %763 = arith.maximumf %741, %762 : vector<8x128xf32>
      %cst_184 = arith.constant 3.000000e+00 : f32
      %764 = vector.broadcast %cst_184 : f32 to vector<8x128xf32>
      %765 = arith.subf %6, %764 : vector<8x128xf32>
      %766 = math.absf %765 : vector<8x128xf32>
      %cst_185 = arith.constant 6.000000e-01 : f32
      %767 = vector.broadcast %cst_185 : f32 to vector<8x128xf32>
      %768 = arith.subf %767, %766 : vector<8x128xf32>
      %cst_186 = arith.constant 0.000000e+00 : f32
      %769 = vector.broadcast %cst_186 : f32 to vector<8x128xf32>
      %770 = arith.minimumf %768, %769 : vector<8x128xf32>
      %771 = arith.mulf %770, %770 : vector<8x128xf32>
      %772 = arith.addf %746, %771 : vector<8x128xf32>
      %773 = arith.addf %772, %137 : vector<8x128xf32>
      %774 = math.sqrt %773 : vector<8x128xf32>
      %775 = arith.minimumf %743, %768 : vector<8x128xf32>
      %776 = arith.minimumf %775, %134 : vector<8x128xf32>
      %cst_187 = arith.constant 0.000000e+00 : f32
      %777 = vector.broadcast %cst_187 : f32 to vector<8x128xf32>
      %778 = arith.maximumf %776, %777 : vector<8x128xf32>
      %779 = arith.subf %778, %774 : vector<8x128xf32>
      %780 = arith.maximumf %763, %779 : vector<8x128xf32>
      %781 = arith.addf %746, %715 : vector<8x128xf32>
      %782 = arith.addf %781, %210 : vector<8x128xf32>
      %783 = math.sqrt %782 : vector<8x128xf32>
      %784 = arith.minimumf %743, %712 : vector<8x128xf32>
      %785 = arith.minimumf %784, %207 : vector<8x128xf32>
      %cst_188 = arith.constant 0.000000e+00 : f32
      %786 = vector.broadcast %cst_188 : f32 to vector<8x128xf32>
      %787 = arith.maximumf %785, %786 : vector<8x128xf32>
      %788 = arith.subf %787, %783 : vector<8x128xf32>
      %789 = arith.maximumf %780, %788 : vector<8x128xf32>
      %790 = arith.addf %746, %715 : vector<8x128xf32>
      %791 = arith.addf %790, %227 : vector<8x128xf32>
      %792 = math.sqrt %791 : vector<8x128xf32>
      %793 = arith.minimumf %743, %712 : vector<8x128xf32>
      %794 = arith.minimumf %793, %224 : vector<8x128xf32>
      %cst_189 = arith.constant 0.000000e+00 : f32
      %795 = vector.broadcast %cst_189 : f32 to vector<8x128xf32>
      %796 = arith.maximumf %794, %795 : vector<8x128xf32>
      %797 = arith.subf %796, %792 : vector<8x128xf32>
      %798 = arith.maximumf %789, %797 : vector<8x128xf32>
      %799 = arith.minimumf %665, %798 : vector<8x128xf32>
      %cst_190 = arith.constant 1.000000e+00 : f32
      %800 = vector.broadcast %cst_190 : f32 to vector<8x128xf32>
      %801 = arith.subf %630, %800 : vector<8x128xf32>
      %802 = arith.minimumf %799, %801 : vector<8x128xf32>
      %cst_191 = arith.constant 0.899999976 : f32
      %803 = vector.broadcast %cst_191 : f32 to vector<8x128xf32>
      %804 = arith.subf %803, %630 : vector<8x128xf32>
      %805 = arith.maximumf %802, %804 : vector<8x128xf32>
      %cst_192 = arith.constant 1.000000e+00 : f32
      %806 = vector.broadcast %cst_192 : f32 to vector<8x128xf32>
      %807 = arith.subf %4, %806 : vector<8x128xf32>
      %808 = math.absf %807 : vector<8x128xf32>
      %cst_193 = arith.constant 4.000000e-01 : f32
      %809 = vector.broadcast %cst_193 : f32 to vector<8x128xf32>
      %810 = arith.subf %809, %808 : vector<8x128xf32>
      %cst_194 = arith.constant 0.000000e+00 : f32
      %811 = vector.broadcast %cst_194 : f32 to vector<8x128xf32>
      %812 = arith.minimumf %810, %811 : vector<8x128xf32>
      %813 = arith.mulf %812, %812 : vector<8x128xf32>
      %cst_195 = arith.constant 4.000000e-01 : f32
      %814 = vector.broadcast %cst_195 : f32 to vector<8x128xf32>
      %815 = arith.subf %814, %641 : vector<8x128xf32>
      %cst_196 = arith.constant 0.000000e+00 : f32
      %816 = vector.broadcast %cst_196 : f32 to vector<8x128xf32>
      %817 = arith.minimumf %815, %816 : vector<8x128xf32>
      %818 = arith.mulf %817, %817 : vector<8x128xf32>
      %819 = arith.addf %813, %818 : vector<8x128xf32>
      %820 = arith.addf %819, %261 : vector<8x128xf32>
      %821 = math.sqrt %820 : vector<8x128xf32>
      %822 = arith.minimumf %810, %815 : vector<8x128xf32>
      %823 = arith.minimumf %822, %258 : vector<8x128xf32>
      %cst_197 = arith.constant 0.000000e+00 : f32
      %824 = vector.broadcast %cst_197 : f32 to vector<8x128xf32>
      %825 = arith.maximumf %823, %824 : vector<8x128xf32>
      %826 = arith.subf %825, %821 : vector<8x128xf32>
      %827 = arith.maximumf %805, %826 : vector<8x128xf32>
      %cst_198 = arith.constant -1.000000e+00 : f32
      %828 = vector.broadcast %cst_198 : f32 to vector<8x128xf32>
      %829 = arith.subf %4, %828 : vector<8x128xf32>
      %830 = math.absf %829 : vector<8x128xf32>
      %cst_199 = arith.constant 4.000000e-01 : f32
      %831 = vector.broadcast %cst_199 : f32 to vector<8x128xf32>
      %832 = arith.subf %831, %830 : vector<8x128xf32>
      %cst_200 = arith.constant 0.000000e+00 : f32
      %833 = vector.broadcast %cst_200 : f32 to vector<8x128xf32>
      %834 = arith.minimumf %832, %833 : vector<8x128xf32>
      %835 = arith.mulf %834, %834 : vector<8x128xf32>
      %836 = arith.addf %835, %818 : vector<8x128xf32>
      %837 = arith.addf %836, %261 : vector<8x128xf32>
      %838 = math.sqrt %837 : vector<8x128xf32>
      %839 = arith.minimumf %832, %815 : vector<8x128xf32>
      %840 = arith.minimumf %839, %258 : vector<8x128xf32>
      %cst_201 = arith.constant 0.000000e+00 : f32
      %841 = vector.broadcast %cst_201 : f32 to vector<8x128xf32>
      %842 = arith.maximumf %840, %841 : vector<8x128xf32>
      %843 = arith.subf %842, %838 : vector<8x128xf32>
      %844 = arith.maximumf %827, %843 : vector<8x128xf32>
      %cst_202 = arith.constant 4.000000e-01 : f32
      %845 = vector.broadcast %cst_202 : f32 to vector<8x128xf32>
      %846 = arith.subf %845, %635 : vector<8x128xf32>
      %cst_203 = arith.constant 0.000000e+00 : f32
      %847 = vector.broadcast %cst_203 : f32 to vector<8x128xf32>
      %848 = arith.minimumf %846, %847 : vector<8x128xf32>
      %849 = arith.mulf %848, %848 : vector<8x128xf32>
      %cst_204 = arith.constant 5.500000e+00 : f32
      %850 = vector.broadcast %cst_204 : f32 to vector<8x128xf32>
      %851 = arith.subf %6, %850 : vector<8x128xf32>
      %852 = math.absf %851 : vector<8x128xf32>
      %cst_205 = arith.constant 4.000000e-01 : f32
      %853 = vector.broadcast %cst_205 : f32 to vector<8x128xf32>
      %854 = arith.subf %853, %852 : vector<8x128xf32>
      %cst_206 = arith.constant 0.000000e+00 : f32
      %855 = vector.broadcast %cst_206 : f32 to vector<8x128xf32>
      %856 = arith.minimumf %854, %855 : vector<8x128xf32>
      %857 = arith.mulf %856, %856 : vector<8x128xf32>
      %858 = arith.addf %849, %857 : vector<8x128xf32>
      %859 = arith.addf %858, %261 : vector<8x128xf32>
      %860 = math.sqrt %859 : vector<8x128xf32>
      %861 = arith.minimumf %846, %854 : vector<8x128xf32>
      %862 = arith.minimumf %861, %258 : vector<8x128xf32>
      %cst_207 = arith.constant 0.000000e+00 : f32
      %863 = vector.broadcast %cst_207 : f32 to vector<8x128xf32>
      %864 = arith.maximumf %862, %863 : vector<8x128xf32>
      %865 = arith.subf %864, %860 : vector<8x128xf32>
      %866 = arith.maximumf %844, %865 : vector<8x128xf32>
      %cst_208 = arith.constant 3.500000e+00 : f32
      %867 = vector.broadcast %cst_208 : f32 to vector<8x128xf32>
      %868 = arith.subf %6, %867 : vector<8x128xf32>
      %869 = math.absf %868 : vector<8x128xf32>
      %cst_209 = arith.constant 4.000000e-01 : f32
      %870 = vector.broadcast %cst_209 : f32 to vector<8x128xf32>
      %871 = arith.subf %870, %869 : vector<8x128xf32>
      %cst_210 = arith.constant 0.000000e+00 : f32
      %872 = vector.broadcast %cst_210 : f32 to vector<8x128xf32>
      %873 = arith.minimumf %871, %872 : vector<8x128xf32>
      %874 = arith.mulf %873, %873 : vector<8x128xf32>
      %875 = arith.addf %849, %874 : vector<8x128xf32>
      %876 = arith.addf %875, %261 : vector<8x128xf32>
      %877 = math.sqrt %876 : vector<8x128xf32>
      %878 = arith.minimumf %846, %871 : vector<8x128xf32>
      %879 = arith.minimumf %878, %258 : vector<8x128xf32>
      %cst_211 = arith.constant 0.000000e+00 : f32
      %880 = vector.broadcast %cst_211 : f32 to vector<8x128xf32>
      %881 = arith.maximumf %879, %880 : vector<8x128xf32>
      %882 = arith.subf %881, %877 : vector<8x128xf32>
      %883 = arith.maximumf %866, %882 : vector<8x128xf32>
      %884 = arith.addf %849, %818 : vector<8x128xf32>
      %885 = arith.addf %884, %334 : vector<8x128xf32>
      %886 = math.sqrt %885 : vector<8x128xf32>
      %887 = arith.minimumf %846, %815 : vector<8x128xf32>
      %888 = arith.minimumf %887, %331 : vector<8x128xf32>
      %cst_212 = arith.constant 0.000000e+00 : f32
      %889 = vector.broadcast %cst_212 : f32 to vector<8x128xf32>
      %890 = arith.maximumf %888, %889 : vector<8x128xf32>
      %891 = arith.subf %890, %886 : vector<8x128xf32>
      %892 = arith.maximumf %883, %891 : vector<8x128xf32>
      %893 = arith.addf %849, %818 : vector<8x128xf32>
      %894 = arith.addf %893, %351 : vector<8x128xf32>
      %895 = math.sqrt %894 : vector<8x128xf32>
      %896 = arith.minimumf %846, %815 : vector<8x128xf32>
      %897 = arith.minimumf %896, %348 : vector<8x128xf32>
      %cst_213 = arith.constant 0.000000e+00 : f32
      %898 = vector.broadcast %cst_213 : f32 to vector<8x128xf32>
      %899 = arith.maximumf %897, %898 : vector<8x128xf32>
      %900 = arith.subf %899, %895 : vector<8x128xf32>
      %901 = arith.maximumf %892, %900 : vector<8x128xf32>
      %cst_214 = arith.constant 8.000000e-01 : f32
      %902 = vector.broadcast %cst_214 : f32 to vector<8x128xf32>
      %903 = arith.subf %635, %902 : vector<8x128xf32>
      %cst_215 = arith.constant 0.000000e+00 : f32
      %904 = vector.broadcast %cst_215 : f32 to vector<8x128xf32>
      %905 = arith.maximumf %903, %904 : vector<8x128xf32>
      %906 = arith.mulf %905, %905 : vector<8x128xf32>
      %cst_216 = arith.constant 8.000000e-01 : f32
      %907 = vector.broadcast %cst_216 : f32 to vector<8x128xf32>
      %908 = arith.subf %641, %907 : vector<8x128xf32>
      %cst_217 = arith.constant 0.000000e+00 : f32
      %909 = vector.broadcast %cst_217 : f32 to vector<8x128xf32>
      %910 = arith.maximumf %908, %909 : vector<8x128xf32>
      %911 = arith.mulf %910, %910 : vector<8x128xf32>
      %912 = arith.addf %906, %911 : vector<8x128xf32>
      %913 = arith.addf %912, %375 : vector<8x128xf32>
      %914 = math.sqrt %913 : vector<8x128xf32>
      %915 = arith.maximumf %903, %908 : vector<8x128xf32>
      %916 = arith.maximumf %915, %372 : vector<8x128xf32>
      %cst_218 = arith.constant 0.000000e+00 : f32
      %917 = vector.broadcast %cst_218 : f32 to vector<8x128xf32>
      %918 = arith.minimumf %916, %917 : vector<8x128xf32>
      %919 = arith.addf %914, %918 : vector<8x128xf32>
      %920 = arith.minimumf %901, %919 : vector<8x128xf32>
      %921 = arith.minimumf %620, %920 : vector<8x128xf32>
      %cst_219 = arith.constant -4.500000e+00 : f32
      %922 = vector.broadcast %cst_219 : f32 to vector<8x128xf32>
      %923 = arith.subf %6, %922 : vector<8x128xf32>
      %924 = arith.mulf %622, %622 : vector<8x128xf32>
      %925 = arith.mulf %923, %923 : vector<8x128xf32>
      %926 = arith.addf %924, %925 : vector<8x128xf32>
      %927 = arith.mulf %14, %14 : vector<8x128xf32>
      %928 = arith.addf %926, %927 : vector<8x128xf32>
      %929 = math.sqrt %928 : vector<8x128xf32>
      %cst_220 = arith.constant 1.600000e+00 : f32
      %930 = vector.broadcast %cst_220 : f32 to vector<8x128xf32>
      %931 = arith.subf %929, %930 : vector<8x128xf32>
      %cst_221 = arith.constant 1.450000e+00 : f32
      %932 = vector.broadcast %cst_221 : f32 to vector<8x128xf32>
      %933 = arith.subf %932, %929 : vector<8x128xf32>
      %934 = math.absf %923 : vector<8x128xf32>
      %cst_222 = arith.constant 1.700000e+00 : f32
      %935 = vector.broadcast %cst_222 : f32 to vector<8x128xf32>
      %936 = arith.subf %935, %934 : vector<8x128xf32>
      %cst_223 = arith.constant 0.000000e+00 : f32
      %937 = vector.broadcast %cst_223 : f32 to vector<8x128xf32>
      %938 = arith.minimumf %936, %937 : vector<8x128xf32>
      %939 = arith.mulf %938, %938 : vector<8x128xf32>
      %940 = arith.addf %640, %939 : vector<8x128xf32>
      %941 = arith.addf %940, %44 : vector<8x128xf32>
      %942 = math.sqrt %941 : vector<8x128xf32>
      %943 = arith.minimumf %637, %936 : vector<8x128xf32>
      %944 = arith.minimumf %943, %41 : vector<8x128xf32>
      %cst_224 = arith.constant 0.000000e+00 : f32
      %945 = vector.broadcast %cst_224 : f32 to vector<8x128xf32>
      %946 = arith.maximumf %944, %945 : vector<8x128xf32>
      %947 = arith.subf %946, %942 : vector<8x128xf32>
      %948 = arith.addf %933, %947 : vector<8x128xf32>
      %949 = arith.addf %640, %939 : vector<8x128xf32>
      %950 = arith.addf %949, %61 : vector<8x128xf32>
      %951 = math.sqrt %950 : vector<8x128xf32>
      %952 = arith.minimumf %637, %936 : vector<8x128xf32>
      %953 = arith.minimumf %952, %58 : vector<8x128xf32>
      %cst_225 = arith.constant 0.000000e+00 : f32
      %954 = vector.broadcast %cst_225 : f32 to vector<8x128xf32>
      %955 = arith.maximumf %953, %954 : vector<8x128xf32>
      %956 = arith.subf %955, %951 : vector<8x128xf32>
      %957 = arith.maximumf %948, %956 : vector<8x128xf32>
      %958 = arith.maximumf %931, %957 : vector<8x128xf32>
      %cst_226 = arith.constant 1.200000e+00 : f32
      %959 = vector.broadcast %cst_226 : f32 to vector<8x128xf32>
      %960 = arith.subf %934, %959 : vector<8x128xf32>
      %cst_227 = arith.constant 0.000000e+00 : f32
      %961 = vector.broadcast %cst_227 : f32 to vector<8x128xf32>
      %962 = arith.maximumf %960, %961 : vector<8x128xf32>
      %963 = arith.mulf %962, %962 : vector<8x128xf32>
      %964 = arith.addf %670, %963 : vector<8x128xf32>
      %965 = arith.addf %964, %87 : vector<8x128xf32>
      %966 = math.sqrt %965 : vector<8x128xf32>
      %967 = arith.maximumf %667, %960 : vector<8x128xf32>
      %968 = arith.maximumf %967, %84 : vector<8x128xf32>
      %cst_228 = arith.constant 0.000000e+00 : f32
      %969 = vector.broadcast %cst_228 : f32 to vector<8x128xf32>
      %970 = arith.minimumf %968, %969 : vector<8x128xf32>
      %971 = arith.addf %966, %970 : vector<8x128xf32>
      %cst_229 = arith.constant 1.100000e+00 : f32
      %972 = vector.broadcast %cst_229 : f32 to vector<8x128xf32>
      %973 = arith.subf %972, %934 : vector<8x128xf32>
      %cst_230 = arith.constant 0.000000e+00 : f32
      %974 = vector.broadcast %cst_230 : f32 to vector<8x128xf32>
      %975 = arith.minimumf %973, %974 : vector<8x128xf32>
      %976 = arith.mulf %975, %975 : vector<8x128xf32>
      %977 = arith.addf %688, %976 : vector<8x128xf32>
      %978 = arith.addf %977, %110 : vector<8x128xf32>
      %979 = math.sqrt %978 : vector<8x128xf32>
      %980 = arith.minimumf %685, %973 : vector<8x128xf32>
      %981 = arith.minimumf %980, %107 : vector<8x128xf32>
      %cst_231 = arith.constant 0.000000e+00 : f32
      %982 = vector.broadcast %cst_231 : f32 to vector<8x128xf32>
      %983 = arith.maximumf %981, %982 : vector<8x128xf32>
      %984 = arith.subf %983, %979 : vector<8x128xf32>
      %985 = arith.maximumf %971, %984 : vector<8x128xf32>
      %cst_232 = arith.constant 6.000000e-01 : f32
      %986 = vector.broadcast %cst_232 : f32 to vector<8x128xf32>
      %987 = arith.subf %986, %934 : vector<8x128xf32>
      %cst_233 = arith.constant 0.000000e+00 : f32
      %988 = vector.broadcast %cst_233 : f32 to vector<8x128xf32>
      %989 = arith.minimumf %987, %988 : vector<8x128xf32>
      %990 = arith.mulf %989, %989 : vector<8x128xf32>
      %991 = arith.addf %710, %990 : vector<8x128xf32>
      %992 = arith.addf %991, %137 : vector<8x128xf32>
      %993 = math.sqrt %992 : vector<8x128xf32>
      %994 = arith.minimumf %707, %987 : vector<8x128xf32>
      %995 = arith.minimumf %994, %134 : vector<8x128xf32>
      %cst_234 = arith.constant 0.000000e+00 : f32
      %996 = vector.broadcast %cst_234 : f32 to vector<8x128xf32>
      %997 = arith.maximumf %995, %996 : vector<8x128xf32>
      %998 = arith.subf %997, %993 : vector<8x128xf32>
      %999 = arith.maximumf %985, %998 : vector<8x128xf32>
      %1000 = arith.addf %732, %990 : vector<8x128xf32>
      %1001 = arith.addf %1000, %137 : vector<8x128xf32>
      %1002 = math.sqrt %1001 : vector<8x128xf32>
      %1003 = arith.minimumf %729, %987 : vector<8x128xf32>
      %1004 = arith.minimumf %1003, %134 : vector<8x128xf32>
      %cst_235 = arith.constant 0.000000e+00 : f32
      %1005 = vector.broadcast %cst_235 : f32 to vector<8x128xf32>
      %1006 = arith.maximumf %1004, %1005 : vector<8x128xf32>
      %1007 = arith.subf %1006, %1002 : vector<8x128xf32>
      %1008 = arith.maximumf %999, %1007 : vector<8x128xf32>
      %cst_236 = arith.constant -3.000000e+00 : f32
      %1009 = vector.broadcast %cst_236 : f32 to vector<8x128xf32>
      %1010 = arith.subf %6, %1009 : vector<8x128xf32>
      %1011 = math.absf %1010 : vector<8x128xf32>
      %cst_237 = arith.constant 6.000000e-01 : f32
      %1012 = vector.broadcast %cst_237 : f32 to vector<8x128xf32>
      %1013 = arith.subf %1012, %1011 : vector<8x128xf32>
      %cst_238 = arith.constant 0.000000e+00 : f32
      %1014 = vector.broadcast %cst_238 : f32 to vector<8x128xf32>
      %1015 = arith.minimumf %1013, %1014 : vector<8x128xf32>
      %1016 = arith.mulf %1015, %1015 : vector<8x128xf32>
      %1017 = arith.addf %746, %1016 : vector<8x128xf32>
      %1018 = arith.addf %1017, %137 : vector<8x128xf32>
      %1019 = math.sqrt %1018 : vector<8x128xf32>
      %1020 = arith.minimumf %743, %1013 : vector<8x128xf32>
      %1021 = arith.minimumf %1020, %134 : vector<8x128xf32>
      %cst_239 = arith.constant 0.000000e+00 : f32
      %1022 = vector.broadcast %cst_239 : f32 to vector<8x128xf32>
      %1023 = arith.maximumf %1021, %1022 : vector<8x128xf32>
      %1024 = arith.subf %1023, %1019 : vector<8x128xf32>
      %1025 = arith.maximumf %1008, %1024 : vector<8x128xf32>
      %cst_240 = arith.constant -6.000000e+00 : f32
      %1026 = vector.broadcast %cst_240 : f32 to vector<8x128xf32>
      %1027 = arith.subf %6, %1026 : vector<8x128xf32>
      %1028 = math.absf %1027 : vector<8x128xf32>
      %cst_241 = arith.constant 6.000000e-01 : f32
      %1029 = vector.broadcast %cst_241 : f32 to vector<8x128xf32>
      %1030 = arith.subf %1029, %1028 : vector<8x128xf32>
      %cst_242 = arith.constant 0.000000e+00 : f32
      %1031 = vector.broadcast %cst_242 : f32 to vector<8x128xf32>
      %1032 = arith.minimumf %1030, %1031 : vector<8x128xf32>
      %1033 = arith.mulf %1032, %1032 : vector<8x128xf32>
      %1034 = arith.addf %746, %1033 : vector<8x128xf32>
      %1035 = arith.addf %1034, %137 : vector<8x128xf32>
      %1036 = math.sqrt %1035 : vector<8x128xf32>
      %1037 = arith.minimumf %743, %1030 : vector<8x128xf32>
      %1038 = arith.minimumf %1037, %134 : vector<8x128xf32>
      %cst_243 = arith.constant 0.000000e+00 : f32
      %1039 = vector.broadcast %cst_243 : f32 to vector<8x128xf32>
      %1040 = arith.maximumf %1038, %1039 : vector<8x128xf32>
      %1041 = arith.subf %1040, %1036 : vector<8x128xf32>
      %1042 = arith.maximumf %1025, %1041 : vector<8x128xf32>
      %1043 = arith.addf %746, %990 : vector<8x128xf32>
      %1044 = arith.addf %1043, %210 : vector<8x128xf32>
      %1045 = math.sqrt %1044 : vector<8x128xf32>
      %1046 = arith.minimumf %743, %987 : vector<8x128xf32>
      %1047 = arith.minimumf %1046, %207 : vector<8x128xf32>
      %cst_244 = arith.constant 0.000000e+00 : f32
      %1048 = vector.broadcast %cst_244 : f32 to vector<8x128xf32>
      %1049 = arith.maximumf %1047, %1048 : vector<8x128xf32>
      %1050 = arith.subf %1049, %1045 : vector<8x128xf32>
      %1051 = arith.maximumf %1042, %1050 : vector<8x128xf32>
      %1052 = arith.addf %746, %990 : vector<8x128xf32>
      %1053 = arith.addf %1052, %227 : vector<8x128xf32>
      %1054 = math.sqrt %1053 : vector<8x128xf32>
      %1055 = arith.minimumf %743, %987 : vector<8x128xf32>
      %1056 = arith.minimumf %1055, %224 : vector<8x128xf32>
      %cst_245 = arith.constant 0.000000e+00 : f32
      %1057 = vector.broadcast %cst_245 : f32 to vector<8x128xf32>
      %1058 = arith.maximumf %1056, %1057 : vector<8x128xf32>
      %1059 = arith.subf %1058, %1054 : vector<8x128xf32>
      %1060 = arith.maximumf %1051, %1059 : vector<8x128xf32>
      %1061 = arith.minimumf %958, %1060 : vector<8x128xf32>
      %cst_246 = arith.constant 1.000000e+00 : f32
      %1062 = vector.broadcast %cst_246 : f32 to vector<8x128xf32>
      %1063 = arith.subf %929, %1062 : vector<8x128xf32>
      %1064 = arith.minimumf %1061, %1063 : vector<8x128xf32>
      %cst_247 = arith.constant 0.899999976 : f32
      %1065 = vector.broadcast %cst_247 : f32 to vector<8x128xf32>
      %1066 = arith.subf %1065, %929 : vector<8x128xf32>
      %1067 = arith.maximumf %1064, %1066 : vector<8x128xf32>
      %cst_248 = arith.constant 4.000000e-01 : f32
      %1068 = vector.broadcast %cst_248 : f32 to vector<8x128xf32>
      %1069 = arith.subf %1068, %934 : vector<8x128xf32>
      %cst_249 = arith.constant 0.000000e+00 : f32
      %1070 = vector.broadcast %cst_249 : f32 to vector<8x128xf32>
      %1071 = arith.minimumf %1069, %1070 : vector<8x128xf32>
      %1072 = arith.mulf %1071, %1071 : vector<8x128xf32>
      %1073 = arith.addf %813, %1072 : vector<8x128xf32>
      %1074 = arith.addf %1073, %261 : vector<8x128xf32>
      %1075 = math.sqrt %1074 : vector<8x128xf32>
      %1076 = arith.minimumf %810, %1069 : vector<8x128xf32>
      %1077 = arith.minimumf %1076, %258 : vector<8x128xf32>
      %cst_250 = arith.constant 0.000000e+00 : f32
      %1078 = vector.broadcast %cst_250 : f32 to vector<8x128xf32>
      %1079 = arith.maximumf %1077, %1078 : vector<8x128xf32>
      %1080 = arith.subf %1079, %1075 : vector<8x128xf32>
      %1081 = arith.maximumf %1067, %1080 : vector<8x128xf32>
      %1082 = arith.addf %835, %1072 : vector<8x128xf32>
      %1083 = arith.addf %1082, %261 : vector<8x128xf32>
      %1084 = math.sqrt %1083 : vector<8x128xf32>
      %1085 = arith.minimumf %832, %1069 : vector<8x128xf32>
      %1086 = arith.minimumf %1085, %258 : vector<8x128xf32>
      %cst_251 = arith.constant 0.000000e+00 : f32
      %1087 = vector.broadcast %cst_251 : f32 to vector<8x128xf32>
      %1088 = arith.maximumf %1086, %1087 : vector<8x128xf32>
      %1089 = arith.subf %1088, %1084 : vector<8x128xf32>
      %1090 = arith.maximumf %1081, %1089 : vector<8x128xf32>
      %cst_252 = arith.constant -3.500000e+00 : f32
      %1091 = vector.broadcast %cst_252 : f32 to vector<8x128xf32>
      %1092 = arith.subf %6, %1091 : vector<8x128xf32>
      %1093 = math.absf %1092 : vector<8x128xf32>
      %cst_253 = arith.constant 4.000000e-01 : f32
      %1094 = vector.broadcast %cst_253 : f32 to vector<8x128xf32>
      %1095 = arith.subf %1094, %1093 : vector<8x128xf32>
      %cst_254 = arith.constant 0.000000e+00 : f32
      %1096 = vector.broadcast %cst_254 : f32 to vector<8x128xf32>
      %1097 = arith.minimumf %1095, %1096 : vector<8x128xf32>
      %1098 = arith.mulf %1097, %1097 : vector<8x128xf32>
      %1099 = arith.addf %849, %1098 : vector<8x128xf32>
      %1100 = arith.addf %1099, %261 : vector<8x128xf32>
      %1101 = math.sqrt %1100 : vector<8x128xf32>
      %1102 = arith.minimumf %846, %1095 : vector<8x128xf32>
      %1103 = arith.minimumf %1102, %258 : vector<8x128xf32>
      %cst_255 = arith.constant 0.000000e+00 : f32
      %1104 = vector.broadcast %cst_255 : f32 to vector<8x128xf32>
      %1105 = arith.maximumf %1103, %1104 : vector<8x128xf32>
      %1106 = arith.subf %1105, %1101 : vector<8x128xf32>
      %1107 = arith.maximumf %1090, %1106 : vector<8x128xf32>
      %cst_256 = arith.constant -5.500000e+00 : f32
      %1108 = vector.broadcast %cst_256 : f32 to vector<8x128xf32>
      %1109 = arith.subf %6, %1108 : vector<8x128xf32>
      %1110 = math.absf %1109 : vector<8x128xf32>
      %cst_257 = arith.constant 4.000000e-01 : f32
      %1111 = vector.broadcast %cst_257 : f32 to vector<8x128xf32>
      %1112 = arith.subf %1111, %1110 : vector<8x128xf32>
      %cst_258 = arith.constant 0.000000e+00 : f32
      %1113 = vector.broadcast %cst_258 : f32 to vector<8x128xf32>
      %1114 = arith.minimumf %1112, %1113 : vector<8x128xf32>
      %1115 = arith.mulf %1114, %1114 : vector<8x128xf32>
      %1116 = arith.addf %849, %1115 : vector<8x128xf32>
      %1117 = arith.addf %1116, %261 : vector<8x128xf32>
      %1118 = math.sqrt %1117 : vector<8x128xf32>
      %1119 = arith.minimumf %846, %1112 : vector<8x128xf32>
      %1120 = arith.minimumf %1119, %258 : vector<8x128xf32>
      %cst_259 = arith.constant 0.000000e+00 : f32
      %1121 = vector.broadcast %cst_259 : f32 to vector<8x128xf32>
      %1122 = arith.maximumf %1120, %1121 : vector<8x128xf32>
      %1123 = arith.subf %1122, %1118 : vector<8x128xf32>
      %1124 = arith.maximumf %1107, %1123 : vector<8x128xf32>
      %1125 = arith.addf %849, %1072 : vector<8x128xf32>
      %1126 = arith.addf %1125, %334 : vector<8x128xf32>
      %1127 = math.sqrt %1126 : vector<8x128xf32>
      %1128 = arith.minimumf %846, %1069 : vector<8x128xf32>
      %1129 = arith.minimumf %1128, %331 : vector<8x128xf32>
      %cst_260 = arith.constant 0.000000e+00 : f32
      %1130 = vector.broadcast %cst_260 : f32 to vector<8x128xf32>
      %1131 = arith.maximumf %1129, %1130 : vector<8x128xf32>
      %1132 = arith.subf %1131, %1127 : vector<8x128xf32>
      %1133 = arith.maximumf %1124, %1132 : vector<8x128xf32>
      %1134 = arith.addf %849, %1072 : vector<8x128xf32>
      %1135 = arith.addf %1134, %351 : vector<8x128xf32>
      %1136 = math.sqrt %1135 : vector<8x128xf32>
      %1137 = arith.minimumf %846, %1069 : vector<8x128xf32>
      %1138 = arith.minimumf %1137, %348 : vector<8x128xf32>
      %cst_261 = arith.constant 0.000000e+00 : f32
      %1139 = vector.broadcast %cst_261 : f32 to vector<8x128xf32>
      %1140 = arith.maximumf %1138, %1139 : vector<8x128xf32>
      %1141 = arith.subf %1140, %1136 : vector<8x128xf32>
      %1142 = arith.maximumf %1133, %1141 : vector<8x128xf32>
      %cst_262 = arith.constant 8.000000e-01 : f32
      %1143 = vector.broadcast %cst_262 : f32 to vector<8x128xf32>
      %1144 = arith.subf %934, %1143 : vector<8x128xf32>
      %cst_263 = arith.constant 0.000000e+00 : f32
      %1145 = vector.broadcast %cst_263 : f32 to vector<8x128xf32>
      %1146 = arith.maximumf %1144, %1145 : vector<8x128xf32>
      %1147 = arith.mulf %1146, %1146 : vector<8x128xf32>
      %1148 = arith.addf %906, %1147 : vector<8x128xf32>
      %1149 = arith.addf %1148, %375 : vector<8x128xf32>
      %1150 = math.sqrt %1149 : vector<8x128xf32>
      %1151 = arith.maximumf %903, %1144 : vector<8x128xf32>
      %1152 = arith.maximumf %1151, %372 : vector<8x128xf32>
      %cst_264 = arith.constant 0.000000e+00 : f32
      %1153 = vector.broadcast %cst_264 : f32 to vector<8x128xf32>
      %1154 = arith.minimumf %1152, %1153 : vector<8x128xf32>
      %1155 = arith.addf %1150, %1154 : vector<8x128xf32>
      %1156 = arith.minimumf %1142, %1155 : vector<8x128xf32>
      %1157 = arith.minimumf %921, %1156 : vector<8x128xf32>
      %1158 = arith.mulf %622, %622 : vector<8x128xf32>
      %1159 = arith.mulf %12, %12 : vector<8x128xf32>
      %1160 = arith.addf %1158, %1159 : vector<8x128xf32>
      %1161 = arith.mulf %14, %14 : vector<8x128xf32>
      %1162 = arith.addf %1160, %1161 : vector<8x128xf32>
      %1163 = math.sqrt %1162 : vector<8x128xf32>
      %cst_265 = arith.constant 1.600000e+00 : f32
      %1164 = vector.broadcast %cst_265 : f32 to vector<8x128xf32>
      %1165 = arith.subf %1163, %1164 : vector<8x128xf32>
      %cst_266 = arith.constant 1.450000e+00 : f32
      %1166 = vector.broadcast %cst_266 : f32 to vector<8x128xf32>
      %1167 = arith.subf %1166, %1163 : vector<8x128xf32>
      %1168 = arith.addf %640, %36 : vector<8x128xf32>
      %1169 = arith.addf %1168, %44 : vector<8x128xf32>
      %1170 = math.sqrt %1169 : vector<8x128xf32>
      %1171 = arith.minimumf %637, %33 : vector<8x128xf32>
      %1172 = arith.minimumf %1171, %41 : vector<8x128xf32>
      %cst_267 = arith.constant 0.000000e+00 : f32
      %1173 = vector.broadcast %cst_267 : f32 to vector<8x128xf32>
      %1174 = arith.maximumf %1172, %1173 : vector<8x128xf32>
      %1175 = arith.subf %1174, %1170 : vector<8x128xf32>
      %1176 = arith.addf %1167, %1175 : vector<8x128xf32>
      %1177 = arith.addf %640, %36 : vector<8x128xf32>
      %1178 = arith.addf %1177, %61 : vector<8x128xf32>
      %1179 = math.sqrt %1178 : vector<8x128xf32>
      %1180 = arith.minimumf %637, %33 : vector<8x128xf32>
      %1181 = arith.minimumf %1180, %58 : vector<8x128xf32>
      %cst_268 = arith.constant 0.000000e+00 : f32
      %1182 = vector.broadcast %cst_268 : f32 to vector<8x128xf32>
      %1183 = arith.maximumf %1181, %1182 : vector<8x128xf32>
      %1184 = arith.subf %1183, %1179 : vector<8x128xf32>
      %1185 = arith.maximumf %1176, %1184 : vector<8x128xf32>
      %1186 = arith.maximumf %1165, %1185 : vector<8x128xf32>
      %1187 = arith.addf %670, %81 : vector<8x128xf32>
      %1188 = arith.addf %1187, %87 : vector<8x128xf32>
      %1189 = math.sqrt %1188 : vector<8x128xf32>
      %1190 = arith.maximumf %667, %78 : vector<8x128xf32>
      %1191 = arith.maximumf %1190, %84 : vector<8x128xf32>
      %cst_269 = arith.constant 0.000000e+00 : f32
      %1192 = vector.broadcast %cst_269 : f32 to vector<8x128xf32>
      %1193 = arith.minimumf %1191, %1192 : vector<8x128xf32>
      %1194 = arith.addf %1189, %1193 : vector<8x128xf32>
      %1195 = arith.addf %688, %105 : vector<8x128xf32>
      %1196 = arith.addf %1195, %110 : vector<8x128xf32>
      %1197 = math.sqrt %1196 : vector<8x128xf32>
      %1198 = arith.minimumf %685, %102 : vector<8x128xf32>
      %1199 = arith.minimumf %1198, %107 : vector<8x128xf32>
      %cst_270 = arith.constant 0.000000e+00 : f32
      %1200 = vector.broadcast %cst_270 : f32 to vector<8x128xf32>
      %1201 = arith.maximumf %1199, %1200 : vector<8x128xf32>
      %1202 = arith.subf %1201, %1197 : vector<8x128xf32>
      %1203 = arith.maximumf %1194, %1202 : vector<8x128xf32>
      %1204 = arith.addf %710, %132 : vector<8x128xf32>
      %1205 = arith.addf %1204, %137 : vector<8x128xf32>
      %1206 = math.sqrt %1205 : vector<8x128xf32>
      %1207 = arith.minimumf %707, %129 : vector<8x128xf32>
      %1208 = arith.minimumf %1207, %134 : vector<8x128xf32>
      %cst_271 = arith.constant 0.000000e+00 : f32
      %1209 = vector.broadcast %cst_271 : f32 to vector<8x128xf32>
      %1210 = arith.maximumf %1208, %1209 : vector<8x128xf32>
      %1211 = arith.subf %1210, %1206 : vector<8x128xf32>
      %1212 = arith.maximumf %1203, %1211 : vector<8x128xf32>
      %1213 = arith.addf %732, %132 : vector<8x128xf32>
      %1214 = arith.addf %1213, %137 : vector<8x128xf32>
      %1215 = math.sqrt %1214 : vector<8x128xf32>
      %1216 = arith.minimumf %729, %129 : vector<8x128xf32>
      %1217 = arith.minimumf %1216, %134 : vector<8x128xf32>
      %cst_272 = arith.constant 0.000000e+00 : f32
      %1218 = vector.broadcast %cst_272 : f32 to vector<8x128xf32>
      %1219 = arith.maximumf %1217, %1218 : vector<8x128xf32>
      %1220 = arith.subf %1219, %1215 : vector<8x128xf32>
      %1221 = arith.maximumf %1212, %1220 : vector<8x128xf32>
      %1222 = arith.addf %746, %176 : vector<8x128xf32>
      %1223 = arith.addf %1222, %137 : vector<8x128xf32>
      %1224 = math.sqrt %1223 : vector<8x128xf32>
      %1225 = arith.minimumf %743, %173 : vector<8x128xf32>
      %1226 = arith.minimumf %1225, %134 : vector<8x128xf32>
      %cst_273 = arith.constant 0.000000e+00 : f32
      %1227 = vector.broadcast %cst_273 : f32 to vector<8x128xf32>
      %1228 = arith.maximumf %1226, %1227 : vector<8x128xf32>
      %1229 = arith.subf %1228, %1224 : vector<8x128xf32>
      %1230 = arith.maximumf %1221, %1229 : vector<8x128xf32>
      %1231 = arith.addf %746, %193 : vector<8x128xf32>
      %1232 = arith.addf %1231, %137 : vector<8x128xf32>
      %1233 = math.sqrt %1232 : vector<8x128xf32>
      %1234 = arith.minimumf %743, %190 : vector<8x128xf32>
      %1235 = arith.minimumf %1234, %134 : vector<8x128xf32>
      %cst_274 = arith.constant 0.000000e+00 : f32
      %1236 = vector.broadcast %cst_274 : f32 to vector<8x128xf32>
      %1237 = arith.maximumf %1235, %1236 : vector<8x128xf32>
      %1238 = arith.subf %1237, %1233 : vector<8x128xf32>
      %1239 = arith.maximumf %1230, %1238 : vector<8x128xf32>
      %1240 = arith.addf %746, %132 : vector<8x128xf32>
      %1241 = arith.addf %1240, %210 : vector<8x128xf32>
      %1242 = math.sqrt %1241 : vector<8x128xf32>
      %1243 = arith.minimumf %743, %129 : vector<8x128xf32>
      %1244 = arith.minimumf %1243, %207 : vector<8x128xf32>
      %cst_275 = arith.constant 0.000000e+00 : f32
      %1245 = vector.broadcast %cst_275 : f32 to vector<8x128xf32>
      %1246 = arith.maximumf %1244, %1245 : vector<8x128xf32>
      %1247 = arith.subf %1246, %1242 : vector<8x128xf32>
      %1248 = arith.maximumf %1239, %1247 : vector<8x128xf32>
      %1249 = arith.addf %746, %132 : vector<8x128xf32>
      %1250 = arith.addf %1249, %227 : vector<8x128xf32>
      %1251 = math.sqrt %1250 : vector<8x128xf32>
      %1252 = arith.minimumf %743, %129 : vector<8x128xf32>
      %1253 = arith.minimumf %1252, %224 : vector<8x128xf32>
      %cst_276 = arith.constant 0.000000e+00 : f32
      %1254 = vector.broadcast %cst_276 : f32 to vector<8x128xf32>
      %1255 = arith.maximumf %1253, %1254 : vector<8x128xf32>
      %1256 = arith.subf %1255, %1251 : vector<8x128xf32>
      %1257 = arith.maximumf %1248, %1256 : vector<8x128xf32>
      %1258 = arith.minimumf %1186, %1257 : vector<8x128xf32>
      %cst_277 = arith.constant 1.000000e+00 : f32
      %1259 = vector.broadcast %cst_277 : f32 to vector<8x128xf32>
      %1260 = arith.subf %1163, %1259 : vector<8x128xf32>
      %1261 = arith.minimumf %1258, %1260 : vector<8x128xf32>
      %cst_278 = arith.constant 0.899999976 : f32
      %1262 = vector.broadcast %cst_278 : f32 to vector<8x128xf32>
      %1263 = arith.subf %1262, %1163 : vector<8x128xf32>
      %1264 = arith.maximumf %1261, %1263 : vector<8x128xf32>
      %1265 = arith.addf %813, %256 : vector<8x128xf32>
      %1266 = arith.addf %1265, %261 : vector<8x128xf32>
      %1267 = math.sqrt %1266 : vector<8x128xf32>
      %1268 = arith.minimumf %810, %253 : vector<8x128xf32>
      %1269 = arith.minimumf %1268, %258 : vector<8x128xf32>
      %cst_279 = arith.constant 0.000000e+00 : f32
      %1270 = vector.broadcast %cst_279 : f32 to vector<8x128xf32>
      %1271 = arith.maximumf %1269, %1270 : vector<8x128xf32>
      %1272 = arith.subf %1271, %1267 : vector<8x128xf32>
      %1273 = arith.maximumf %1264, %1272 : vector<8x128xf32>
      %1274 = arith.addf %835, %256 : vector<8x128xf32>
      %1275 = arith.addf %1274, %261 : vector<8x128xf32>
      %1276 = math.sqrt %1275 : vector<8x128xf32>
      %1277 = arith.minimumf %832, %253 : vector<8x128xf32>
      %1278 = arith.minimumf %1277, %258 : vector<8x128xf32>
      %cst_280 = arith.constant 0.000000e+00 : f32
      %1279 = vector.broadcast %cst_280 : f32 to vector<8x128xf32>
      %1280 = arith.maximumf %1278, %1279 : vector<8x128xf32>
      %1281 = arith.subf %1280, %1276 : vector<8x128xf32>
      %1282 = arith.maximumf %1273, %1281 : vector<8x128xf32>
      %1283 = arith.addf %849, %300 : vector<8x128xf32>
      %1284 = arith.addf %1283, %261 : vector<8x128xf32>
      %1285 = math.sqrt %1284 : vector<8x128xf32>
      %1286 = arith.minimumf %846, %297 : vector<8x128xf32>
      %1287 = arith.minimumf %1286, %258 : vector<8x128xf32>
      %cst_281 = arith.constant 0.000000e+00 : f32
      %1288 = vector.broadcast %cst_281 : f32 to vector<8x128xf32>
      %1289 = arith.maximumf %1287, %1288 : vector<8x128xf32>
      %1290 = arith.subf %1289, %1285 : vector<8x128xf32>
      %1291 = arith.maximumf %1282, %1290 : vector<8x128xf32>
      %1292 = arith.addf %849, %317 : vector<8x128xf32>
      %1293 = arith.addf %1292, %261 : vector<8x128xf32>
      %1294 = math.sqrt %1293 : vector<8x128xf32>
      %1295 = arith.minimumf %846, %314 : vector<8x128xf32>
      %1296 = arith.minimumf %1295, %258 : vector<8x128xf32>
      %cst_282 = arith.constant 0.000000e+00 : f32
      %1297 = vector.broadcast %cst_282 : f32 to vector<8x128xf32>
      %1298 = arith.maximumf %1296, %1297 : vector<8x128xf32>
      %1299 = arith.subf %1298, %1294 : vector<8x128xf32>
      %1300 = arith.maximumf %1291, %1299 : vector<8x128xf32>
      %1301 = arith.addf %849, %256 : vector<8x128xf32>
      %1302 = arith.addf %1301, %334 : vector<8x128xf32>
      %1303 = math.sqrt %1302 : vector<8x128xf32>
      %1304 = arith.minimumf %846, %253 : vector<8x128xf32>
      %1305 = arith.minimumf %1304, %331 : vector<8x128xf32>
      %cst_283 = arith.constant 0.000000e+00 : f32
      %1306 = vector.broadcast %cst_283 : f32 to vector<8x128xf32>
      %1307 = arith.maximumf %1305, %1306 : vector<8x128xf32>
      %1308 = arith.subf %1307, %1303 : vector<8x128xf32>
      %1309 = arith.maximumf %1300, %1308 : vector<8x128xf32>
      %1310 = arith.addf %849, %256 : vector<8x128xf32>
      %1311 = arith.addf %1310, %351 : vector<8x128xf32>
      %1312 = math.sqrt %1311 : vector<8x128xf32>
      %1313 = arith.minimumf %846, %253 : vector<8x128xf32>
      %1314 = arith.minimumf %1313, %348 : vector<8x128xf32>
      %cst_284 = arith.constant 0.000000e+00 : f32
      %1315 = vector.broadcast %cst_284 : f32 to vector<8x128xf32>
      %1316 = arith.maximumf %1314, %1315 : vector<8x128xf32>
      %1317 = arith.subf %1316, %1312 : vector<8x128xf32>
      %1318 = arith.maximumf %1309, %1317 : vector<8x128xf32>
      %1319 = arith.addf %906, %370 : vector<8x128xf32>
      %1320 = arith.addf %1319, %375 : vector<8x128xf32>
      %1321 = math.sqrt %1320 : vector<8x128xf32>
      %1322 = arith.maximumf %903, %367 : vector<8x128xf32>
      %1323 = arith.maximumf %1322, %372 : vector<8x128xf32>
      %cst_285 = arith.constant 0.000000e+00 : f32
      %1324 = vector.broadcast %cst_285 : f32 to vector<8x128xf32>
      %1325 = arith.minimumf %1323, %1324 : vector<8x128xf32>
      %1326 = arith.addf %1321, %1325 : vector<8x128xf32>
      %1327 = arith.minimumf %1318, %1326 : vector<8x128xf32>
      %1328 = arith.minimumf %1157, %1327 : vector<8x128xf32>
      %1329 = arith.index_cast %2 : i32 to index
      %c0_286 = arith.constant 0 : index
      %1330 = vector.load %arg4[%1329, %c0_286] : memref<24x128xf32, #tpu.memory_space<vmem>>, vector<8x128xf32>
      tpu.vector_store %arg4[%1329, %c0_286], %1328 {strides = array<i32>} : memref<24x128xf32, #tpu.memory_space<vmem>>, vector<8x128xf32>,
    }
    %c3_i32_0 = arith.constant 3 : i32
    return
  }
  func.func @transform_0(%arg0: i32) -> (i32, i32) {
    %c0_i32 = arith.constant 0 : i32
    %c0_i32_0 = arith.constant 0 : i32
    return %arg0, %c0_i32 : i32, i32
  }
  func.func @transform_1(%arg0: i32) -> (i32, i32) {
    %c0_i32 = arith.constant 0 : i32
    %c0_i32_0 = arith.constant 0 : i32
    return %arg0, %c0_i32 : i32, i32
  }
  func.func @transform_2(%arg0: i32) -> (i32, i32) {
    %c0_i32 = arith.constant 0 : i32
    %c0_i32_0 = arith.constant 0 : i32
    return %arg0, %c0_i32 : i32, i32
  }
  func.func @transform_3(%arg0: i32) -> (i32, i32) {
    %c0_i32 = arith.constant 0 : i32
    %c0_i32_0 = arith.constant 0 : i32
    return %arg0, %c0_i32 : i32, i32
  }
}

</mosaic_0001>

<llo_original>
// kernel: tpu_custom_call.1
$region0: #{tpu_custom_call.1}
  #allocation0 [shape = 'u32[]', space=smem, size = 0x4, offset = 0x4, fixed_abs, tag = 'smem constant byte address 0x4 - core index']
  #allocation1 [shape = 'u32[144,128]{1,0:T(1,128)}', space=vmem, size = 0x12000, scoped, tag = 'internal scratch']
  %s0 = inlined_call_operand.hbm [shape: f32[48,128], index: 0, kind: input, shape index: {}]
  %s1 = inlined_call_operand.hbm [shape: f32[48,128], index: 1, kind: input, shape index: {}]
  %s2 = inlined_call_operand.hbm [shape: f32[48,128], index: 2, kind: input, shape index: {}]
  %s3 = inlined_call_operand.hbm [shape: f32[48,128], index: 3, kind: output, shape index: {}]
  %s4 = sld [smem:[#allocation0]]
  $region64: #{tpu_custom_call.1} parent=0
    _
  %s6 = ssub.s32 1, %s4
  %s7 = scalar_select 0, %s6, %s4
  $region1: #{tpu_custom_call.1} parent=0
    #allocation2 [shape = 'u8[24576]{0}', space=vmem, size = 0x6000, scoped, tag = 'input window, operand 0']
    #allocation3 [shape = 's32[2]{0}', space=sflag, size = 0x8, scoped, tag = 'scoped memory for tpu_custom_call.1']
    #allocation4 [shape = 's32[2]{0}', space=sflag, size = 0x8, scoped, tag = 'scoped memory for tpu_custom_call.1']
    #allocation5 [shape = 'u8[24576]{0}', space=vmem, size = 0x6000, scoped, tag = 'input window, operand 1']
    #allocation6 [shape = 's32[2]{0}', space=sflag, size = 0x8, scoped, tag = 'scoped memory for tpu_custom_call.1']
    #allocation7 [shape = 'u8[24576]{0}', space=vmem, size = 0x6000, scoped, tag = 'input window, operand 2']
    #allocation8 [shape = 'u8[24576]{0}', space=vmem, size = 0x6000, scoped, tag = 'output window, operand 0']
    %8 = vsyncpa [#allocation3], 0
    %s9 = scalar_lea.sflag [#allocation3], 1
    %10 = vsyncpa %s9, 0
    %11 = vsyncpa [#allocation6], 0
    %s12 = scalar_lea.sflag [#allocation6], 1
    %13 = vsyncpa %s12, 0
    %14 = vsyncpa [#allocation4], 0
    %s15 = scalar_lea.sflag [#allocation4], 1
    %16 = vsyncpa %s15, 0
    loop: start=0, step=1, limit=4
    $region2: #{tpu_custom_call.1} parent=1 // loop_pre_header
      _
    $region3: #{tpu_custom_call.1} parent=1 // loop_header
      %s18 = sphi 0, %s22
      %p19 = scmp.ge.s32.totalorder %s18, 4
      %s28 = sphi 0, %s30
      %s31 = sphi 0, %s28
      %s32 = sphi 0, %s31
      %s48 = sphi 0, %s32
      %s54 = sphi 0, %s56
      %s57 = sphi 0, %s54
      %s58 = sphi 0, %s57
      %s74 = sphi 0, %s58
      %s80 = sphi 0, %s82
      %s83 = sphi 0, %s80
      %s84 = sphi 0, %s83
      %s100 = sphi 0, %s84
      %s106 = sphi 0, %s108
      %s109 = sphi 0, %s106
      %s110 = sphi 0, %s109
      %s126 = sphi 0, %s110
    $region4: #{tpu_custom_call.1} parent=1 // loop_header_branch
      %21 = sbr.rel (%p19) target = $region8
    $region5: #{tpu_custom_call.1} parent=1 // loop_body
      %s23 = ssub.s32 %s18, 1
      %s24 = ssub.s32 %s18, 2
      %s25 = sadd.s32 %s18, 1
      %s26 = ssub.s32 %s18, %s25
      %p27 = scmp.eq.s32.totalorder %s26, 0
      %s29 = sadd.s32 %s28, 1
      %s30 = scalar_select %p27, %s28, %s29
      %p33 = pneg %p27
      %p34 = scmp.eq.s32.totalorder %s18, 1
      %p35 = por %p33, %p34
      %p36 = scmp.ne.s32.totalorder %s28, %s31
      %p37 = scmp.eq.s32.totalorder %s18, 0
      %p38 = por %p36, %p37
      %p39 = scmp.ne.s32.totalorder %s28, %s31
      %p40 = scmp.eq.s32.totalorder %s23, 1
      %p41 = por %p39, %p40
      %p42 = scmp.ne.s32.totalorder %s31, %s32
      %p43 = scmp.eq.s32.totalorder %s23, 0
      %p44 = por %p42, %p43
      %p45 = scmp.ne.s32.totalorder %s31, %s32
      %p46 = scmp.eq.s32.totalorder %s24, 1
      %p47 = por %p45, %p46
      %p49 = scmp.ne.s32.totalorder %s32, %s48
      %p50 = scmp.eq.s32.totalorder %s24, 0
      %p51 = por %p49, %p50
      %s52 = ssub.s32 %s18, %s25
      %p53 = scmp.eq.s32.totalorder %s52, 0
      %s55 = sadd.s32 %s54, 1
      %s56 = scalar_select %p53, %s54, %s55
      %p59 = pneg %p53
      %p60 = scmp.eq.s32.totalorder %s18, 1
      %p61 = por %p59, %p60
      %p62 = scmp.ne.s32.totalorder %s54, %s57
      %p63 = scmp.eq.s32.totalorder %s18, 0
      %p64 = por %p62, %p63
      %p65 = scmp.ne.s32.totalorder %s54, %s57
      %p66 = scmp.eq.s32.totalorder %s23, 1
      %p67 = por %p65, %p66
      %p68 = scmp.ne.s32.totalorder %s57, %s58
      %p69 = scmp.eq.s32.totalorder %s23, 0
      %p70 = por %p68, %p69
      %p71 = scmp.ne.s32.totalorder %s57, %s58
      %p72 = scmp.eq.s32.totalorder %s24, 1
      %p73 = por %p71, %p72
      %p75 = scmp.ne.s32.totalorder %s58, %s74
      %p76 = scmp.eq.s32.totalorder %s24, 0
      %p77 = por %p75, %p76
      %s78 = ssub.s32 %s18, %s25
      %p79 = scmp.eq.s32.totalorder %s78, 0
      %s81 = sadd.s32 %s80, 1
      %s82 = scalar_select %p79, %s80, %s81
      %p85 = pneg %p79
      %p86 = scmp.eq.s32.totalorder %s18, 1
      %p87 = por %p85, %p86
      %p88 = scmp.ne.s32.totalorder %s80, %s83
      %p89 = scmp.eq.s32.totalorder %s18, 0
      %p90 = por %p88, %p89
      %p91 = scmp.ne.s32.totalorder %s80, %s83
      %p92 = scmp.eq.s32.totalorder %s23, 1
      %p93 = por %p91, %p92
      %p94 = scmp.ne.s32.totalorder %s83, %s84
      %p95 = scmp.eq.s32.totalorder %s23, 0
      %p96 = por %p94, %p95
      %p97 = scmp.ne.s32.totalorder %s83, %s84
      %p98 = scmp.eq.s32.totalorder %s24, 1
      %p99 = por %p97, %p98
      %p101 = scmp.ne.s32.totalorder %s84, %s100
      %p102 = scmp.eq.s32.totalorder %s24, 0
      %p103 = por %p101, %p102
      %s104 = ssub.s32 %s18, %s25
      %p105 = scmp.eq.s32.totalorder %s104, 0
      %s107 = sadd.s32 %s106, 1
      %s108 = scalar_select %p105, %s106, %s107
      %p111 = pneg %p105
      %p112 = scmp.eq.s32.totalorder %s18, 1
      %p113 = por %p111, %p112
      %p114 = scmp.ne.s32.totalorder %s106, %s109
      %p115 = scmp.eq.s32.totalorder %s18, 0
      %p116 = por %p114, %p115
      %p117 = scmp.ne.s32.totalorder %s106, %s109
      %p118 = scmp.eq.s32.totalorder %s23, 1
      %p119 = por %p117, %p118
      %p120 = scmp.ne.s32.totalorder %s109, %s110
      %p121 = scmp.eq.s32.totalorder %s23, 0
      %p122 = por %p120, %p121
      %p123 = scmp.ne.s32.totalorder %s109, %s110
      %p124 = scmp.eq.s32.totalorder %s24, 1
      %p125 = por %p123, %p124
      %p127 = scmp.ne.s32.totalorder %s110, %s126
      %p128 = scmp.eq.s32.totalorder %s24, 0
      %p129 = por %p127, %p128
      %p130 = scmp.le.s32.totalorder 1, %s18
      %p131 = scmp.lt.s32.totalorder %s18, 3
      %p132 = pnand %p130, %p131
      %p133 = pneg %p132
      // Predicated region
      $region9: #{tpu_custom_call.1} parent=5 // pred_check
        _
      $region10: #{tpu_custom_call.1} parent=5 // pred_check_branch
        %135 = sbr.rel (%p132) target = $region12
      $region11: #{tpu_custom_call.1} parent=5 // pred_region
        %s136 = ssub.s32 %s18, 1
      $region12: #{tpu_custom_call.1} parent=5 // pred_fallthru
        _
      %p137 = scmp.lt.s32.totalorder %s18, 2
      // Predicated region
      $region13: #{tpu_custom_call.1} parent=5 // pred_check
        %p138 = pneg %p137
      $region14: #{tpu_custom_call.1} parent=5 // pred_check_branch
        %140 = sbr.rel (%p138) target = $region16
      $region15: #{tpu_custom_call.1} parent=5 // pred_region
        // Predicated region
        $region17: #{tpu_custom_call.1} parent=15 // pred_check
          %p141 = pneg %p38
        $region18: #{tpu_custom_call.1} parent=15 // pred_check_branch
          %143 = sbr.rel (%p141) target = $region20
        $region19: #{tpu_custom_call.1} parent=15 // pred_region
          %s144 = sand.u32 %s28, 1
          %s145 = scalar_lea.sflag [#allocation3], %s144
          %s146 = sand.u32 %s28, 1
          %s147 = smul.addr %s146, 24
          %s148 = scalar_lea.vmem [#allocation2], %s147
          %s149 = smul.u32 3, %s18
          %s151 = ssub.s32 384, 384
          %152 = vsyncadd %s145, %s151
          %s153 = smul.addr %s149, 128
          %s154 = scalar_lea.hbm %s0, %s153
          %s155 = sshll.u32 %s148, 4
          %s156 = int_to_ptr.vmem [resolvable:$true] %s155
          %161 = dma.hbm_to_vmem [thread:$0]  %s154, 384, %s156, %s145, 128, 128, 8
        $region20: #{tpu_custom_call.1} parent=15 // pred_fallthru
          _
        // Predicated region
        $region21: #{tpu_custom_call.1} parent=15 // pred_check
          %p162 = pneg %p64
        $region22: #{tpu_custom_call.1} parent=15 // pred_check_branch
          %164 = sbr.rel (%p162) target = $region24
        $region23: #{tpu_custom_call.1} parent=15 // pred_region
          %s165 = sand.u32 %s18, 1
          %s166 = scalar_lea.sflag [#allocation6], %s165
          %s167 = sand.u32 %s54, 1
          %s168 = smul.addr %s167, 24
          %s169 = scalar_lea.vmem [#allocation5], %s168
          %s170 = smul.u32 3, %s18
          %s172 = ssub.s32 384, 384
          %173 = vsyncadd %s166, %s172
          %s174 = smul.addr %s170, 128
          %s175 = scalar_lea.hbm %s1, %s174
          %s176 = sshll.u32 %s169, 4
          %s177 = int_to_ptr.vmem [resolvable:$true] %s176
          %182 = dma.hbm_to_vmem [thread:$0]  %s175, 384, %s177, %s166, 128, 128, 8
        $region24: #{tpu_custom_call.1} parent=15 // pred_fallthru
          _
        // Predicated region
        $region25: #{tpu_custom_call.1} parent=15 // pred_check
          %p183 = pneg %p90
        $region26: #{tpu_custom_call.1} parent=15 // pred_check_branch
          %185 = sbr.rel (%p183) target = $region28
        $region27: #{tpu_custom_call.1} parent=15 // pred_region
          %s186 = sand.u32 %s18, 1
          %s187 = scalar_lea.sflag [#allocation6], %s186
          %s188 = sand.u32 %s80, 1
          %s189 = smul.addr %s188, 24
          %s190 = scalar_lea.vmem [#allocation7], %s189
          %s191 = smul.u32 3, %s18
          %s193 = ssub.s32 384, 384
          %194 = vsyncadd %s187, %s193
          %s195 = smul.addr %s191, 128
          %s196 = scalar_lea.hbm %s2, %s195
          %s197 = sshll.u32 %s190, 4
          %s198 = int_to_ptr.vmem [resolvable:$true] %s197
          %203 = dma.hbm_to_vmem [thread:$0]  %s196, 384, %s198, %s187, 128, 128, 8
        $region28: #{tpu_custom_call.1} parent=15 // pred_fallthru
          _
      $region16: #{tpu_custom_call.1} parent=5 // pred_fallthru
        _
      %p204 = scmp.le.s32.totalorder 1, %s18
      %p205 = scmp.lt.s32.totalorder %s18, 3
      %p206 = pnand %p204, %p205
      %p207 = pneg %p206
      // Predicated region
      $region29: #{tpu_custom_call.1} parent=5 // pred_check
        _
      $region30: #{tpu_custom_call.1} parent=5 // pred_check_branch
        %209 = sbr.rel (%p206) target = $region32
      $region31: #{tpu_custom_call.1} parent=5 // pred_region
        %s210 = ssub.s32 %s18, 1
        %s211 = sand.u32 %s31, 1
        %s212 = scalar_lea.sflag [#allocation3], %s211
        %s213 = sand.u32 %s31, 1
        %s214 = smul.addr %s213, 24
        %s215 = scalar_lea.vmem [#allocation2], %s214
        // Predicated region
        $region33: #{tpu_custom_call.1} parent=31 // pred_check
          %p216 = pneg %p44
        $region34: #{tpu_custom_call.1} parent=31 // pred_check_branch
          %218 = sbr.rel (%p216) target = $region36
        $region35: #{tpu_custom_call.1} parent=31 // pred_region
          %219 = dma.done %s212, 384
        $region36: #{tpu_custom_call.1} parent=31 // pred_fallthru
          _
        %s220 = sand.u32 %s23, 1
        %s221 = scalar_lea.sflag [#allocation6], %s220
        %s222 = sand.u32 %s57, 1
        %s223 = smul.addr %s222, 24
        %s224 = scalar_lea.vmem [#allocation5], %s223
        // Predicated region
        $region37: #{tpu_custom_call.1} parent=31 // pred_check
          %p225 = pneg %p70
        $region38: #{tpu_custom_call.1} parent=31 // pred_check_branch
          %227 = sbr.rel (%p225) target = $region40
        $region39: #{tpu_custom_call.1} parent=31 // pred_region
          %228 = dma.done %s221, 384
        $region40: #{tpu_custom_call.1} parent=31 // pred_fallthru
          _
        %s229 = sand.u32 %s23, 1
        %s230 = scalar_lea.sflag [#allocation6], %s229
        %s231 = sand.u32 %s83, 1
        %s232 = smul.addr %s231, 24
        %s233 = scalar_lea.vmem [#allocation7], %s232
        // Predicated region
        $region41: #{tpu_custom_call.1} parent=31 // pred_check
          %p234 = pneg %p96
        $region42: #{tpu_custom_call.1} parent=31 // pred_check_branch
          %236 = sbr.rel (%p234) target = $region44
        $region43: #{tpu_custom_call.1} parent=31 // pred_region
          %237 = dma.done %s230, 384
        $region44: #{tpu_custom_call.1} parent=31 // pred_fallthru
          _
        %s238 = sand.u32 %s31, 1
        %s239 = scalar_lea.sflag [#allocation3], %s238
        %s240 = sand.u32 %s31, 1
        %s241 = smul.addr %s240, 24
        %s242 = scalar_lea.vmem [#allocation2], %s241
        %p243 = pneg %p44
        %p244 = pneg %p41
        %s245 = sand.u32 %s23, 1
        %s246 = scalar_lea.sflag [#allocation6], %s245
        %s247 = sand.u32 %s57, 1
        %s248 = smul.addr %s247, 24
        %s249 = scalar_lea.vmem [#allocation5], %s248
        %p250 = pneg %p70
        %p251 = pneg %p67
        %s252 = sand.u32 %s23, 1
        %s253 = scalar_lea.sflag [#allocation6], %s252
        %s254 = sand.u32 %s83, 1
        %s255 = smul.addr %s254, 24
        %s256 = scalar_lea.vmem [#allocation7], %s255
        %p257 = pneg %p96
        %p258 = pneg %p93
        %p259 = pneg %p122
        %p260 = pneg %p119
        %s261 = sand.u32 %s109, 1
        %s262 = scalar_lea.sflag [#allocation4], %s261
        %s263 = sand.u32 %s109, 1
        %s264 = smul.addr %s263, 24
        %s265 = scalar_lea.vmem [#allocation8], %s264
        %s266 = smul.u32 3, %s23
        %s267 = smul.u32 3, %s23
        %s268 = smul.u32 3, %s23
        %s269 = smul.u32 3, %s23
        loop: start=0, step=1, limit=3
        $region45: #{tpu_custom_call.1} parent=31 // loop_pre_header
          _
        $region46: #{tpu_custom_call.1} parent=31 // loop_header
          %s271 = sphi 0, %s275
          %p272 = scmp.ge.s32.totalorder %s271, 3
        $region47: #{tpu_custom_call.1} parent=31 // loop_header_branch
          %274 = sbr.rel (%p272) target = $region51
        $region48: #{tpu_custom_call.1} parent=31 // loop_body
          %s276 = smul.u32 %s271, 8
          %s277 = scalar_lea.vmem %s215, %s276 [#allocation2]
          %v278 = vld [vmem:[%s277] sm:$0xff]
          %s279 = scalar_lea.vmem %s224, %s276 [#allocation5]
          %v280 = vld [vmem:[%s279] sm:$0xff]
          %s281 = scalar_lea.vmem %s233, %s276 [#allocation7]
          %v282 = vld [vmem:[%s281] sm:$0xff]
          %v283 = vsub.f32 %v278, 4.5
          %v284 = vmul.f32 %v283, %v283
          %v285 = vmul.f32 %v280, %v280
          %v286 = vadd.f32 %v284, %v285
          %v287 = vmul.f32 %v282, %v282
          %v288 = vadd.f32 %v286, %v287
          %v289 = vrsqrt.pop %v288
          %v290 = vmul.f32 %v288, %v289
          %vm291 = vcmp.eq.f32.partialorder %v288, inf
          %v292 = vsel %vm291, %v288, %v290
          %vm293 = vcmp.eq.f32.partialorder %v288, 0.0
          %v294 = vand.u32 %v288, 2147483648
          %v295 = vsel %vm293, %v294, %v292
          %v296 = vsub.f32 %v295, 1.6
          %v297 = vsub.f32 1.45, %v295
          %v298 = vand.u32 2147483647, %v283
          %v299 = vsub.f32 1.7, %v298
          %v300 = vmin.f32 %v299, 0.0
          %v301 = vmul.f32 %v300, %v300
          %v302 = vand.u32 2147483647, %v280
          %v303 = vsub.f32 1.7, %v302
          %v304 = vmin.f32 %v303, 0.0
          %v305 = vmul.f32 %v304, %v304
          %v306 = vsub.f32 %v282, 0.6
          %v307 = vand.u32 2147483647, %v306
          %v308 = vsub.f32 0.5, %v307
          %v309 = vmin.f32 %v308, 0.0
          %v310 = vmul.f32 %v309, %v309
          %v311 = vadd.f32 %v301, %v305
          %v312 = vadd.f32 %v311, %v310
          %v313 = vrsqrt.pop %v312
          %v314 = vmul.f32 %v312, %v313
          %vm315 = vcmp.eq.f32.partialorder %v312, inf
          %v316 = vsel %vm315, %v312, %v314
          %vm317 = vcmp.eq.f32.partialorder %v312, 0.0
          %v318 = vand.u32 %v312, 2147483648
          %v319 = vsel %vm317, %v318, %v316
          %v320 = vmin.f32 %v299, %v303
          %v321 = vmin.f32 %v320, %v308
          %v322 = vmax.f32 %v321, 0.0
          %v323 = vsub.f32 %v322, %v319
          %v324 = vadd.f32 %v297, %v323
          %v325 = vsub.f32 %v282, -0.6
          %v326 = vand.u32 2147483647, %v325
          %v327 = vsub.f32 0.5, %v326
          %v328 = vmin.f32 %v327, 0.0
          %v329 = vmul.f32 %v328, %v328
          %v330 = vadd.f32 %v311, %v329
          %v331 = vrsqrt.pop %v330
          %v332 = vmul.f32 %v330, %v331
          %vm333 = vcmp.eq.f32.partialorder %v330, inf
          %v334 = vsel %vm333, %v330, %v332
          %vm335 = vcmp.eq.f32.partialorder %v330, 0.0
          %v336 = vand.u32 %v330, 2147483648
          %v337 = vsel %vm335, %v336, %v334
          %v338 = vmin.f32 %v320, %v327
          %v339 = vmax.f32 %v338, 0.0
          %v340 = vsub.f32 %v339, %v337
          %v341 = vmax.f32 %v324, %v340
          %v342 = vmax.f32 %v296, %v341
          %v343 = vsub.f32 %v298, 1.2
          %v344 = vmax.f32 %v343, 0.0
          %v345 = vmul.f32 %v344, %v344
          %v346 = vsub.f32 %v302, 1.2
          %v347 = vmax.f32 %v346, 0.0
          %v348 = vmul.f32 %v347, %v347
          %v349 = vand.u32 2147483647, %v282
          %v350 = vsub.f32 %v349, 1.2
          %v351 = vmax.f32 %v350, 0.0
          %v352 = vmul.f32 %v351, %v351
          %v353 = vadd.f32 %v345, %v348
          %v354 = vadd.f32 %v353, %v352
          %v355 = vrsqrt.pop %v354
          %v356 = vmul.f32 %v354, %v355
          %vm357 = vcmp.eq.f32.partialorder %v354, inf
          %v358 = vsel %vm357, %v354, %v356
          %vm359 = vcmp.eq.f32.partialorder %v354, 0.0
          %v360 = vand.u32 %v354, 2147483648
          %v361 = vsel %vm359, %v360, %v358
          %v362 = vmax.f32 %v343, %v346
          %v363 = vmax.f32 %v362, %v350
          %v364 = vmin.f32 %v363, 0.0
          %v365 = vadd.f32 %v361, %v364
          %v366 = vsub.f32 1.1, %v298
          %v367 = vmin.f32 %v366, 0.0
          %v368 = vmul.f32 %v367, %v367
          %v369 = vsub.f32 1.1, %v302
          %v370 = vmin.f32 %v369, 0.0
          %v371 = vmul.f32 %v370, %v370
          %v372 = vsub.f32 1.1, %v349
          %v373 = vmin.f32 %v372, 0.0
          %v374 = vmul.f32 %v373, %v373
          %v375 = vadd.f32 %v368, %v371
          %v376 = vadd.f32 %v375, %v374
          %v377 = vrsqrt.pop %v376
          %v378 = vmul.f32 %v376, %v377
          %vm379 = vcmp.eq.f32.partialorder %v376, inf
          %v380 = vsel %vm379, %v376, %v378
          %vm381 = vcmp.eq.f32.partialorder %v376, 0.0
          %v382 = vand.u32 %v376, 2147483648
          %v383 = vsel %vm381, %v382, %v380
          %v384 = vmin.f32 %v366, %v369
          %v385 = vmin.f32 %v384, %v372
          %v386 = vmax.f32 %v385, 0.0
          %v387 = vsub.f32 %v386, %v383
          %v388 = vmax.f32 %v365, %v387
          %v389 = vsub.f32 %v278, 6.0
          %v390 = vand.u32 2147483647, %v389
          %v391 = vsub.f32 0.6, %v390
          %v392 = vmin.f32 %v391, 0.0
          %v393 = vmul.f32 %v392, %v392
          %v394 = vsub.f32 0.6, %v302
          %v395 = vmin.f32 %v394, 0.0
          %v396 = vmul.f32 %v395, %v395
          %v397 = vsub.f32 0.6, %v349
          %v398 = vmin.f32 %v397, 0.0
          %v399 = vmul.f32 %v398, %v398
          %v400 = vadd.f32 %v393, %v396
          %v401 = vadd.f32 %v400, %v399
          %v402 = vrsqrt.pop %v401
          %v403 = vmul.f32 %v401, %v402
          %vm404 = vcmp.eq.f32.partialorder %v401, inf
          %v405 = vsel %vm404, %v401, %v403
          %vm406 = vcmp.eq.f32.partialorder %v401, 0.0
          %v407 = vand.u32 %v401, 2147483648
          %v408 = vsel %vm406, %v407, %v405
          %v409 = vmin.f32 %v391, %v394
          %v410 = vmin.f32 %v409, %v397
          %v411 = vmax.f32 %v410, 0.0
          %v412 = vsub.f32 %v411, %v408
          %v413 = vmax.f32 %v388, %v412
          %v414 = vsub.f32 %v278, 3.0
          %v415 = vand.u32 2147483647, %v414
          %v416 = vsub.f32 0.6, %v415
          %v417 = vmin.f32 %v416, 0.0
          %v418 = vmul.f32 %v417, %v417
          %v419 = vadd.f32 %v418, %v396
          %v420 = vadd.f32 %v419, %v399
          %v421 = vrsqrt.pop %v420
          %v422 = vmul.f32 %v420, %v421
          %vm423 = vcmp.eq.f32.partialorder %v420, inf
          %v424 = vsel %vm423, %v420, %v422
          %vm425 = vcmp.eq.f32.partialorder %v420, 0.0
          %v426 = vand.u32 %v420, 2147483648
          %v427 = vsel %vm425, %v426, %v424
          %v428 = vmin.f32 %v416, %v394
          %v429 = vmin.f32 %v428, %v397
          %v430 = vmax.f32 %v429, 0.0
          %v431 = vsub.f32 %v430, %v427
          %v432 = vmax.f32 %v413, %v431
          %v433 = vsub.f32 0.6, %v298
          %v434 = vmin.f32 %v433, 0.0
          %v435 = vmul.f32 %v434, %v434
          %v436 = vsub.f32 %v280, 1.5
          %v437 = vand.u32 2147483647, %v436
          %v438 = vsub.f32 0.6, %v437
          %v439 = vmin.f32 %v438, 0.0
          %v440 = vmul.f32 %v439, %v439
          %v441 = vadd.f32 %v435, %v440
          %v442 = vadd.f32 %v441, %v399
          %v443 = vrsqrt.pop %v442
          %v444 = vmul.f32 %v442, %v443
          %vm445 = vcmp.eq.f32.partialorder %v442, inf
          %v446 = vsel %vm445, %v442, %v444
          %vm447 = vcmp.eq.f32.partialorder %v442, 0.0
          %v448 = vand.u32 %v442, 2147483648
          %v449 = vsel %vm447, %v448, %v446
          %v450 = vmin.f32 %v433, %v438
          %v451 = vmin.f32 %v450, %v397
          %v452 = vmax.f32 %v451, 0.0
          %v453 = vsub.f32 %v452, %v449
          %v454 = vmax.f32 %v432, %v453
          %v455 = vsub.f32 %v280, -1.5
          %v456 = vand.u32 2147483647, %v455
          %v457 = vsub.f32 0.6, %v456
          %v458 = vmin.f32 %v457, 0.0
          %v459 = vmul.f32 %v458, %v458
          %v460 = vadd.f32 %v435, %v459
          %v461 = vadd.f32 %v460, %v399
          %v462 = vrsqrt.pop %v461
          %v463 = vmul.f32 %v461, %v462
          %vm464 = vcmp.eq.f32.partialorder %v461, inf
          %v465 = vsel %vm464, %v461, %v463
          %vm466 = vcmp.eq.f32.partialorder %v461, 0.0
          %v467 = vand.u32 %v461, 2147483648
          %v468 = vsel %vm466, %v467, %v465
          %v469 = vmin.f32 %v433, %v457
          %v470 = vmin.f32 %v469, %v397
          %v471 = vmax.f32 %v470, 0.0
          %v472 = vsub.f32 %v471, %v468
          %v473 = vmax.f32 %v454, %v472
          %v474 = vsub.f32 %v282, 1.5
          %v475 = vand.u32 2147483647, %v474
          %v476 = vsub.f32 0.6, %v475
          %v477 = vmin.f32 %v476, 0.0
          %v478 = vmul.f32 %v477, %v477
          %v479 = vadd.f32 %v435, %v396
          %v480 = vadd.f32 %v479, %v478
          %v481 = vrsqrt.pop %v480
          %v482 = vmul.f32 %v480, %v481
          %vm483 = vcmp.eq.f32.partialorder %v480, inf
          %v484 = vsel %vm483, %v480, %v482
          %vm485 = vcmp.eq.f32.partialorder %v480, 0.0
          %v486 = vand.u32 %v480, 2147483648
          %v487 = vsel %vm485, %v486, %v484
          %v488 = vmin.f32 %v433, %v394
          %v489 = vmin.f32 %v488, %v476
          %v490 = vmax.f32 %v489, 0.0
          %v491 = vsub.f32 %v490, %v487
          %v492 = vmax.f32 %v473, %v491
          %v493 = vsub.f32 %v282, -1.5
          %v494 = vand.u32 2147483647, %v493
          %v495 = vsub.f32 0.6, %v494
          %v496 = vmin.f32 %v495, 0.0
          %v497 = vmul.f32 %v496, %v496
          %v498 = vadd.f32 %v479, %v497
          %v499 = vrsqrt.pop %v498
          %v500 = vmul.f32 %v498, %v499
          %vm501 = vcmp.eq.f32.partialorder %v498, inf
          %v502 = vsel %vm501, %v498, %v500
          %vm503 = vcmp.eq.f32.partialorder %v498, 0.0
          %v504 = vand.u32 %v498, 2147483648
          %v505 = vsel %vm503, %v504, %v502
          %v506 = vmin.f32 %v488, %v495
          %v507 = vmax.f32 %v506, 0.0
          %v508 = vsub.f32 %v507, %v505
          %v509 = vmax.f32 %v492, %v508
          %v510 = vmin.f32 %v342, %v509
          %v511 = vsub.f32 %v295, 1.0
          %v512 = vmin.f32 %v510, %v511
          %v513 = vsub.f32 0.9, %v295
          %v514 = vmax.f32 %v512, %v513
          %v515 = vsub.f32 %v278, 5.5
          %v516 = vand.u32 2147483647, %v515
          %v517 = vsub.f32 0.4, %v516
          %v518 = vmin.f32 %v517, 0.0
          %v519 = vmul.f32 %v518, %v518
          %v520 = vsub.f32 0.4, %v302
          %v521 = vmin.f32 %v520, 0.0
          %v522 = vmul.f32 %v521, %v521
          %v523 = vsub.f32 0.4, %v349
          %v524 = vmin.f32 %v523, 0.0
          %v525 = vmul.f32 %v524, %v524
          %v526 = vadd.f32 %v519, %v522
          %v527 = vadd.f32 %v526, %v525
          %v528 = vrsqrt.pop %v527
          %v529 = vmul.f32 %v527, %v528
          %vm530 = vcmp.eq.f32.partialorder %v527, inf
          %v531 = vsel %vm530, %v527, %v529
          %vm532 = vcmp.eq.f32.partialorder %v527, 0.0
          %v533 = vand.u32 %v527, 2147483648
          %v534 = vsel %vm532, %v533, %v531
          %v535 = vmin.f32 %v517, %v520
          %v536 = vmin.f32 %v535, %v523
          %v537 = vmax.f32 %v536, 0.0
          %v538 = vsub.f32 %v537, %v534
          %v539 = vmax.f32 %v514, %v538
          %v540 = vsub.f32 %v278, 3.5
          %v541 = vand.u32 2147483647, %v540
          %v542 = vsub.f32 0.4, %v541
          %v543 = vmin.f32 %v542, 0.0
          %v544 = vmul.f32 %v543, %v543
          %v545 = vadd.f32 %v544, %v522
          %v546 = vadd.f32 %v545, %v525
          %v547 = vrsqrt.pop %v546
          %v548 = vmul.f32 %v546, %v547
          %vm549 = vcmp.eq.f32.partialorder %v546, inf
          %v550 = vsel %vm549, %v546, %v548
          %vm551 = vcmp.eq.f32.partialorder %v546, 0.0
          %v552 = vand.u32 %v546, 2147483648
          %v553 = vsel %vm551, %v552, %v550
          %v554 = vmin.f32 %v542, %v520
          %v555 = vmin.f32 %v554, %v523
          %v556 = vmax.f32 %v555, 0.0
          %v557 = vsub.f32 %v556, %v553
          %v558 = vmax.f32 %v539, %v557
          %v559 = vsub.f32 0.4, %v298
          %v560 = vmin.f32 %v559, 0.0
          %v561 = vmul.f32 %v560, %v560
          %v562 = vsub.f32 %v280, 1.0
          %v563 = vand.u32 2147483647, %v562
          %v564 = vsub.f32 0.4, %v563
          %v565 = vmin.f32 %v564, 0.0
          %v566 = vmul.f32 %v565, %v565
          %v567 = vadd.f32 %v561, %v566
          %v568 = vadd.f32 %v567, %v525
          %v569 = vrsqrt.pop %v568
          %v570 = vmul.f32 %v568, %v569
          %vm571 = vcmp.eq.f32.partialorder %v568, inf
          %v572 = vsel %vm571, %v568, %v570
          %vm573 = vcmp.eq.f32.partialorder %v568, 0.0
          %v574 = vand.u32 %v568, 2147483648
          %v575 = vsel %vm573, %v574, %v572
          %v576 = vmin.f32 %v559, %v564
          %v577 = vmin.f32 %v576, %v523
          %v578 = vmax.f32 %v577, 0.0
          %v579 = vsub.f32 %v578, %v575
          %v580 = vmax.f32 %v558, %v579
          %v581 = vsub.f32 %v280, -1.0
          %v582 = vand.u32 2147483647, %v581
          %v583 = vsub.f32 0.4, %v582
          %v584 = vmin.f32 %v583, 0.0
          %v585 = vmul.f32 %v584, %v584
          %v586 = vadd.f32 %v561, %v585
          %v587 = vadd.f32 %v586, %v525
          %v588 = vrsqrt.pop %v587
          %v589 = vmul.f32 %v587, %v588
          %vm590 = vcmp.eq.f32.partialorder %v587, inf
          %v591 = vsel %vm590, %v587, %v589
          %vm592 = vcmp.eq.f32.partialorder %v587, 0.0
          %v593 = vand.u32 %v587, 2147483648
          %v594 = vsel %vm592, %v593, %v591
          %v595 = vmin.f32 %v559, %v583
          %v596 = vmin.f32 %v595, %v523
          %v597 = vmax.f32 %v596, 0.0
          %v598 = vsub.f32 %v597, %v594
          %v599 = vmax.f32 %v580, %v598
          %v600 = vsub.f32 %v282, 1.0
          %v601 = vand.u32 2147483647, %v600
          %v602 = vsub.f32 0.4, %v601
          %v603 = vmin.f32 %v602, 0.0
          %v604 = vmul.f32 %v603, %v603
          %v605 = vadd.f32 %v561, %v522
          %v606 = vadd.f32 %v605, %v604
          %v607 = vrsqrt.pop %v606
          %v608 = vmul.f32 %v606, %v607
          %vm609 = vcmp.eq.f32.partialorder %v606, inf
          %v610 = vsel %vm609, %v606, %v608
          %vm611 = vcmp.eq.f32.partialorder %v606, 0.0
          %v612 = vand.u32 %v606, 2147483648
          %v613 = vsel %vm611, %v612, %v610
          %v614 = vmin.f32 %v559, %v520
          %v615 = vmin.f32 %v614, %v602
          %v616 = vmax.f32 %v615, 0.0
          %v617 = vsub.f32 %v616, %v613
          %v618 = vmax.f32 %v599, %v617
          %v619 = vsub.f32 %v282, -1.0
          %v620 = vand.u32 2147483647, %v619
          %v621 = vsub.f32 0.4, %v620
          %v622 = vmin.f32 %v621, 0.0
          %v623 = vmul.f32 %v622, %v622
          %v624 = vadd.f32 %v605, %v623
          %v625 = vrsqrt.pop %v624
          %v626 = vmul.f32 %v624, %v625
          %vm627 = vcmp.eq.f32.partialorder %v624, inf
          %v628 = vsel %vm627, %v624, %v626
          %vm629 = vcmp.eq.f32.partialorder %v624, 0.0
          %v630 = vand.u32 %v624, 2147483648
          %v631 = vsel %vm629, %v630, %v628
          %v632 = vmin.f32 %v614, %v621
          %v633 = vmax.f32 %v632, 0.0
          %v634 = vsub.f32 %v633, %v631
          %v635 = vmax.f32 %v618, %v634
          %v636 = vsub.f32 %v298, 0.8
          %v637 = vmax.f32 %v636, 0.0
          %v638 = vmul.f32 %v637, %v637
          %v639 = vsub.f32 %v302, 0.8
          %v640 = vmax.f32 %v639, 0.0
          %v641 = vmul.f32 %v640, %v640
          %v642 = vsub.f32 %v349, 0.8
          %v643 = vmax.f32 %v642, 0.0
          %v644 = vmul.f32 %v643, %v643
          %v645 = vadd.f32 %v638, %v641
          %v646 = vadd.f32 %v645, %v644
          %v647 = vrsqrt.pop %v646
          %v648 = vmul.f32 %v646, %v647
          %vm649 = vcmp.eq.f32.partialorder %v646, inf
          %v650 = vsel %vm649, %v646, %v648
          %vm651 = vcmp.eq.f32.partialorder %v646, 0.0
          %v652 = vand.u32 %v646, 2147483648
          %v653 = vsel %vm651, %v652, %v650
          %v654 = vmax.f32 %v636, %v639
          %v655 = vmax.f32 %v654, %v642
          %v656 = vmin.f32 %v655, 0.0
          %v657 = vadd.f32 %v653, %v656
          %v658 = vmin.f32 %v635, %v657
          %v659 = vsub.f32 %v278, -4.5
          %v660 = vmul.f32 %v659, %v659
          %v661 = vadd.f32 %v660, %v285
          %v662 = vadd.f32 %v661, %v287
          %v663 = vrsqrt.pop %v662
          %v664 = vmul.f32 %v662, %v663
          %vm665 = vcmp.eq.f32.partialorder %v662, inf
          %v666 = vsel %vm665, %v662, %v664
          %vm667 = vcmp.eq.f32.partialorder %v662, 0.0
          %v668 = vand.u32 %v662, 2147483648
          %v669 = vsel %vm667, %v668, %v666
          %v670 = vsub.f32 %v669, 1.6
          %v671 = vsub.f32 1.45, %v669
          %v672 = vand.u32 2147483647, %v659
          %v673 = vsub.f32 1.7, %v672
          %v674 = vmin.f32 %v673, 0.0
          %v675 = vmul.f32 %v674, %v674
          %v676 = vadd.f32 %v675, %v305
          %v677 = vadd.f32 %v676, %v310
          %v678 = vrsqrt.pop %v677
          %v679 = vmul.f32 %v677, %v678
          %vm680 = vcmp.eq.f32.partialorder %v677, inf
          %v681 = vsel %vm680, %v677, %v679
          %vm682 = vcmp.eq.f32.partialorder %v677, 0.0
          %v683 = vand.u32 %v677, 2147483648
          %v684 = vsel %vm682, %v683, %v681
          %v685 = vmin.f32 %v673, %v303
          %v686 = vmin.f32 %v685, %v308
          %v687 = vmax.f32 %v686, 0.0
          %v688 = vsub.f32 %v687, %v684
          %v689 = vadd.f32 %v671, %v688
          %v690 = vadd.f32 %v676, %v329
          %v691 = vrsqrt.pop %v690
          %v692 = vmul.f32 %v690, %v691
          %vm693 = vcmp.eq.f32.partialorder %v690, inf
          %v694 = vsel %vm693, %v690, %v692
          %vm695 = vcmp.eq.f32.partialorder %v690, 0.0
          %v696 = vand.u32 %v690, 2147483648
          %v697 = vsel %vm695, %v696, %v694
          %v698 = vmin.f32 %v685, %v327
          %v699 = vmax.f32 %v698, 0.0
          %v700 = vsub.f32 %v699, %v697
          %v701 = vmax.f32 %v689, %v700
          %v702 = vmax.f32 %v670, %v701
          %v703 = vsub.f32 %v672, 1.2
          %v704 = vmax.f32 %v703, 0.0
          %v705 = vmul.f32 %v704, %v704
          %v706 = vadd.f32 %v705, %v348
          %v707 = vadd.f32 %v706, %v352
          %v708 = vrsqrt.pop %v707
          %v709 = vmul.f32 %v707, %v708
          %vm710 = vcmp.eq.f32.partialorder %v707, inf
          %v711 = vsel %vm710, %v707, %v709
          %vm712 = vcmp.eq.f32.partialorder %v707, 0.0
          %v713 = vand.u32 %v707, 2147483648
          %v714 = vsel %vm712, %v713, %v711
          %v715 = vmax.f32 %v703, %v346
          %v716 = vmax.f32 %v715, %v350
          %v717 = vmin.f32 %v716, 0.0
          %v718 = vadd.f32 %v714, %v717
          %v719 = vsub.f32 1.1, %v672
          %v720 = vmin.f32 %v719, 0.0
          %v721 = vmul.f32 %v720, %v720
          %v722 = vadd.f32 %v721, %v371
          %v723 = vadd.f32 %v722, %v374
          %v724 = vrsqrt.pop %v723
          %v725 = vmul.f32 %v723, %v724
          %vm726 = vcmp.eq.f32.partialorder %v723, inf
          %v727 = vsel %vm726, %v723, %v725
          %vm728 = vcmp.eq.f32.partialorder %v723, 0.0
          %v729 = vand.u32 %v723, 2147483648
          %v730 = vsel %vm728, %v729, %v727
          %v731 = vmin.f32 %v719, %v369
          %v732 = vmin.f32 %v731, %v372
          %v733 = vmax.f32 %v732, 0.0
          %v734 = vsub.f32 %v733, %v730
          %v735 = vmax.f32 %v718, %v734
          %v736 = vsub.f32 %v278, -3.0
          %v737 = vand.u32 2147483647, %v736
          %v738 = vsub.f32 0.6, %v737
          %v739 = vmin.f32 %v738, 0.0
          %v740 = vmul.f32 %v739, %v739
          %v741 = vadd.f32 %v740, %v396
          %v742 = vadd.f32 %v741, %v399
          %v743 = vrsqrt.pop %v742
          %v744 = vmul.f32 %v742, %v743
          %vm745 = vcmp.eq.f32.partialorder %v742, inf
          %v746 = vsel %vm745, %v742, %v744
          %vm747 = vcmp.eq.f32.partialorder %v742, 0.0
          %v748 = vand.u32 %v742, 2147483648
          %v749 = vsel %vm747, %v748, %v746
          %v750 = vmin.f32 %v738, %v394
          %v751 = vmin.f32 %v750, %v397
          %v752 = vmax.f32 %v751, 0.0
          %v753 = vsub.f32 %v752, %v749
          %v754 = vmax.f32 %v735, %v753
          %v755 = vsub.f32 %v278, -6.0
          %v756 = vand.u32 2147483647, %v755
          %v757 = vsub.f32 0.6, %v756
          %v758 = vmin.f32 %v757, 0.0
          %v759 = vmul.f32 %v758, %v758
          %v760 = vadd.f32 %v759, %v396
          %v761 = vadd.f32 %v760, %v399
          %v762 = vrsqrt.pop %v761
          %v763 = vmul.f32 %v761, %v762
          %vm764 = vcmp.eq.f32.partialorder %v761, inf
          %v765 = vsel %vm764, %v761, %v763
          %vm766 = vcmp.eq.f32.partialorder %v761, 0.0
          %v767 = vand.u32 %v761, 2147483648
          %v768 = vsel %vm766, %v767, %v765
          %v769 = vmin.f32 %v757, %v394
          %v770 = vmin.f32 %v769, %v397
          %v771 = vmax.f32 %v770, 0.0
          %v772 = vsub.f32 %v771, %v768
          %v773 = vmax.f32 %v754, %v772
          %v774 = vsub.f32 0.6, %v672
          %v775 = vmin.f32 %v774, 0.0
          %v776 = vmul.f32 %v775, %v775
          %v777 = vadd.f32 %v776, %v440
          %v778 = vadd.f32 %v777, %v399
          %v779 = vrsqrt.pop %v778
          %v780 = vmul.f32 %v778, %v779
          %vm781 = vcmp.eq.f32.partialorder %v778, inf
          %v782 = vsel %vm781, %v778, %v780
          %vm783 = vcmp.eq.f32.partialorder %v778, 0.0
          %v784 = vand.u32 %v778, 2147483648
          %v785 = vsel %vm783, %v784, %v782
          %v786 = vmin.f32 %v774, %v438
          %v787 = vmin.f32 %v786, %v397
          %v788 = vmax.f32 %v787, 0.0
          %v789 = vsub.f32 %v788, %v785
          %v790 = vmax.f32 %v773, %v789
          %v791 = vadd.f32 %v776, %v459
          %v792 = vadd.f32 %v791, %v399
          %v793 = vrsqrt.pop %v792
          %v794 = vmul.f32 %v792, %v793
          %vm795 = vcmp.eq.f32.partialorder %v792, inf
          %v796 = vsel %vm795, %v792, %v794
          %vm797 = vcmp.eq.f32.partialorder %v792, 0.0
          %v798 = vand.u32 %v792, 2147483648
          %v799 = vsel %vm797, %v798, %v796
          %v800 = vmin.f32 %v774, %v457
          %v801 = vmin.f32 %v800, %v397
          %v802 = vmax.f32 %v801, 0.0
          %v803 = vsub.f32 %v802, %v799
          %v804 = vmax.f32 %v790, %v803
          %v805 = vadd.f32 %v776, %v396
          %v806 = vadd.f32 %v805, %v478
          %v807 = vrsqrt.pop %v806
          %v808 = vmul.f32 %v806, %v807
          %vm809 = vcmp.eq.f32.partialorder %v806, inf
          %v810 = vsel %vm809, %v806, %v808
          %vm811 = vcmp.eq.f32.partialorder %v806, 0.0
          %v812 = vand.u32 %v806, 2147483648
          %v813 = vsel %vm811, %v812, %v810
          %v814 = vmin.f32 %v774, %v394
          %v815 = vmin.f32 %v814, %v476
          %v816 = vmax.f32 %v815, 0.0
          %v817 = vsub.f32 %v816, %v813
          %v818 = vmax.f32 %v804, %v817
          %v819 = vadd.f32 %v805, %v497
          %v820 = vrsqrt.pop %v819
          %v821 = vmul.f32 %v819, %v820
          %vm822 = vcmp.eq.f32.partialorder %v819, inf
          %v823 = vsel %vm822, %v819, %v821
          %vm824 = vcmp.eq.f32.partialorder %v819, 0.0
          %v825 = vand.u32 %v819, 2147483648
          %v826 = vsel %vm824, %v825, %v823
          %v827 = vmin.f32 %v814, %v495
          %v828 = vmax.f32 %v827, 0.0
          %v829 = vsub.f32 %v828, %v826
          %v830 = vmax.f32 %v818, %v829
          %v831 = vmin.f32 %v702, %v830
          %v832 = vsub.f32 %v669, 1.0
          %v833 = vmin.f32 %v831, %v832
          %v834 = vsub.f32 0.9, %v669
          %v835 = vmax.f32 %v833, %v834
          %v836 = vsub.f32 %v278, -3.5
          %v837 = vand.u32 2147483647, %v836
          %v838 = vsub.f32 0.4, %v837
          %v839 = vmin.f32 %v838, 0.0
          %v840 = vmul.f32 %v839, %v839
          %v841 = vadd.f32 %v840, %v522
          %v842 = vadd.f32 %v841, %v525
          %v843 = vrsqrt.pop %v842
          %v844 = vmul.f32 %v842, %v843
          %vm845 = vcmp.eq.f32.partialorder %v842, inf
          %v846 = vsel %vm845, %v842, %v844
          %vm847 = vcmp.eq.f32.partialorder %v842, 0.0
          %v848 = vand.u32 %v842, 2147483648
          %v849 = vsel %vm847, %v848, %v846
          %v850 = vmin.f32 %v838, %v520
          %v851 = vmin.f32 %v850, %v523
          %v852 = vmax.f32 %v851, 0.0
          %v853 = vsub.f32 %v852, %v849
          %v854 = vmax.f32 %v835, %v853
          %v855 = vsub.f32 %v278, -5.5
          %v856 = vand.u32 2147483647, %v855
          %v857 = vsub.f32 0.4, %v856
          %v858 = vmin.f32 %v857, 0.0
          %v859 = vmul.f32 %v858, %v858
          %v860 = vadd.f32 %v859, %v522
          %v861 = vadd.f32 %v860, %v525
          %v862 = vrsqrt.pop %v861
          %v863 = vmul.f32 %v861, %v862
          %vm864 = vcmp.eq.f32.partialorder %v861, inf
          %v865 = vsel %vm864, %v861, %v863
          %vm866 = vcmp.eq.f32.partialorder %v861, 0.0
          %v867 = vand.u32 %v861, 2147483648
          %v868 = vsel %vm866, %v867, %v865
          %v869 = vmin.f32 %v857, %v520
          %v870 = vmin.f32 %v869, %v523
          %v871 = vmax.f32 %v870, 0.0
          %v872 = vsub.f32 %v871, %v868
          %v873 = vmax.f32 %v854, %v872
          %v874 = vsub.f32 0.4, %v672
          %v875 = vmin.f32 %v874, 0.0
          %v876 = vmul.f32 %v875, %v875
          %v877 = vadd.f32 %v876, %v566
          %v878 = vadd.f32 %v877, %v525
          %v879 = vrsqrt.pop %v878
          %v880 = vmul.f32 %v878, %v879
          %vm881 = vcmp.eq.f32.partialorder %v878, inf
          %v882 = vsel %vm881, %v878, %v880
          %vm883 = vcmp.eq.f32.partialorder %v878, 0.0
          %v884 = vand.u32 %v878, 2147483648
          %v885 = vsel %vm883, %v884, %v882
          %v886 = vmin.f32 %v874, %v564
          %v887 = vmin.f32 %v886, %v523
          %v888 = vmax.f32 %v887, 0.0
          %v889 = vsub.f32 %v888, %v885
          %v890 = vmax.f32 %v873, %v889
          %v891 = vadd.f32 %v876, %v585
          %v892 = vadd.f32 %v891, %v525
          %v893 = vrsqrt.pop %v892
          %v894 = vmul.f32 %v892, %v893
          %vm895 = vcmp.eq.f32.partialorder %v892, inf
          %v896 = vsel %vm895, %v892, %v894
          %vm897 = vcmp.eq.f32.partialorder %v892, 0.0
          %v898 = vand.u32 %v892, 2147483648
          %v899 = vsel %vm897, %v898, %v896
          %v900 = vmin.f32 %v874, %v583
          %v901 = vmin.f32 %v900, %v523
          %v902 = vmax.f32 %v901, 0.0
          %v903 = vsub.f32 %v902, %v899
          %v904 = vmax.f32 %v890, %v903
          %v905 = vadd.f32 %v876, %v522
          %v906 = vadd.f32 %v905, %v604
          %v907 = vrsqrt.pop %v906
          %v908 = vmul.f32 %v906, %v907
          %vm909 = vcmp.eq.f32.partialorder %v906, inf
          %v910 = vsel %vm909, %v906, %v908
          %vm911 = vcmp.eq.f32.partialorder %v906, 0.0
          %v912 = vand.u32 %v906, 2147483648
          %v913 = vsel %vm911, %v912, %v910
          %v914 = vmin.f32 %v874, %v520
          %v915 = vmin.f32 %v914, %v602
          %v916 = vmax.f32 %v915, 0.0
          %v917 = vsub.f32 %v916, %v913
          %v918 = vmax.f32 %v904, %v917
          %v919 = vadd.f32 %v905, %v623
          %v920 = vrsqrt.pop %v919
          %v921 = vmul.f32 %v919, %v920
          %vm922 = vcmp.eq.f32.partialorder %v919, inf
          %v923 = vsel %vm922, %v919, %v921
          %vm924 = vcmp.eq.f32.partialorder %v919, 0.0
          %v925 = vand.u32 %v919, 2147483648
          %v926 = vsel %vm924, %v925, %v923
          %v927 = vmin.f32 %v914, %v621
          %v928 = vmax.f32 %v927, 0.0
          %v929 = vsub.f32 %v928, %v926
          %v930 = vmax.f32 %v918, %v929
          %v931 = vsub.f32 %v672, 0.8
          %v932 = vmax.f32 %v931, 0.0
          %v933 = vmul.f32 %v932, %v932
          %v934 = vadd.f32 %v933, %v641
          %v935 = vadd.f32 %v934, %v644
          %v936 = vrsqrt.pop %v935
          %v937 = vmul.f32 %v935, %v936
          %vm938 = vcmp.eq.f32.partialorder %v935, inf
          %v939 = vsel %vm938, %v935, %v937
          %vm940 = vcmp.eq.f32.partialorder %v935, 0.0
          %v941 = vand.u32 %v935, 2147483648
          %v942 = vsel %vm940, %v941, %v939
          %v943 = vmax.f32 %v931, %v639
          %v944 = vmax.f32 %v943, %v642
          %v945 = vmin.f32 %v944, 0.0
          %v946 = vadd.f32 %v942, %v945
          %v947 = vmin.f32 %v930, %v946
          %v948 = vmin.f32 %v658, %v947
          %v949 = vsub.f32 %v280, 4.5
          %v950 = vmul.f32 %v278, %v278
          %v951 = vmul.f32 %v949, %v949
          %v952 = vadd.f32 %v950, %v951
          %v953 = vadd.f32 %v952, %v287
          %v954 = vrsqrt.pop %v953
          %v955 = vmul.f32 %v953, %v954
          %vm956 = vcmp.eq.f32.partialorder %v953, inf
          %v957 = vsel %vm956, %v953, %v955
          %vm958 = vcmp.eq.f32.partialorder %v953, 0.0
          %v959 = vand.u32 %v953, 2147483648
          %v960 = vsel %vm958, %v959, %v957
          %v961 = vsub.f32 %v960, 1.6
          %v962 = vsub.f32 1.45, %v960
          %v963 = vand.u32 2147483647, %v278
          %v964 = vsub.f32 1.7, %v963
          %v965 = vmin.f32 %v964, 0.0
          %v966 = vmul.f32 %v965, %v965
          %v967 = vand.u32 2147483647, %v949
          %v968 = vsub.f32 1.7, %v967
          %v969 = vmin.f32 %v968, 0.0
          %v970 = vmul.f32 %v969, %v969
          %v971 = vadd.f32 %v966, %v970
          %v972 = vadd.f32 %v971, %v310
          %v973 = vrsqrt.pop %v972
          %v974 = vmul.f32 %v972, %v973
          %vm975 = vcmp.eq.f32.partialorder %v972, inf
          %v976 = vsel %vm975, %v972, %v974
          %vm977 = vcmp.eq.f32.partialorder %v972, 0.0
          %v978 = vand.u32 %v972, 2147483648
          %v979 = vsel %vm977, %v978, %v976
          %v980 = vmin.f32 %v964, %v968
          %v981 = vmin.f32 %v980, %v308
          %v982 = vmax.f32 %v981, 0.0
          %v983 = vsub.f32 %v982, %v979
          %v984 = vadd.f32 %v962, %v983
          %v985 = vadd.f32 %v971, %v329
          %v986 = vrsqrt.pop %v985
          %v987 = vmul.f32 %v985, %v986
          %vm988 = vcmp.eq.f32.partialorder %v985, inf
          %v989 = vsel %vm988, %v985, %v987
          %vm990 = vcmp.eq.f32.partialorder %v985, 0.0
          %v991 = vand.u32 %v985, 2147483648
          %v992 = vsel %vm990, %v991, %v989
          %v993 = vmin.f32 %v980, %v327
          %v994 = vmax.f32 %v993, 0.0
          %v995 = vsub.f32 %v994, %v992
          %v996 = vmax.f32 %v984, %v995
          %v997 = vmax.f32 %v961, %v996
          %v998 = vsub.f32 %v963, 1.2
          %v999 = vmax.f32 %v998, 0.0
          %v1000 = vmul.f32 %v999, %v999
          %v1001 = vsub.f32 %v967, 1.2
          %v1002 = vmax.f32 %v1001, 0.0
          %v1003 = vmul.f32 %v1002, %v1002
          %v1004 = vadd.f32 %v1000, %v1003
          %v1005 = vadd.f32 %v1004, %v352
          %v1006 = vrsqrt.pop %v1005
          %v1007 = vmul.f32 %v1005, %v1006
          %vm1008 = vcmp.eq.f32.partialorder %v1005, inf
          %v1009 = vsel %vm1008, %v1005, %v1007
          %vm1010 = vcmp.eq.f32.partialorder %v1005, 0.0
          %v1011 = vand.u32 %v1005, 2147483648
          %v1012 = vsel %vm1010, %v1011, %v1009
          %v1013 = vmax.f32 %v998, %v1001
          %v1014 = vmax.f32 %v1013, %v350
          %v1015 = vmin.f32 %v1014, 0.0
          %v1016 = vadd.f32 %v1012, %v1015
          %v1017 = vsub.f32 1.1, %v963
          %v1018 = vmin.f32 %v1017, 0.0
          %v1019 = vmul.f32 %v1018, %v1018
          %v1020 = vsub.f32 1.1, %v967
          %v1021 = vmin.f32 %v1020, 0.0
          %v1022 = vmul.f32 %v1021, %v1021
          %v1023 = vadd.f32 %v1019, %v1022
          %v1024 = vadd.f32 %v1023, %v374
          %v1025 = vrsqrt.pop %v1024
          %v1026 = vmul.f32 %v1024, %v1025
          %vm1027 = vcmp.eq.f32.partialorder %v1024, inf
          %v1028 = vsel %vm1027, %v1024, %v1026
          %vm1029 = vcmp.eq.f32.partialorder %v1024, 0.0
          %v1030 = vand.u32 %v1024, 2147483648
          %v1031 = vsel %vm1029, %v1030, %v1028
          %v1032 = vmin.f32 %v1017, %v1020
          %v1033 = vmin.f32 %v1032, %v372
          %v1034 = vmax.f32 %v1033, 0.0
          %v1035 = vsub.f32 %v1034, %v1031
          %v1036 = vmax.f32 %v1016, %v1035
          %v1037 = vsub.f32 %v278, 1.5
          %v1038 = vand.u32 2147483647, %v1037
          %v1039 = vsub.f32 0.6, %v1038
          %v1040 = vmin.f32 %v1039, 0.0
          %v1041 = vmul.f32 %v1040, %v1040
          %v1042 = vsub.f32 0.6, %v967
          %v1043 = vmin.f32 %v1042, 0.0
          %v1044 = vmul.f32 %v1043, %v1043
          %v1045 = vadd.f32 %v1041, %v1044
          %v1046 = vadd.f32 %v1045, %v399
          %v1047 = vrsqrt.pop %v1046
          %v1048 = vmul.f32 %v1046, %v1047
          %vm1049 = vcmp.eq.f32.partialorder %v1046, inf
          %v1050 = vsel %vm1049, %v1046, %v1048
          %vm1051 = vcmp.eq.f32.partialorder %v1046, 0.0
          %v1052 = vand.u32 %v1046, 2147483648
          %v1053 = vsel %vm1051, %v1052, %v1050
          %v1054 = vmin.f32 %v1039, %v1042
          %v1055 = vmin.f32 %v1054, %v397
          %v1056 = vmax.f32 %v1055, 0.0
          %v1057 = vsub.f32 %v1056, %v1053
          %v1058 = vmax.f32 %v1036, %v1057
          %v1059 = vsub.f32 %v278, -1.5
          %v1060 = vand.u32 2147483647, %v1059
          %v1061 = vsub.f32 0.6, %v1060
          %v1062 = vmin.f32 %v1061, 0.0
          %v1063 = vmul.f32 %v1062, %v1062
          %v1064 = vadd.f32 %v1063, %v1044
          %v1065 = vadd.f32 %v1064, %v399
          %v1066 = vrsqrt.pop %v1065
          %v1067 = vmul.f32 %v1065, %v1066
          %vm1068 = vcmp.eq.f32.partialorder %v1065, inf
          %v1069 = vsel %vm1068, %v1065, %v1067
          %vm1070 = vcmp.eq.f32.partialorder %v1065, 0.0
          %v1071 = vand.u32 %v1065, 2147483648
          %v1072 = vsel %vm1070, %v1071, %v1069
          %v1073 = vmin.f32 %v1061, %v1042
          %v1074 = vmin.f32 %v1073, %v397
          %v1075 = vmax.f32 %v1074, 0.0
          %v1076 = vsub.f32 %v1075, %v1072
          %v1077 = vmax.f32 %v1058, %v1076
          %v1078 = vsub.f32 0.6, %v963
          %v1079 = vmin.f32 %v1078, 0.0
          %v1080 = vmul.f32 %v1079, %v1079
          %v1081 = vsub.f32 %v280, 6.0
          %v1082 = vand.u32 2147483647, %v1081
          %v1083 = vsub.f32 0.6, %v1082
          %v1084 = vmin.f32 %v1083, 0.0
          %v1085 = vmul.f32 %v1084, %v1084
          %v1086 = vadd.f32 %v1080, %v1085
          %v1087 = vadd.f32 %v1086, %v399
          %v1088 = vrsqrt.pop %v1087
          %v1089 = vmul.f32 %v1087, %v1088
          %vm1090 = vcmp.eq.f32.partialorder %v1087, inf
          %v1091 = vsel %vm1090, %v1087, %v1089
          %vm1092 = vcmp.eq.f32.partialorder %v1087, 0.0
          %v1093 = vand.u32 %v1087, 2147483648
          %v1094 = vsel %vm1092, %v1093, %v1091
          %v1095 = vmin.f32 %v1078, %v1083
          %v1096 = vmin.f32 %v1095, %v397
          %v1097 = vmax.f32 %v1096, 0.0
          %v1098 = vsub.f32 %v1097, %v1094
          %v1099 = vmax.f32 %v1077, %v1098
          %v1100 = vsub.f32 %v280, 3.0
          %v1101 = vand.u32 2147483647, %v1100
          %v1102 = vsub.f32 0.6, %v1101
          %v1103 = vmin.f32 %v1102, 0.0
          %v1104 = vmul.f32 %v1103, %v1103
          %v1105 = vadd.f32 %v1080, %v1104
          %v1106 = vadd.f32 %v1105, %v399
          %v1107 = vrsqrt.pop %v1106
          %v1108 = vmul.f32 %v1106, %v1107
          %vm1109 = vcmp.eq.f32.partialorder %v1106, inf
          %v1110 = vsel %vm1109, %v1106, %v1108
          %vm1111 = vcmp.eq.f32.partialorder %v1106, 0.0
          %v1112 = vand.u32 %v1106, 2147483648
          %v1113 = vsel %vm1111, %v1112, %v1110
          %v1114 = vmin.f32 %v1078, %v1102
          %v1115 = vmin.f32 %v1114, %v397
          %v1116 = vmax.f32 %v1115, 0.0
          %v1117 = vsub.f32 %v1116, %v1113
          %v1118 = vmax.f32 %v1099, %v1117
          %v1119 = vadd.f32 %v1080, %v1044
          %v1120 = vadd.f32 %v1119, %v478
          %v1121 = vrsqrt.pop %v1120
          %v1122 = vmul.f32 %v1120, %v1121
          %vm1123 = vcmp.eq.f32.partialorder %v1120, inf
          %v1124 = vsel %vm1123, %v1120, %v1122
          %vm1125 = vcmp.eq.f32.partialorder %v1120, 0.0
          %v1126 = vand.u32 %v1120, 2147483648
          %v1127 = vsel %vm1125, %v1126, %v1124
          %v1128 = vmin.f32 %v1078, %v1042
          %v1129 = vmin.f32 %v1128, %v476
          %v1130 = vmax.f32 %v1129, 0.0
          %v1131 = vsub.f32 %v1130, %v1127
          %v1132 = vmax.f32 %v1118, %v1131
          %v1133 = vadd.f32 %v1119, %v497
          %v1134 = vrsqrt.pop %v1133
          %v1135 = vmul.f32 %v1133, %v1134
          %vm1136 = vcmp.eq.f32.partialorder %v1133, inf
          %v1137 = vsel %vm1136, %v1133, %v1135
          %vm1138 = vcmp.eq.f32.partialorder %v1133, 0.0
          %v1139 = vand.u32 %v1133, 2147483648
          %v1140 = vsel %vm1138, %v1139, %v1137
          %v1141 = vmin.f32 %v1128, %v495
          %v1142 = vmax.f32 %v1141, 0.0
          %v1143 = vsub.f32 %v1142, %v1140
          %v1144 = vmax.f32 %v1132, %v1143
          %v1145 = vmin.f32 %v997, %v1144
          %v1146 = vsub.f32 %v960, 1.0
          %v1147 = vmin.f32 %v1145, %v1146
          %v1148 = vsub.f32 0.9, %v960
          %v1149 = vmax.f32 %v1147, %v1148
          %v1150 = vsub.f32 %v278, 1.0
          %v1151 = vand.u32 2147483647, %v1150
          %v1152 = vsub.f32 0.4, %v1151
          %v1153 = vmin.f32 %v1152, 0.0
          %v1154 = vmul.f32 %v1153, %v1153
          %v1155 = vsub.f32 0.4, %v967
          %v1156 = vmin.f32 %v1155, 0.0
          %v1157 = vmul.f32 %v1156, %v1156
          %v1158 = vadd.f32 %v1154, %v1157
          %v1159 = vadd.f32 %v1158, %v525
          %v1160 = vrsqrt.pop %v1159
          %v1161 = vmul.f32 %v1159, %v1160
          %vm1162 = vcmp.eq.f32.partialorder %v1159, inf
          %v1163 = vsel %vm1162, %v1159, %v1161
          %vm1164 = vcmp.eq.f32.partialorder %v1159, 0.0
          %v1165 = vand.u32 %v1159, 2147483648
          %v1166 = vsel %vm1164, %v1165, %v1163
          %v1167 = vmin.f32 %v1152, %v1155
          %v1168 = vmin.f32 %v1167, %v523
          %v1169 = vmax.f32 %v1168, 0.0
          %v1170 = vsub.f32 %v1169, %v1166
          %v1171 = vmax.f32 %v1149, %v1170
          %v1172 = vsub.f32 %v278, -1.0
          %v1173 = vand.u32 2147483647, %v1172
          %v1174 = vsub.f32 0.4, %v1173
          %v1175 = vmin.f32 %v1174, 0.0
          %v1176 = vmul.f32 %v1175, %v1175
          %v1177 = vadd.f32 %v1176, %v1157
          %v1178 = vadd.f32 %v1177, %v525
          %v1179 = vrsqrt.pop %v1178
          %v1180 = vmul.f32 %v1178, %v1179
          %vm1181 = vcmp.eq.f32.partialorder %v1178, inf
          %v1182 = vsel %vm1181, %v1178, %v1180
          %vm1183 = vcmp.eq.f32.partialorder %v1178, 0.0
          %v1184 = vand.u32 %v1178, 2147483648
          %v1185 = vsel %vm1183, %v1184, %v1182
          %v1186 = vmin.f32 %v1174, %v1155
          %v1187 = vmin.f32 %v1186, %v523
          %v1188 = vmax.f32 %v1187, 0.0
          %v1189 = vsub.f32 %v1188, %v1185
          %v1190 = vmax.f32 %v1171, %v1189
          %v1191 = vsub.f32 0.4, %v963
          %v1192 = vmin.f32 %v1191, 0.0
          %v1193 = vmul.f32 %v1192, %v1192
          %v1194 = vsub.f32 %v280, 5.5
          %v1195 = vand.u32 2147483647, %v1194
          %v1196 = vsub.f32 0.4, %v1195
          %v1197 = vmin.f32 %v1196, 0.0
          %v1198 = vmul.f32 %v1197, %v1197
          %v1199 = vadd.f32 %v1193, %v1198
          %v1200 = vadd.f32 %v1199, %v525
          %v1201 = vrsqrt.pop %v1200
          %v1202 = vmul.f32 %v1200, %v1201
          %vm1203 = vcmp.eq.f32.partialorder %v1200, inf
          %v1204 = vsel %vm1203, %v1200, %v1202
          %vm1205 = vcmp.eq.f32.partialorder %v1200, 0.0
          %v1206 = vand.u32 %v1200, 2147483648
          %v1207 = vsel %vm1205, %v1206, %v1204
          %v1208 = vmin.f32 %v1191, %v1196
          %v1209 = vmin.f32 %v1208, %v523
          %v1210 = vmax.f32 %v1209, 0.0
          %v1211 = vsub.f32 %v1210, %v1207
          %v1212 = vmax.f32 %v1190, %v1211
          %v1213 = vsub.f32 %v280, 3.5
          %v1214 = vand.u32 2147483647, %v1213
          %v1215 = vsub.f32 0.4, %v1214
          %v1216 = vmin.f32 %v1215, 0.0
          %v1217 = vmul.f32 %v1216, %v1216
          %v1218 = vadd.f32 %v1193, %v1217
          %v1219 = vadd.f32 %v1218, %v525
          %v1220 = vrsqrt.pop %v1219
          %v1221 = vmul.f32 %v1219, %v1220
          %vm1222 = vcmp.eq.f32.partialorder %v1219, inf
          %v1223 = vsel %vm1222, %v1219, %v1221
          %vm1224 = vcmp.eq.f32.partialorder %v1219, 0.0
          %v1225 = vand.u32 %v1219, 2147483648
          %v1226 = vsel %vm1224, %v1225, %v1223
          %v1227 = vmin.f32 %v1191, %v1215
          %v1228 = vmin.f32 %v1227, %v523
          %v1229 = vmax.f32 %v1228, 0.0
          %v1230 = vsub.f32 %v1229, %v1226
          %v1231 = vmax.f32 %v1212, %v1230
          %v1232 = vadd.f32 %v1193, %v1157
          %v1233 = vadd.f32 %v1232, %v604
          %v1234 = vrsqrt.pop %v1233
          %v1235 = vmul.f32 %v1233, %v1234
          %vm1236 = vcmp.eq.f32.partialorder %v1233, inf
          %v1237 = vsel %vm1236, %v1233, %v1235
          %vm1238 = vcmp.eq.f32.partialorder %v1233, 0.0
          %v1239 = vand.u32 %v1233, 2147483648
          %v1240 = vsel %vm1238, %v1239, %v1237
          %v1241 = vmin.f32 %v1191, %v1155
          %v1242 = vmin.f32 %v1241, %v602
          %v1243 = vmax.f32 %v1242, 0.0
          %v1244 = vsub.f32 %v1243, %v1240
          %v1245 = vmax.f32 %v1231, %v1244
          %v1246 = vadd.f32 %v1232, %v623
          %v1247 = vrsqrt.pop %v1246
          %v1248 = vmul.f32 %v1246, %v1247
          %vm1249 = vcmp.eq.f32.partialorder %v1246, inf
          %v1250 = vsel %vm1249, %v1246, %v1248
          %vm1251 = vcmp.eq.f32.partialorder %v1246, 0.0
          %v1252 = vand.u32 %v1246, 2147483648
          %v1253 = vsel %vm1251, %v1252, %v1250
          %v1254 = vmin.f32 %v1241, %v621
          %v1255 = vmax.f32 %v1254, 0.0
          %v1256 = vsub.f32 %v1255, %v1253
          %v1257 = vmax.f32 %v1245, %v1256
          %v1258 = vsub.f32 %v963, 0.8
          %v1259 = vmax.f32 %v1258, 0.0
          %v1260 = vmul.f32 %v1259, %v1259
          %v1261 = vsub.f32 %v967, 0.8
          %v1262 = vmax.f32 %v1261, 0.0
          %v1263 = vmul.f32 %v1262, %v1262
          %v1264 = vadd.f32 %v1260, %v1263
          %v1265 = vadd.f32 %v1264, %v644
          %v1266 = vrsqrt.pop %v1265
          %v1267 = vmul.f32 %v1265, %v1266
          %vm1268 = vcmp.eq.f32.partialorder %v1265, inf
          %v1269 = vsel %vm1268, %v1265, %v1267
          %vm1270 = vcmp.eq.f32.partialorder %v1265, 0.0
          %v1271 = vand.u32 %v1265, 2147483648
          %v1272 = vsel %vm1270, %v1271, %v1269
          %v1273 = vmax.f32 %v1258, %v1261
          %v1274 = vmax.f32 %v1273, %v642
          %v1275 = vmin.f32 %v1274, 0.0
          %v1276 = vadd.f32 %v1272, %v1275
          %v1277 = vmin.f32 %v1257, %v1276
          %v1278 = vmin.f32 %v948, %v1277
          %v1279 = vsub.f32 %v280, -4.5
          %v1280 = vmul.f32 %v1279, %v1279
          %v1281 = vadd.f32 %v950, %v1280
          %v1282 = vadd.f32 %v1281, %v287
          %v1283 = vrsqrt.pop %v1282
          %v1284 = vmul.f32 %v1282, %v1283
          %vm1285 = vcmp.eq.f32.partialorder %v1282, inf
          %v1286 = vsel %vm1285, %v1282, %v1284
          %vm1287 = vcmp.eq.f32.partialorder %v1282, 0.0
          %v1288 = vand.u32 %v1282, 2147483648
          %v1289 = vsel %vm1287, %v1288, %v1286
          %v1290 = vsub.f32 %v1289, 1.6
          %v1291 = vsub.f32 1.45, %v1289
          %v1292 = vand.u32 2147483647, %v1279
          %v1293 = vsub.f32 1.7, %v1292
          %v1294 = vmin.f32 %v1293, 0.0
          %v1295 = vmul.f32 %v1294, %v1294
          %v1296 = vadd.f32 %v966, %v1295
          %v1297 = vadd.f32 %v1296, %v310
          %v1298 = vrsqrt.pop %v1297
          %v1299 = vmul.f32 %v1297, %v1298
          %vm1300 = vcmp.eq.f32.partialorder %v1297, inf
          %v1301 = vsel %vm1300, %v1297, %v1299
          %vm1302 = vcmp.eq.f32.partialorder %v1297, 0.0
          %v1303 = vand.u32 %v1297, 2147483648
          %v1304 = vsel %vm1302, %v1303, %v1301
          %v1305 = vmin.f32 %v964, %v1293
          %v1306 = vmin.f32 %v1305, %v308
          %v1307 = vmax.f32 %v1306, 0.0
          %v1308 = vsub.f32 %v1307, %v1304
          %v1309 = vadd.f32 %v1291, %v1308
          %v1310 = vadd.f32 %v1296, %v329
          %v1311 = vrsqrt.pop %v1310
          %v1312 = vmul.f32 %v1310, %v1311
          %vm1313 = vcmp.eq.f32.partialorder %v1310, inf
          %v1314 = vsel %vm1313, %v1310, %v1312
          %vm1315 = vcmp.eq.f32.partialorder %v1310, 0.0
          %v1316 = vand.u32 %v1310, 2147483648
          %v1317 = vsel %vm1315, %v1316, %v1314
          %v1318 = vmin.f32 %v1305, %v327
          %v1319 = vmax.f32 %v1318, 0.0
          %v1320 = vsub.f32 %v1319, %v1317
          %v1321 = vmax.f32 %v1309, %v1320
          %v1322 = vmax.f32 %v1290, %v1321
          %v1323 = vsub.f32 %v1292, 1.2
          %v1324 = vmax.f32 %v1323, 0.0
          %v1325 = vmul.f32 %v1324, %v1324
          %v1326 = vadd.f32 %v1000, %v1325
          %v1327 = vadd.f32 %v1326, %v352
          %v1328 = vrsqrt.pop %v1327
          %v1329 = vmul.f32 %v1327, %v1328
          %vm1330 = vcmp.eq.f32.partialorder %v1327, inf
          %v1331 = vsel %vm1330, %v1327, %v1329
          %vm1332 = vcmp.eq.f32.partialorder %v1327, 0.0
          %v1333 = vand.u32 %v1327, 2147483648
          %v1334 = vsel %vm1332, %v1333, %v1331
          %v1335 = vmax.f32 %v998, %v1323
          %v1336 = vmax.f32 %v1335, %v350
          %v1337 = vmin.f32 %v1336, 0.0
          %v1338 = vadd.f32 %v1334, %v1337
          %v1339 = vsub.f32 1.1, %v1292
          %v1340 = vmin.f32 %v1339, 0.0
          %v1341 = vmul.f32 %v1340, %v1340
          %v1342 = vadd.f32 %v1019, %v1341
          %v1343 = vadd.f32 %v1342, %v374
          %v1344 = vrsqrt.pop %v1343
          %v1345 = vmul.f32 %v1343, %v1344
          %vm1346 = vcmp.eq.f32.partialorder %v1343, inf
          %v1347 = vsel %vm1346, %v1343, %v1345
          %vm1348 = vcmp.eq.f32.partialorder %v1343, 0.0
          %v1349 = vand.u32 %v1343, 2147483648
          %v1350 = vsel %vm1348, %v1349, %v1347
          %v1351 = vmin.f32 %v1017, %v1339
          %v1352 = vmin.f32 %v1351, %v372
          %v1353 = vmax.f32 %v1352, 0.0
          %v1354 = vsub.f32 %v1353, %v1350
          %v1355 = vmax.f32 %v1338, %v1354
          %v1356 = vsub.f32 0.6, %v1292
          %v1357 = vmin.f32 %v1356, 0.0
          %v1358 = vmul.f32 %v1357, %v1357
          %v1359 = vadd.f32 %v1041, %v1358
          %v1360 = vadd.f32 %v1359, %v399
          %v1361 = vrsqrt.pop %v1360
          %v1362 = vmul.f32 %v1360, %v1361
          %vm1363 = vcmp.eq.f32.partialorder %v1360, inf
          %v1364 = vsel %vm1363, %v1360, %v1362
          %vm1365 = vcmp.eq.f32.partialorder %v1360, 0.0
          %v1366 = vand.u32 %v1360, 2147483648
          %v1367 = vsel %vm1365, %v1366, %v1364
          %v1368 = vmin.f32 %v1039, %v1356
          %v1369 = vmin.f32 %v1368, %v397
          %v1370 = vmax.f32 %v1369, 0.0
          %v1371 = vsub.f32 %v1370, %v1367
          %v1372 = vmax.f32 %v1355, %v1371
          %v1373 = vadd.f32 %v1063, %v1358
          %v1374 = vadd.f32 %v1373, %v399
          %v1375 = vrsqrt.pop %v1374
          %v1376 = vmul.f32 %v1374, %v1375
          %vm1377 = vcmp.eq.f32.partialorder %v1374, inf
          %v1378 = vsel %vm1377, %v1374, %v1376
          %vm1379 = vcmp.eq.f32.partialorder %v1374, 0.0
          %v1380 = vand.u32 %v1374, 2147483648
          %v1381 = vsel %vm1379, %v1380, %v1378
          %v1382 = vmin.f32 %v1061, %v1356
          %v1383 = vmin.f32 %v1382, %v397
          %v1384 = vmax.f32 %v1383, 0.0
          %v1385 = vsub.f32 %v1384, %v1381
          %v1386 = vmax.f32 %v1372, %v1385
          %v1387 = vsub.f32 %v280, -3.0
          %v1388 = vand.u32 2147483647, %v1387
          %v1389 = vsub.f32 0.6, %v1388
          %v1390 = vmin.f32 %v1389, 0.0
          %v1391 = vmul.f32 %v1390, %v1390
          %v1392 = vadd.f32 %v1080, %v1391
          %v1393 = vadd.f32 %v1392, %v399
          %v1394 = vrsqrt.pop %v1393
          %v1395 = vmul.f32 %v1393, %v1394
          %vm1396 = vcmp.eq.f32.partialorder %v1393, inf
          %v1397 = vsel %vm1396, %v1393, %v1395
          %vm1398 = vcmp.eq.f32.partialorder %v1393, 0.0
          %v1399 = vand.u32 %v1393, 2147483648
          %v1400 = vsel %vm1398, %v1399, %v1397
          %v1401 = vmin.f32 %v1078, %v1389
          %v1402 = vmin.f32 %v1401, %v397
          %v1403 = vmax.f32 %v1402, 0.0
          %v1404 = vsub.f32 %v1403, %v1400
          %v1405 = vmax.f32 %v1386, %v1404
          %v1406 = vsub.f32 %v280, -6.0
          %v1407 = vand.u32 2147483647, %v1406
          %v1408 = vsub.f32 0.6, %v1407
          %v1409 = vmin.f32 %v1408, 0.0
          %v1410 = vmul.f32 %v1409, %v1409
          %v1411 = vadd.f32 %v1080, %v1410
          %v1412 = vadd.f32 %v1411, %v399
          %v1413 = vrsqrt.pop %v1412
          %v1414 = vmul.f32 %v1412, %v1413
          %vm1415 = vcmp.eq.f32.partialorder %v1412, inf
          %v1416 = vsel %vm1415, %v1412, %v1414
          %vm1417 = vcmp.eq.f32.partialorder %v1412, 0.0
          %v1418 = vand.u32 %v1412, 2147483648
          %v1419 = vsel %vm1417, %v1418, %v1416
          %v1420 = vmin.f32 %v1078, %v1408
          %v1421 = vmin.f32 %v1420, %v397
          %v1422 = vmax.f32 %v1421, 0.0
          %v1423 = vsub.f32 %v1422, %v1419
          %v1424 = vmax.f32 %v1405, %v1423
          %v1425 = vadd.f32 %v1080, %v1358
          %v1426 = vadd.f32 %v1425, %v478
          %v1427 = vrsqrt.pop %v1426
          %v1428 = vmul.f32 %v1426, %v1427
          %vm1429 = vcmp.eq.f32.partialorder %v1426, inf
          %v1430 = vsel %vm1429, %v1426, %v1428
          %vm1431 = vcmp.eq.f32.partialorder %v1426, 0.0
          %v1432 = vand.u32 %v1426, 2147483648
          %v1433 = vsel %vm1431, %v1432, %v1430
          %v1434 = vmin.f32 %v1078, %v1356
          %v1435 = vmin.f32 %v1434, %v476
          %v1436 = vmax.f32 %v1435, 0.0
          %v1437 = vsub.f32 %v1436, %v1433
          %v1438 = vmax.f32 %v1424, %v1437
          %v1439 = vadd.f32 %v1425, %v497
          %v1440 = vrsqrt.pop %v1439
          %v1441 = vmul.f32 %v1439, %v1440
          %vm1442 = vcmp.eq.f32.partialorder %v1439, inf
          %v1443 = vsel %vm1442, %v1439, %v1441
          %vm1444 = vcmp.eq.f32.partialorder %v1439, 0.0
          %v1445 = vand.u32 %v1439, 2147483648
          %v1446 = vsel %vm1444, %v1445, %v1443
          %v1447 = vmin.f32 %v1434, %v495
          %v1448 = vmax.f32 %v1447, 0.0
          %v1449 = vsub.f32 %v1448, %v1446
          %v1450 = vmax.f32 %v1438, %v1449
          %v1451 = vmin.f32 %v1322, %v1450
          %v1452 = vsub.f32 %v1289, 1.0
          %v1453 = vmin.f32 %v1451, %v1452
          %v1454 = vsub.f32 0.9, %v1289
          %v1455 = vmax.f32 %v1453, %v1454
          %v1456 = vsub.f32 0.4, %v1292
          %v1457 = vmin.f32 %v1456, 0.0
          %v1458 = vmul.f32 %v1457, %v1457
          %v1459 = vadd.f32 %v1154, %v1458
          %v1460 = vadd.f32 %v1459, %v525
          %v1461 = vrsqrt.pop %v1460
          %v1462 = vmul.f32 %v1460, %v1461
          %vm1463 = vcmp.eq.f32.partialorder %v1460, inf
          %v1464 = vsel %vm1463, %v1460, %v1462
          %vm1465 = vcmp.eq.f32.partialorder %v1460, 0.0
          %v1466 = vand.u32 %v1460, 2147483648
          %v1467 = vsel %vm1465, %v1466, %v1464
          %v1468 = vmin.f32 %v1152, %v1456
          %v1469 = vmin.f32 %v1468, %v523
          %v1470 = vmax.f32 %v1469, 0.0
          %v1471 = vsub.f32 %v1470, %v1467
          %v1472 = vmax.f32 %v1455, %v1471
          %v1473 = vadd.f32 %v1176, %v1458
          %v1474 = vadd.f32 %v1473, %v525
          %v1475 = vrsqrt.pop %v1474
          %v1476 = vmul.f32 %v1474, %v1475
          %vm1477 = vcmp.eq.f32.partialorder %v1474, inf
          %v1478 = vsel %vm1477, %v1474, %v1476
          %vm1479 = vcmp.eq.f32.partialorder %v1474, 0.0
          %v1480 = vand.u32 %v1474, 2147483648
          %v1481 = vsel %vm1479, %v1480, %v1478
          %v1482 = vmin.f32 %v1174, %v1456
          %v1483 = vmin.f32 %v1482, %v523
          %v1484 = vmax.f32 %v1483, 0.0
          %v1485 = vsub.f32 %v1484, %v1481
          %v1486 = vmax.f32 %v1472, %v1485
          %v1487 = vsub.f32 %v280, -3.5
          %v1488 = vand.u32 2147483647, %v1487
          %v1489 = vsub.f32 0.4, %v1488
          %v1490 = vmin.f32 %v1489, 0.0
          %v1491 = vmul.f32 %v1490, %v1490
          %v1492 = vadd.f32 %v1193, %v1491
          %v1493 = vadd.f32 %v1492, %v525
          %v1494 = vrsqrt.pop %v1493
          %v1495 = vmul.f32 %v1493, %v1494
          %vm1496 = vcmp.eq.f32.partialorder %v1493, inf
          %v1497 = vsel %vm1496, %v1493, %v1495
          %vm1498 = vcmp.eq.f32.partialorder %v1493, 0.0
          %v1499 = vand.u32 %v1493, 2147483648
          %v1500 = vsel %vm1498, %v1499, %v1497
          %v1501 = vmin.f32 %v1191, %v1489
          %v1502 = vmin.f32 %v1501, %v523
          %v1503 = vmax.f32 %v1502, 0.0
          %v1504 = vsub.f32 %v1503, %v1500
          %v1505 = vmax.f32 %v1486, %v1504
          %v1506 = vsub.f32 %v280, -5.5
          %v1507 = vand.u32 2147483647, %v1506
          %v1508 = vsub.f32 0.4, %v1507
          %v1509 = vmin.f32 %v1508, 0.0
          %v1510 = vmul.f32 %v1509, %v1509
          %v1511 = vadd.f32 %v1193, %v1510
          %v1512 = vadd.f32 %v1511, %v525
          %v1513 = vrsqrt.pop %v1512
          %v1514 = vmul.f32 %v1512, %v1513
          %vm1515 = vcmp.eq.f32.partialorder %v1512, inf
          %v1516 = vsel %vm1515, %v1512, %v1514
          %vm1517 = vcmp.eq.f32.partialorder %v1512, 0.0
          %v1518 = vand.u32 %v1512, 2147483648
          %v1519 = vsel %vm1517, %v1518, %v1516
          %v1520 = vmin.f32 %v1191, %v1508
          %v1521 = vmin.f32 %v1520, %v523
          %v1522 = vmax.f32 %v1521, 0.0
          %v1523 = vsub.f32 %v1522, %v1519
          %v1524 = vmax.f32 %v1505, %v1523
          %v1525 = vadd.f32 %v1193, %v1458
          %v1526 = vadd.f32 %v1525, %v604
          %v1527 = vrsqrt.pop %v1526
          %v1528 = vmul.f32 %v1526, %v1527
          %vm1529 = vcmp.eq.f32.partialorder %v1526, inf
          %v1530 = vsel %vm1529, %v1526, %v1528
          %vm1531 = vcmp.eq.f32.partialorder %v1526, 0.0
          %v1532 = vand.u32 %v1526, 2147483648
          %v1533 = vsel %vm1531, %v1532, %v1530
          %v1534 = vmin.f32 %v1191, %v1456
          %v1535 = vmin.f32 %v1534, %v602
          %v1536 = vmax.f32 %v1535, 0.0
          %v1537 = vsub.f32 %v1536, %v1533
          %v1538 = vmax.f32 %v1524, %v1537
          %v1539 = vadd.f32 %v1525, %v623
          %v1540 = vrsqrt.pop %v1539
          %v1541 = vmul.f32 %v1539, %v1540
          %vm1542 = vcmp.eq.f32.partialorder %v1539, inf
          %v1543 = vsel %vm1542, %v1539, %v1541
          %vm1544 = vcmp.eq.f32.partialorder %v1539, 0.0
          %v1545 = vand.u32 %v1539, 2147483648
          %v1546 = vsel %vm1544, %v1545, %v1543
          %v1547 = vmin.f32 %v1534, %v621
          %v1548 = vmax.f32 %v1547, 0.0
          %v1549 = vsub.f32 %v1548, %v1546
          %v1550 = vmax.f32 %v1538, %v1549
          %v1551 = vsub.f32 %v1292, 0.8
          %v1552 = vmax.f32 %v1551, 0.0
          %v1553 = vmul.f32 %v1552, %v1552
          %v1554 = vadd.f32 %v1260, %v1553
          %v1555 = vadd.f32 %v1554, %v644
          %v1556 = vrsqrt.pop %v1555
          %v1557 = vmul.f32 %v1555, %v1556
          %vm1558 = vcmp.eq.f32.partialorder %v1555, inf
          %v1559 = vsel %vm1558, %v1555, %v1557
          %vm1560 = vcmp.eq.f32.partialorder %v1555, 0.0
          %v1561 = vand.u32 %v1555, 2147483648
          %v1562 = vsel %vm1560, %v1561, %v1559
          %v1563 = vmax.f32 %v1258, %v1551
          %v1564 = vmax.f32 %v1563, %v642
          %v1565 = vmin.f32 %v1564, 0.0
          %v1566 = vadd.f32 %v1562, %v1565
          %v1567 = vmin.f32 %v1550, %v1566
          %v1568 = vmin.f32 %v1278, %v1567
          %v1569 = vadd.f32 %v950, %v285
          %v1570 = vadd.f32 %v1569, %v287
          %v1571 = vrsqrt.pop %v1570
          %v1572 = vmul.f32 %v1570, %v1571
          %vm1573 = vcmp.eq.f32.partialorder %v1570, inf
          %v1574 = vsel %vm1573, %v1570, %v1572
          %vm1575 = vcmp.eq.f32.partialorder %v1570, 0.0
          %v1576 = vand.u32 %v1570, 2147483648
          %v1577 = vsel %vm1575, %v1576, %v1574
          %v1578 = vsub.f32 %v1577, 1.6
          %v1579 = vsub.f32 1.45, %v1577
          %v1580 = vadd.f32 %v966, %v305
          %v1581 = vadd.f32 %v1580, %v310
          %v1582 = vrsqrt.pop %v1581
          %v1583 = vmul.f32 %v1581, %v1582
          %vm1584 = vcmp.eq.f32.partialorder %v1581, inf
          %v1585 = vsel %vm1584, %v1581, %v1583
          %vm1586 = vcmp.eq.f32.partialorder %v1581, 0.0
          %v1587 = vand.u32 %v1581, 2147483648
          %v1588 = vsel %vm1586, %v1587, %v1585
          %v1589 = vmin.f32 %v964, %v303
          %v1590 = vmin.f32 %v1589, %v308
          %v1591 = vmax.f32 %v1590, 0.0
          %v1592 = vsub.f32 %v1591, %v1588
          %v1593 = vadd.f32 %v1579, %v1592
          %v1594 = vadd.f32 %v1580, %v329
          %v1595 = vrsqrt.pop %v1594
          %v1596 = vmul.f32 %v1594, %v1595
          %vm1597 = vcmp.eq.f32.partialorder %v1594, inf
          %v1598 = vsel %vm1597, %v1594, %v1596
          %vm1599 = vcmp.eq.f32.partialorder %v1594, 0.0
          %v1600 = vand.u32 %v1594, 2147483648
          %v1601 = vsel %vm1599, %v1600, %v1598
          %v1602 = vmin.f32 %v1589, %v327
          %v1603 = vmax.f32 %v1602, 0.0
          %v1604 = vsub.f32 %v1603, %v1601
          %v1605 = vmax.f32 %v1593, %v1604
          %v1606 = vmax.f32 %v1578, %v1605
          %v1607 = vadd.f32 %v1000, %v348
          %v1608 = vadd.f32 %v1607, %v352
          %v1609 = vrsqrt.pop %v1608
          %v1610 = vmul.f32 %v1608, %v1609
          %vm1611 = vcmp.eq.f32.partialorder %v1608, inf
          %v1612 = vsel %vm1611, %v1608, %v1610
          %vm1613 = vcmp.eq.f32.partialorder %v1608, 0.0
          %v1614 = vand.u32 %v1608, 2147483648
          %v1615 = vsel %vm1613, %v1614, %v1612
          %v1616 = vmax.f32 %v998, %v346
          %v1617 = vmax.f32 %v1616, %v350
          %v1618 = vmin.f32 %v1617, 0.0
          %v1619 = vadd.f32 %v1615, %v1618
          %v1620 = vadd.f32 %v1019, %v371
          %v1621 = vadd.f32 %v1620, %v374
          %v1622 = vrsqrt.pop %v1621
          %v1623 = vmul.f32 %v1621, %v1622
          %vm1624 = vcmp.eq.f32.partialorder %v1621, inf
          %v1625 = vsel %vm1624, %v1621, %v1623
          %vm1626 = vcmp.eq.f32.partialorder %v1621, 0.0
          %v1627 = vand.u32 %v1621, 2147483648
          %v1628 = vsel %vm1626, %v1627, %v1625
          %v1629 = vmin.f32 %v1017, %v369
          %v1630 = vmin.f32 %v1629, %v372
          %v1631 = vmax.f32 %v1630, 0.0
          %v1632 = vsub.f32 %v1631, %v1628
          %v1633 = vmax.f32 %v1619, %v1632
          %v1634 = vadd.f32 %v1041, %v396
          %v1635 = vadd.f32 %v1634, %v399
          %v1636 = vrsqrt.pop %v1635
          %v1637 = vmul.f32 %v1635, %v1636
          %vm1638 = vcmp.eq.f32.partialorder %v1635, inf
          %v1639 = vsel %vm1638, %v1635, %v1637
          %vm1640 = vcmp.eq.f32.partialorder %v1635, 0.0
          %v1641 = vand.u32 %v1635, 2147483648
          %v1642 = vsel %vm1640, %v1641, %v1639
          %v1643 = vmin.f32 %v1039, %v394
          %v1644 = vmin.f32 %v1643, %v397
          %v1645 = vmax.f32 %v1644, 0.0
          %v1646 = vsub.f32 %v1645, %v1642
          %v1647 = vmax.f32 %v1633, %v1646
          %v1648 = vadd.f32 %v1063, %v396
          %v1649 = vadd.f32 %v1648, %v399
          %v1650 = vrsqrt.pop %v1649
          %v1651 = vmul.f32 %v1649, %v1650
          %vm1652 = vcmp.eq.f32.partialorder %v1649, inf
          %v1653 = vsel %vm1652, %v1649, %v1651
          %vm1654 = vcmp.eq.f32.partialorder %v1649, 0.0
          %v1655 = vand.u32 %v1649, 2147483648
          %v1656 = vsel %vm1654, %v1655, %v1653
          %v1657 = vmin.f32 %v1061, %v394
          %v1658 = vmin.f32 %v1657, %v397
          %v1659 = vmax.f32 %v1658, 0.0
          %v1660 = vsub.f32 %v1659, %v1656
          %v1661 = vmax.f32 %v1647, %v1660
          %v1662 = vadd.f32 %v1080, %v440
          %v1663 = vadd.f32 %v1662, %v399
          %v1664 = vrsqrt.pop %v1663
          %v1665 = vmul.f32 %v1663, %v1664
          %vm1666 = vcmp.eq.f32.partialorder %v1663, inf
          %v1667 = vsel %vm1666, %v1663, %v1665
          %vm1668 = vcmp.eq.f32.partialorder %v1663, 0.0
          %v1669 = vand.u32 %v1663, 2147483648
          %v1670 = vsel %vm1668, %v1669, %v1667
          %v1671 = vmin.f32 %v1078, %v438
          %v1672 = vmin.f32 %v1671, %v397
          %v1673 = vmax.f32 %v1672, 0.0
          %v1674 = vsub.f32 %v1673, %v1670
          %v1675 = vmax.f32 %v1661, %v1674
          %v1676 = vadd.f32 %v1080, %v459
          %v1677 = vadd.f32 %v1676, %v399
          %v1678 = vrsqrt.pop %v1677
          %v1679 = vmul.f32 %v1677, %v1678
          %vm1680 = vcmp.eq.f32.partialorder %v1677, inf
          %v1681 = vsel %vm1680, %v1677, %v1679
          %vm1682 = vcmp.eq.f32.partialorder %v1677, 0.0
          %v1683 = vand.u32 %v1677, 2147483648
          %v1684 = vsel %vm1682, %v1683, %v1681
          %v1685 = vmin.f32 %v1078, %v457
          %v1686 = vmin.f32 %v1685, %v397
          %v1687 = vmax.f32 %v1686, 0.0
          %v1688 = vsub.f32 %v1687, %v1684
          %v1689 = vmax.f32 %v1675, %v1688
          %v1690 = vadd.f32 %v1080, %v396
          %v1691 = vadd.f32 %v1690, %v478
          %v1692 = vrsqrt.pop %v1691
          %v1693 = vmul.f32 %v1691, %v1692
          %vm1694 = vcmp.eq.f32.partialorder %v1691, inf
          %v1695 = vsel %vm1694, %v1691, %v1693
          %vm1696 = vcmp.eq.f32.partialorder %v1691, 0.0
          %v1697 = vand.u32 %v1691, 2147483648
          %v1698 = vsel %vm1696, %v1697, %v1695
          %v1699 = vmin.f32 %v1078, %v394
          %v1700 = vmin.f32 %v1699, %v476
          %v1701 = vmax.f32 %v1700, 0.0
          %v1702 = vsub.f32 %v1701, %v1698
          %v1703 = vmax.f32 %v1689, %v1702
          %v1704 = vadd.f32 %v1690, %v497
          %v1705 = vrsqrt.pop %v1704
          %v1706 = vmul.f32 %v1704, %v1705
          %vm1707 = vcmp.eq.f32.partialorder %v1704, inf
          %v1708 = vsel %vm1707, %v1704, %v1706
          %vm1709 = vcmp.eq.f32.partialorder %v1704, 0.0
          %v1710 = vand.u32 %v1704, 2147483648
          %v1711 = vsel %vm1709, %v1710, %v1708
          %v1712 = vmin.f32 %v1699, %v495
          %v1713 = vmax.f32 %v1712, 0.0
          %v1714 = vsub.f32 %v1713, %v1711
          %v1715 = vmax.f32 %v1703, %v1714
          %v1716 = vmin.f32 %v1606, %v1715
          %v1717 = vsub.f32 %v1577, 1.0
          %v1718 = vmin.f32 %v1716, %v1717
          %v1719 = vsub.f32 0.9, %v1577
          %v1720 = vmax.f32 %v1718, %v1719
          %v1721 = vadd.f32 %v1154, %v522
          %v1722 = vadd.f32 %v1721, %v525
          %v1723 = vrsqrt.pop %v1722
          %v1724 = vmul.f32 %v1722, %v1723
          %vm1725 = vcmp.eq.f32.partialorder %v1722, inf
          %v1726 = vsel %vm1725, %v1722, %v1724
          %vm1727 = vcmp.eq.f32.partialorder %v1722, 0.0
          %v1728 = vand.u32 %v1722, 2147483648
          %v1729 = vsel %vm1727, %v1728, %v1726
          %v1730 = vmin.f32 %v1152, %v520
          %v1731 = vmin.f32 %v1730, %v523
          %v1732 = vmax.f32 %v1731, 0.0
          %v1733 = vsub.f32 %v1732, %v1729
          %v1734 = vmax.f32 %v1720, %v1733
          %v1735 = vadd.f32 %v1176, %v522
          %v1736 = vadd.f32 %v1735, %v525
          %v1737 = vrsqrt.pop %v1736
          %v1738 = vmul.f32 %v1736, %v1737
          %vm1739 = vcmp.eq.f32.partialorder %v1736, inf
          %v1740 = vsel %vm1739, %v1736, %v1738
          %vm1741 = vcmp.eq.f32.partialorder %v1736, 0.0
          %v1742 = vand.u32 %v1736, 2147483648
          %v1743 = vsel %vm1741, %v1742, %v1740
          %v1744 = vmin.f32 %v1174, %v520
          %v1745 = vmin.f32 %v1744, %v523
          %v1746 = vmax.f32 %v1745, 0.0
          %v1747 = vsub.f32 %v1746, %v1743
          %v1748 = vmax.f32 %v1734, %v1747
          %v1749 = vadd.f32 %v1193, %v566
          %v1750 = vadd.f32 %v1749, %v525
          %v1751 = vrsqrt.pop %v1750
          %v1752 = vmul.f32 %v1750, %v1751
          %vm1753 = vcmp.eq.f32.partialorder %v1750, inf
          %v1754 = vsel %vm1753, %v1750, %v1752
          %vm1755 = vcmp.eq.f32.partialorder %v1750, 0.0
          %v1756 = vand.u32 %v1750, 2147483648
          %v1757 = vsel %vm1755, %v1756, %v1754
          %v1758 = vmin.f32 %v1191, %v564
          %v1759 = vmin.f32 %v1758, %v523
          %v1760 = vmax.f32 %v1759, 0.0
          %v1761 = vsub.f32 %v1760, %v1757
          %v1762 = vmax.f32 %v1748, %v1761
          %v1763 = vadd.f32 %v1193, %v585
          %v1764 = vadd.f32 %v1763, %v525
          %v1765 = vrsqrt.pop %v1764
          %v1766 = vmul.f32 %v1764, %v1765
          %vm1767 = vcmp.eq.f32.partialorder %v1764, inf
          %v1768 = vsel %vm1767, %v1764, %v1766
          %vm1769 = vcmp.eq.f32.partialorder %v1764, 0.0
          %v1770 = vand.u32 %v1764, 2147483648
          %v1771 = vsel %vm1769, %v1770, %v1768
          %v1772 = vmin.f32 %v1191, %v583
          %v1773 = vmin.f32 %v1772, %v523
          %v1774 = vmax.f32 %v1773, 0.0
          %v1775 = vsub.f32 %v1774, %v1771
          %v1776 = vmax.f32 %v1762, %v1775
          %v1777 = vadd.f32 %v1193, %v522
          %v1778 = vadd.f32 %v1777, %v604
          %v1779 = vrsqrt.pop %v1778
          %v1780 = vmul.f32 %v1778, %v1779
          %vm1781 = vcmp.eq.f32.partialorder %v1778, inf
          %v1782 = vsel %vm1781, %v1778, %v1780
          %vm1783 = vcmp.eq.f32.partialorder %v1778, 0.0
          %v1784 = vand.u32 %v1778, 2147483648
          %v1785 = vsel %vm1783, %v1784, %v1782
          %v1786 = vmin.f32 %v1191, %v520
          %v1787 = vmin.f32 %v1786, %v602
          %v1788 = vmax.f32 %v1787, 0.0
          %v1789 = vsub.f32 %v1788, %v1785
          %v1790 = vmax.f32 %v1776, %v1789
          %v1791 = vadd.f32 %v1777, %v623
          %v1792 = vrsqrt.pop %v1791
          %v1793 = vmul.f32 %v1791, %v1792
          %vm1794 = vcmp.eq.f32.partialorder %v1791, inf
          %v1795 = vsel %vm1794, %v1791, %v1793
          %vm1796 = vcmp.eq.f32.partialorder %v1791, 0.0
          %v1797 = vand.u32 %v1791, 2147483648
          %v1798 = vsel %vm1796, %v1797, %v1795
          %v1799 = vmin.f32 %v1786, %v621
          %v1800 = vmax.f32 %v1799, 0.0
          %v1801 = vsub.f32 %v1800, %v1798
          %v1802 = vmax.f32 %v1790, %v1801
          %v1803 = vadd.f32 %v1260, %v641
          %v1804 = vadd.f32 %v1803, %v644
          %v1805 = vrsqrt.pop %v1804
          %v1806 = vmul.f32 %v1804, %v1805
          %vm1807 = vcmp.eq.f32.partialorder %v1804, inf
          %v1808 = vsel %vm1807, %v1804, %v1806
          %vm1809 = vcmp.eq.f32.partialorder %v1804, 0.0
          %v1810 = vand.u32 %v1804, 2147483648
          %v1811 = vsel %vm1809, %v1810, %v1808
          %v1812 = vmax.f32 %v1258, %v639
          %v1813 = vmax.f32 %v1812, %v642
          %v1814 = vmin.f32 %v1813, 0.0
          %v1815 = vadd.f32 %v1811, %v1814
          %v1816 = vmin.f32 %v1802, %v1815
          %v1817 = vmin.f32 %v1568, %v1816
          %s1818 = scalar_lea.vmem %s265, %s276 [#allocation8]
          %1819 = vst [vmem:[%s1818] sm:$0xff] %v1817
        $region49: #{tpu_custom_call.1} parent=31 // loop_footer
          %s275 = sadd.s32 1, %s271
        $region50: #{tpu_custom_call.1} parent=31 // loop_footer_branch
          %270 = sbr.rel target = $region46
        $region51: #{tpu_custom_call.1} parent=31 // loop_exit
          _
        %s1820 = sand.u32 %s109, 1
        %s1821 = scalar_lea.sflag [#allocation4], %s1820
        %s1822 = sand.u32 %s109, 1
        %s1823 = smul.addr %s1822, 24
        %s1824 = scalar_lea.vmem [#allocation8], %s1823
        // Predicated region
        $region52: #{tpu_custom_call.1} parent=31 // pred_check
          %p1825 = pneg %p119
        $region53: #{tpu_custom_call.1} parent=31 // pred_check_branch
          %1827 = sbr.rel (%p1825) target = $region55
        $region54: #{tpu_custom_call.1} parent=31 // pred_region
          %s1828 = smul.u32 3, %s23
          %s1830 = ssub.s32 384, 384
          %1831 = vsyncadd %s1821, %s1830
          %s1832 = smul.addr %s1828, 128
          %s1833 = scalar_lea.hbm %s3, %s1832
          %s1834 = sshll.u32 %s1824, 4
          %s1835 = int_to_ptr.vmem [resolvable:$true] %s1834
          %1840 = dma.vmem_to_hbm [thread:$0]  %s1835, 384, %s1833, %s1821, 128, 128, 8
        $region55: #{tpu_custom_call.1} parent=31 // pred_fallthru
          _
      $region32: #{tpu_custom_call.1} parent=5 // pred_fallthru
        _
      %p1841 = scmp.le.s32.totalorder 2, %s18
      // Predicated region
      $region56: #{tpu_custom_call.1} parent=5 // pred_check
        %p1842 = pneg %p1841
      $region57: #{tpu_custom_call.1} parent=5 // pred_check_branch
        %1844 = sbr.rel (%p1842) target = $region59
      $region58: #{tpu_custom_call.1} parent=5 // pred_region
        %s1845 = ssub.s32 %s18, 2
        // Predicated region
        $region60: #{tpu_custom_call.1} parent=58 // pred_check
          %p1846 = pneg %p125
        $region61: #{tpu_custom_call.1} parent=58 // pred_check_branch
          %1848 = sbr.rel (%p1846) target = $region63
        $region62: #{tpu_custom_call.1} parent=58 // pred_region
          %s1849 = sand.u32 %s110, 1
          %s1850 = scalar_lea.sflag [#allocation4], %s1849
          %s1851 = sand.u32 %s110, 1
          %s1852 = smul.addr %s1851, 24
          %s1853 = scalar_lea.vmem [#allocation8], %s1852
          %1854 = dma.done %s1850, 384
        $region63: #{tpu_custom_call.1} parent=58 // pred_fallthru
          _
      $region59: #{tpu_custom_call.1} parent=5 // pred_fallthru
        _
    $region6: #{tpu_custom_call.1} parent=1 // loop_footer
      %s22 = sadd.s32 1, %s18
    $region7: #{tpu_custom_call.1} parent=1 // loop_footer_branch
      %17 = sbr.rel target = $region3
    $region8: #{tpu_custom_call.1} parent=1 // loop_exit
      _
    %1855 = vsyncpa [#allocation3], 1
    %s1856 = scalar_lea.sflag [#allocation3], 1
    %1857 = vsyncpa %s1856, 1
    %1858 = vsyncpa [#allocation6], 1
    %s1859 = scalar_lea.sflag [#allocation6], 1
    %1860 = vsyncpa %s1859, 1
    %1861 = vsyncpa [#allocation4], 1
    %s1862 = scalar_lea.sflag [#allocation4], 1
    %1863 = vsyncpa %s1862, 1

</llo_original>
